<compile_context>
chip_gen: v7x
topology: tpu7x:2x2x1
jax: 0.10.0
libtpu: 0.0.40
codegen_flags: <defaults>
</compile_context>

<pallas_src>
import jax
import jax.numpy as jnp
from jax.experimental import pallas as pl
from jax.experimental.pallas import tpu as pltpu

# ---- model hyper-parameters (small, consistent with the module's forward) ----
VOCAB = 50
OUTPUT = 4        # output_size
EMB = 32          # embedding_dim
HID = 32          # hidden_dim (== EMB so the layer-to-layer scratch can be reused)
LAYERS = 2        # n_layers
SEQ = 8           # seq_length
BATCH = 2         # real batch
BATCH_PAD = 8     # padded batch: fill all 8 sublanes / MXU rows (perf review)


def _sigmoid(x):
    # Explicit form (exp + divide) to guarantee Mosaic lowering; numerically fine here.
    return 1.0 / (1.0 + jnp.exp(-x))


def dialect_rnn_kernel(tok_ref, emb_ref, h0_ref, c0_ref, wih_ref, whh_ref, b_ref,
                       w1_ref, b1_ref, w2_ref, b2_ref,
                       out_ref, hn_ref, cn_ref, seq_scratch):
    """Full forward: embedding gather + multi-layer LSTM + FC head, all VMEM-resident.

    tok_ref      : (BATCH, SEQ) int32 in SMEM
    emb_ref      : (VOCAB, 1, EMB) f32   embedding table (leading-dim gatherable)
    h0_ref/c0_ref: (L, BP, H)            initial states (batch padded to BP)
    wih_ref      : (L, E, 4H)            input->gates weights (pre-transposed, i,f,g,o)
    whh_ref      : (L, H, 4H)            hidden->gates weights (pre-transposed)
    b_ref        : (L, 1, 4H)            combined bias b_ih + b_hh
    w1/b1, w2/b2 : (H,64)/(1,64), (64,O)/(1,O) FC head
    out_ref      : (BP, O)               logits of last timestep
    hn_ref/cn_ref: (L, BP, H)            final states
    seq_scratch  : (SEQ*BP, H)           time-major layer-to-layer activation buffer
    """
    H = HID
    BP = BATCH_PAD

    # --- fused embedding lookup; row t*BP + b of seq_scratch <- emb[tokens[b, t]] ---
    seq_scratch[...] = jnp.zeros_like(seq_scratch)           # padded batch rows stay 0
    for t in range(SEQ):
        for bb in range(BATCH):
            tok = tok_ref[bb, t]                              # scalar from SMEM
            seq_scratch[pl.ds(t * BP + bb, 1), :] = emb_ref[tok]   # (1, E) dyn row load

    h_top = None
    for l in range(LAYERS):                                   # static layer loop
        # Hoisted input->gates projection for ALL timesteps, bias folded in:
        # (SEQ*BP, H) @ (H, 4H) + (1, 4H); kept as a value and sliced per step.
        precomp = (jnp.dot(seq_scratch[...], wih_ref[l],
                           preferred_element_type=jnp.float32) + b_ref[l])
        whh = whh_ref[l]                                      # (H, 4H) loaded once/layer
        h = h0_ref[l]                                         # (BP, H) carried in vregs
        c = c0_ref[l]
        write_seq = l < LAYERS - 1                            # top layer's seq out unused

        for t in range(SEQ):                                  # fully unrolled recurrence
            g = precomp[t * BP:(t + 1) * BP, :] + jnp.dot(
                h, whh, preferred_element_type=jnp.float32)   # (BP, 4H)
            sig = _sigmoid(g)                                 # full-width nonlinearity
            th = jnp.tanh(g)                                  # full-width nonlinearity
            i_g = sig[:, 0 * H:1 * H]
            f_g = sig[:, 1 * H:2 * H]
            o_g = sig[:, 3 * H:4 * H]
            g_g = th[:, 2 * H:3 * H]
            c = f_g * c + i_g * g_g
            h = o_g * jnp.tanh(c)
            if write_seq:
                seq_scratch[t * BP:(t + 1) * BP, :] = h       # next layer's input

        hn_ref[l] = h
        cn_ref[l] = c
        h_top = h                                             # register-carried top h

    # TODO(synk): nn.LSTM inter-layer dropout and nn.Dropout are train-only; eval => identity.
    # FC head on the last timestep of the top layer (== PyTorch out[:, -1, :]).
    z = jnp.dot(h_top, w1_ref[...], preferred_element_type=jnp.float32) + b1_ref[...]
    z = jnp.maximum(z, 0.0)                                   # ReLU
    out_ref[...] = jnp.dot(z, w2_ref[...],
                           preferred_element_type=jnp.float32) + b2_ref[...]


def dialect_rnn_forward(tokens, emb_table, wih, whh, b, w1, b1, w2, b2, h0, c0):
    """Wrapper: pad batch to BATCH_PAD, reshape table for in-kernel gather, one pallas_call."""
    B = tokens.shape[0]
    assert B == BATCH, "kernel is specialized to BATCH real sequences"
    assert EMB == HID, "seq_scratch reuse across layers requires embedding_dim == hidden_dim"

    pad = BATCH_PAD - B
    h0_p = jnp.pad(h0, ((0, 0), (0, pad), (0, 0)))
    c0_p = jnp.pad(c0, ((0, 0), (0, pad), (0, 0)))
    emb3d = emb_table.reshape(VOCAB, 1, EMB)   # dynamic row gather on untiled leading dim

    smem = pl.BlockSpec(memory_space=pltpu.MemorySpace.SMEM)
    vmem = pl.BlockSpec(memory_space=pltpu.MemorySpace.VMEM)
    out, hn, cn = pl.pallas_call(
        dialect_rnn_kernel,
        out_shape=(
            jax.ShapeDtypeStruct((BATCH_PAD, OUTPUT), jnp.float32),
            jax.ShapeDtypeStruct((LAYERS, BATCH_PAD, HID), jnp.float32),
            jax.ShapeDtypeStruct((LAYERS, BATCH_PAD, HID), jnp.float32),
        ),
        in_specs=[smem] + [vmem] * 10,          # 11 specs for 11 inputs
        out_specs=(vmem, vmem, vmem),
        scratch_shapes=[pltpu.VMEM((SEQ * BATCH_PAD, HID), jnp.float32)],
    )(tokens, emb3d, h0_p, c0_p, wih, whh, b, w1, b1, w2, b2)
    return out[:B], (hn[:, :B], cn[:, :B])


def init_params(key):
    """Deterministic synthetic parameters (PyTorch-style uniform(-1/sqrt(H), 1/sqrt(H)))."""
    ks = jax.random.split(key, 9)
    s = 1.0 / jnp.sqrt(jnp.float32(HID))
    emb_table = 0.1 * jax.random.normal(ks[0], (VOCAB, EMB), jnp.float32)
    # LSTM weights, already transposed for right-multiplication, gate order i,f,g,o.
    wih = jax.random.uniform(ks[1], (LAYERS, EMB, 4 * HID), jnp.float32, -s, s)
    whh = jax.random.uniform(ks[2], (LAYERS, HID, 4 * HID), jnp.float32, -s, s)
    b_ih = jax.random.uniform(ks[3], (LAYERS, 1, 4 * HID), jnp.float32, -s, s)
    b_hh = jax.random.uniform(ks[4], (LAYERS, 1, 4 * HID), jnp.float32, -s, s)
    b = b_ih + b_hh
    # fc1: Linear(hidden_dim, 64, bias=True);  fc2: Linear(64, output_size, bias=True)
    s1 = 1.0 / jnp.sqrt(jnp.float32(HID))
    s2 = 1.0 / jnp.sqrt(jnp.float32(64))
    w1 = jax.random.uniform(ks[5], (HID, 64), jnp.float32, -s1, s1)
    b1 = jax.random.uniform(ks[6], (1, 64), jnp.float32, -s1, s1)
    w2 = jax.random.uniform(ks[7], (64, OUTPUT), jnp.float32, -s2, s2)
    b2 = jax.random.uniform(ks[8], (1, OUTPUT), jnp.float32, -s2, s2)
    return emb_table, wih, whh, b, w1, b1, w2, b2


if __name__ == "__main__":
    key = jax.random.PRNGKey(0)
    k_tok, k_par = jax.random.split(key)
    emb_table, wih, whh, b, w1, b1, w2, b2 = init_params(k_par)

    tokens = jax.random.randint(k_tok, (BATCH, SEQ), 0, VOCAB, dtype=jnp.int32)
    # init_hidden: zeros of shape (n_layers, batch, hidden_dim)
    h0 = jnp.zeros((LAYERS, BATCH, HID), jnp.float32)
    c0 = jnp.zeros((LAYERS, BATCH, HID), jnp.float32)

    fwd = jax.jit(dialect_rnn_forward)
    out, (hn, cn) = fwd(tokens, emb_table, wih, whh, b, w1, b1, w2, b2, h0, c0)
    jax.block_until_ready((out, hn, cn))

    assert out.shape == (BATCH, OUTPUT)
    assert hn.shape == (LAYERS, BATCH, HID) and cn.shape == (LAYERS, BATCH, HID)
    print("KERNEL_OK")
</pallas_src>

<mosaic_0001>
module attributes {stable_mosaic.version = 11 : i64} {
  func.func @dialect_rnn_kernel(%arg0: memref<2x8xi32, #tpu.memory_space<smem>>, %arg1: memref<50x1x32xf32, #tpu.memory_space<vmem>>, %arg2: memref<2x8x32xf32, #tpu.memory_space<vmem>>, %arg3: memref<2x8x32xf32, #tpu.memory_space<vmem>>, %arg4: memref<2x32x128xf32, #tpu.memory_space<vmem>>, %arg5: memref<2x32x128xf32, #tpu.memory_space<vmem>>, %arg6: memref<2x1x128xf32, #tpu.memory_space<vmem>>, %arg7: memref<32x64xf32, #tpu.memory_space<vmem>>, %arg8: memref<1x64xf32, #tpu.memory_space<vmem>>, %arg9: memref<64x4xf32, #tpu.memory_space<vmem>>, %arg10: memref<1x4xf32, #tpu.memory_space<vmem>>, %arg11: memref<8x4xf32, #tpu.memory_space<vmem>>, %arg12: memref<2x8x32xf32, #tpu.memory_space<vmem>>, %arg13: memref<2x8x32xf32, #tpu.memory_space<vmem>>, %arg14: memref<64x32xf32, #tpu.memory_space<vmem>>) attributes {dimension_semantics = [], scalar_prefetch = 0 : i64, scratch_operands = 1 : i64, tpu.core_type = #tpu.core_type<tc>} {
    %cst = arith.constant 0.000000e+00 : f32
    %0 = vector.broadcast %cst : f32 to vector<64x32xf32>
    %c0 = arith.constant 0 : index
    %c0_0 = arith.constant 0 : index
    %1 = vector.load %arg14[%c0, %c0_0] : memref<64x32xf32, #tpu.memory_space<vmem>>, vector<64x32xf32>
    tpu.vector_store %arg14[%c0, %c0_0], %0 {strides = array<i32>} : memref<64x32xf32, #tpu.memory_space<vmem>>, vector<64x32xf32>,
    %c0_1 = arith.constant 0 : index
    %c0_2 = arith.constant 0 : index
    %2 = memref.load %arg0[%c0_1, %c0_2] : memref<2x8xi32, #tpu.memory_space<smem>>
    %3 = arith.index_cast %2 : i32 to index
    %c0_3 = arith.constant 0 : index
    %c0_4 = arith.constant 0 : index
    %4 = vector.load %arg1[%3, %c0_3, %c0_4] : memref<50x1x32xf32, #tpu.memory_space<vmem>>, vector<1x1x32xf32>
    %5 = vector.shape_cast %4 : vector<1x1x32xf32> to vector<1x32xf32>
    %c0_5 = arith.constant 0 : index
    %c0_6 = arith.constant 0 : index
    %6 = vector.load %arg14[%c0_5, %c0_6] : memref<64x32xf32, #tpu.memory_space<vmem>>, vector<1x32xf32>
    tpu.vector_store %arg14[%c0_5, %c0_6], %5 {strides = array<i32>} : memref<64x32xf32, #tpu.memory_space<vmem>>, vector<1x32xf32>,
    %c1 = arith.constant 1 : index
    %c0_7 = arith.constant 0 : index
    %7 = memref.load %arg0[%c1, %c0_7] : memref<2x8xi32, #tpu.memory_space<smem>>
    %8 = arith.index_cast %7 : i32 to index
    %c0_8 = arith.constant 0 : index
    %c0_9 = arith.constant 0 : index
    %9 = vector.load %arg1[%8, %c0_8, %c0_9] : memref<50x1x32xf32, #tpu.memory_space<vmem>>, vector<1x1x32xf32>
    %10 = vector.shape_cast %9 : vector<1x1x32xf32> to vector<1x32xf32>
    %c1_10 = arith.constant 1 : index
    %c0_11 = arith.constant 0 : index
    %11 = vector.load %arg14[%c1_10, %c0_11] : memref<64x32xf32, #tpu.memory_space<vmem>>, vector<1x32xf32>
    tpu.vector_store %arg14[%c1_10, %c0_11], %10 {strides = array<i32>} : memref<64x32xf32, #tpu.memory_space<vmem>>, vector<1x32xf32>,
    %c0_12 = arith.constant 0 : index
    %c1_13 = arith.constant 1 : index
    %12 = memref.load %arg0[%c0_12, %c1_13] : memref<2x8xi32, #tpu.memory_space<smem>>
    %13 = arith.index_cast %12 : i32 to index
    %c0_14 = arith.constant 0 : index
    %c0_15 = arith.constant 0 : index
    %14 = vector.load %arg1[%13, %c0_14, %c0_15] : memref<50x1x32xf32, #tpu.memory_space<vmem>>, vector<1x1x32xf32>
    %15 = vector.shape_cast %14 : vector<1x1x32xf32> to vector<1x32xf32>
    %c8 = arith.constant 8 : index
    %c0_16 = arith.constant 0 : index
    %16 = vector.load %arg14[%c8, %c0_16] : memref<64x32xf32, #tpu.memory_space<vmem>>, vector<1x32xf32>
    tpu.vector_store %arg14[%c8, %c0_16], %15 {strides = array<i32>} : memref<64x32xf32, #tpu.memory_space<vmem>>, vector<1x32xf32>,
    %c1_17 = arith.constant 1 : index
    %c1_18 = arith.constant 1 : index
    %17 = memref.load %arg0[%c1_17, %c1_18] : memref<2x8xi32, #tpu.memory_space<smem>>
    %18 = arith.index_cast %17 : i32 to index
    %c0_19 = arith.constant 0 : index
    %c0_20 = arith.constant 0 : index
    %19 = vector.load %arg1[%18, %c0_19, %c0_20] : memref<50x1x32xf32, #tpu.memory_space<vmem>>, vector<1x1x32xf32>
    %20 = vector.shape_cast %19 : vector<1x1x32xf32> to vector<1x32xf32>
    %c9 = arith.constant 9 : index
    %c0_21 = arith.constant 0 : index
    %21 = vector.load %arg14[%c9, %c0_21] : memref<64x32xf32, #tpu.memory_space<vmem>>, vector<1x32xf32>
    tpu.vector_store %arg14[%c9, %c0_21], %20 {strides = array<i32>} : memref<64x32xf32, #tpu.memory_space<vmem>>, vector<1x32xf32>,
    %c0_22 = arith.constant 0 : index
    %c2 = arith.constant 2 : index
    %22 = memref.load %arg0[%c0_22, %c2] : memref<2x8xi32, #tpu.memory_space<smem>>
    %23 = arith.index_cast %22 : i32 to index
    %c0_23 = arith.constant 0 : index
    %c0_24 = arith.constant 0 : index
    %24 = vector.load %arg1[%23, %c0_23, %c0_24] : memref<50x1x32xf32, #tpu.memory_space<vmem>>, vector<1x1x32xf32>
    %25 = vector.shape_cast %24 : vector<1x1x32xf32> to vector<1x32xf32>
    %c16 = arith.constant 16 : index
    %c0_25 = arith.constant 0 : index
    %26 = vector.load %arg14[%c16, %c0_25] : memref<64x32xf32, #tpu.memory_space<vmem>>, vector<1x32xf32>
    tpu.vector_store %arg14[%c16, %c0_25], %25 {strides = array<i32>} : memref<64x32xf32, #tpu.memory_space<vmem>>, vector<1x32xf32>,
    %c1_26 = arith.constant 1 : index
    %c2_27 = arith.constant 2 : index
    %27 = memref.load %arg0[%c1_26, %c2_27] : memref<2x8xi32, #tpu.memory_space<smem>>
    %28 = arith.index_cast %27 : i32 to index
    %c0_28 = arith.constant 0 : index
    %c0_29 = arith.constant 0 : index
    %29 = vector.load %arg1[%28, %c0_28, %c0_29] : memref<50x1x32xf32, #tpu.memory_space<vmem>>, vector<1x1x32xf32>
    %30 = vector.shape_cast %29 : vector<1x1x32xf32> to vector<1x32xf32>
    %c17 = arith.constant 17 : index
    %c0_30 = arith.constant 0 : index
    %31 = vector.load %arg14[%c17, %c0_30] : memref<64x32xf32, #tpu.memory_space<vmem>>, vector<1x32xf32>
    tpu.vector_store %arg14[%c17, %c0_30], %30 {strides = array<i32>} : memref<64x32xf32, #tpu.memory_space<vmem>>, vector<1x32xf32>,
    %c0_31 = arith.constant 0 : index
    %c3 = arith.constant 3 : index
    %32 = memref.load %arg0[%c0_31, %c3] : memref<2x8xi32, #tpu.memory_space<smem>>
    %33 = arith.index_cast %32 : i32 to index
    %c0_32 = arith.constant 0 : index
    %c0_33 = arith.constant 0 : index
    %34 = vector.load %arg1[%33, %c0_32, %c0_33] : memref<50x1x32xf32, #tpu.memory_space<vmem>>, vector<1x1x32xf32>
    %35 = vector.shape_cast %34 : vector<1x1x32xf32> to vector<1x32xf32>
    %c24 = arith.constant 24 : index
    %c0_34 = arith.constant 0 : index
    %36 = vector.load %arg14[%c24, %c0_34] : memref<64x32xf32, #tpu.memory_space<vmem>>, vector<1x32xf32>
    tpu.vector_store %arg14[%c24, %c0_34], %35 {strides = array<i32>} : memref<64x32xf32, #tpu.memory_space<vmem>>, vector<1x32xf32>,
    %c1_35 = arith.constant 1 : index
    %c3_36 = arith.constant 3 : index
    %37 = memref.load %arg0[%c1_35, %c3_36] : memref<2x8xi32, #tpu.memory_space<smem>>
    %38 = arith.index_cast %37 : i32 to index
    %c0_37 = arith.constant 0 : index
    %c0_38 = arith.constant 0 : index
    %39 = vector.load %arg1[%38, %c0_37, %c0_38] : memref<50x1x32xf32, #tpu.memory_space<vmem>>, vector<1x1x32xf32>
    %40 = vector.shape_cast %39 : vector<1x1x32xf32> to vector<1x32xf32>
    %c25 = arith.constant 25 : index
    %c0_39 = arith.constant 0 : index
    %41 = vector.load %arg14[%c25, %c0_39] : memref<64x32xf32, #tpu.memory_space<vmem>>, vector<1x32xf32>
    tpu.vector_store %arg14[%c25, %c0_39], %40 {strides = array<i32>} : memref<64x32xf32, #tpu.memory_space<vmem>>, vector<1x32xf32>,
    %c0_40 = arith.constant 0 : index
    %c4 = arith.constant 4 : index
    %42 = memref.load %arg0[%c0_40, %c4] : memref<2x8xi32, #tpu.memory_space<smem>>
    %43 = arith.index_cast %42 : i32 to index
    %c0_41 = arith.constant 0 : index
    %c0_42 = arith.constant 0 : index
    %44 = vector.load %arg1[%43, %c0_41, %c0_42] : memref<50x1x32xf32, #tpu.memory_space<vmem>>, vector<1x1x32xf32>
    %45 = vector.shape_cast %44 : vector<1x1x32xf32> to vector<1x32xf32>
    %c32 = arith.constant 32 : index
    %c0_43 = arith.constant 0 : index
    %46 = vector.load %arg14[%c32, %c0_43] : memref<64x32xf32, #tpu.memory_space<vmem>>, vector<1x32xf32>
    tpu.vector_store %arg14[%c32, %c0_43], %45 {strides = array<i32>} : memref<64x32xf32, #tpu.memory_space<vmem>>, vector<1x32xf32>,
    %c1_44 = arith.constant 1 : index
    %c4_45 = arith.constant 4 : index
    %47 = memref.load %arg0[%c1_44, %c4_45] : memref<2x8xi32, #tpu.memory_space<smem>>
    %48 = arith.index_cast %47 : i32 to index
    %c0_46 = arith.constant 0 : index
    %c0_47 = arith.constant 0 : index
    %49 = vector.load %arg1[%48, %c0_46, %c0_47] : memref<50x1x32xf32, #tpu.memory_space<vmem>>, vector<1x1x32xf32>
    %50 = vector.shape_cast %49 : vector<1x1x32xf32> to vector<1x32xf32>
    %c33 = arith.constant 33 : index
    %c0_48 = arith.constant 0 : index
    %51 = vector.load %arg14[%c33, %c0_48] : memref<64x32xf32, #tpu.memory_space<vmem>>, vector<1x32xf32>
    tpu.vector_store %arg14[%c33, %c0_48], %50 {strides = array<i32>} : memref<64x32xf32, #tpu.memory_space<vmem>>, vector<1x32xf32>,
    %c0_49 = arith.constant 0 : index
    %c5 = arith.constant 5 : index
    %52 = memref.load %arg0[%c0_49, %c5] : memref<2x8xi32, #tpu.memory_space<smem>>
    %53 = arith.index_cast %52 : i32 to index
    %c0_50 = arith.constant 0 : index
    %c0_51 = arith.constant 0 : index
    %54 = vector.load %arg1[%53, %c0_50, %c0_51] : memref<50x1x32xf32, #tpu.memory_space<vmem>>, vector<1x1x32xf32>
    %55 = vector.shape_cast %54 : vector<1x1x32xf32> to vector<1x32xf32>
    %c40 = arith.constant 40 : index
    %c0_52 = arith.constant 0 : index
    %56 = vector.load %arg14[%c40, %c0_52] : memref<64x32xf32, #tpu.memory_space<vmem>>, vector<1x32xf32>
    tpu.vector_store %arg14[%c40, %c0_52], %55 {strides = array<i32>} : memref<64x32xf32, #tpu.memory_space<vmem>>, vector<1x32xf32>,
    %c1_53 = arith.constant 1 : index
    %c5_54 = arith.constant 5 : index
    %57 = memref.load %arg0[%c1_53, %c5_54] : memref<2x8xi32, #tpu.memory_space<smem>>
    %58 = arith.index_cast %57 : i32 to index
    %c0_55 = arith.constant 0 : index
    %c0_56 = arith.constant 0 : index
    %59 = vector.load %arg1[%58, %c0_55, %c0_56] : memref<50x1x32xf32, #tpu.memory_space<vmem>>, vector<1x1x32xf32>
    %60 = vector.shape_cast %59 : vector<1x1x32xf32> to vector<1x32xf32>
    %c41 = arith.constant 41 : index
    %c0_57 = arith.constant 0 : index
    %61 = vector.load %arg14[%c41, %c0_57] : memref<64x32xf32, #tpu.memory_space<vmem>>, vector<1x32xf32>
    tpu.vector_store %arg14[%c41, %c0_57], %60 {strides = array<i32>} : memref<64x32xf32, #tpu.memory_space<vmem>>, vector<1x32xf32>,
    %c0_58 = arith.constant 0 : index
    %c6 = arith.constant 6 : index
    %62 = memref.load %arg0[%c0_58, %c6] : memref<2x8xi32, #tpu.memory_space<smem>>
    %63 = arith.index_cast %62 : i32 to index
    %c0_59 = arith.constant 0 : index
    %c0_60 = arith.constant 0 : index
    %64 = vector.load %arg1[%63, %c0_59, %c0_60] : memref<50x1x32xf32, #tpu.memory_space<vmem>>, vector<1x1x32xf32>
    %65 = vector.shape_cast %64 : vector<1x1x32xf32> to vector<1x32xf32>
    %c48 = arith.constant 48 : index
    %c0_61 = arith.constant 0 : index
    %66 = vector.load %arg14[%c48, %c0_61] : memref<64x32xf32, #tpu.memory_space<vmem>>, vector<1x32xf32>
    tpu.vector_store %arg14[%c48, %c0_61], %65 {strides = array<i32>} : memref<64x32xf32, #tpu.memory_space<vmem>>, vector<1x32xf32>,
    %c1_62 = arith.constant 1 : index
    %c6_63 = arith.constant 6 : index
    %67 = memref.load %arg0[%c1_62, %c6_63] : memref<2x8xi32, #tpu.memory_space<smem>>
    %68 = arith.index_cast %67 : i32 to index
    %c0_64 = arith.constant 0 : index
    %c0_65 = arith.constant 0 : index
    %69 = vector.load %arg1[%68, %c0_64, %c0_65] : memref<50x1x32xf32, #tpu.memory_space<vmem>>, vector<1x1x32xf32>
    %70 = vector.shape_cast %69 : vector<1x1x32xf32> to vector<1x32xf32>
    %c49 = arith.constant 49 : index
    %c0_66 = arith.constant 0 : index
    %71 = vector.load %arg14[%c49, %c0_66] : memref<64x32xf32, #tpu.memory_space<vmem>>, vector<1x32xf32>
    tpu.vector_store %arg14[%c49, %c0_66], %70 {strides = array<i32>} : memref<64x32xf32, #tpu.memory_space<vmem>>, vector<1x32xf32>,
    %c0_67 = arith.constant 0 : index
    %c7 = arith.constant 7 : index
    %72 = memref.load %arg0[%c0_67, %c7] : memref<2x8xi32, #tpu.memory_space<smem>>
    %73 = arith.index_cast %72 : i32 to index
    %c0_68 = arith.constant 0 : index
    %c0_69 = arith.constant 0 : index
    %74 = vector.load %arg1[%73, %c0_68, %c0_69] : memref<50x1x32xf32, #tpu.memory_space<vmem>>, vector<1x1x32xf32>
    %75 = vector.shape_cast %74 : vector<1x1x32xf32> to vector<1x32xf32>
    %c56 = arith.constant 56 : index
    %c0_70 = arith.constant 0 : index
    %76 = vector.load %arg14[%c56, %c0_70] : memref<64x32xf32, #tpu.memory_space<vmem>>, vector<1x32xf32>
    tpu.vector_store %arg14[%c56, %c0_70], %75 {strides = array<i32>} : memref<64x32xf32, #tpu.memory_space<vmem>>, vector<1x32xf32>,
    %c1_71 = arith.constant 1 : index
    %c7_72 = arith.constant 7 : index
    %77 = memref.load %arg0[%c1_71, %c7_72] : memref<2x8xi32, #tpu.memory_space<smem>>
    %78 = arith.index_cast %77 : i32 to index
    %c0_73 = arith.constant 0 : index
    %c0_74 = arith.constant 0 : index
    %79 = vector.load %arg1[%78, %c0_73, %c0_74] : memref<50x1x32xf32, #tpu.memory_space<vmem>>, vector<1x1x32xf32>
    %80 = vector.shape_cast %79 : vector<1x1x32xf32> to vector<1x32xf32>
    %c57 = arith.constant 57 : index
    %c0_75 = arith.constant 0 : index
    %81 = vector.load %arg14[%c57, %c0_75] : memref<64x32xf32, #tpu.memory_space<vmem>>, vector<1x32xf32>
    tpu.vector_store %arg14[%c57, %c0_75], %80 {strides = array<i32>} : memref<64x32xf32, #tpu.memory_space<vmem>>, vector<1x32xf32>,
    %c0_76 = arith.constant 0 : index
    %c0_77 = arith.constant 0 : index
    %82 = vector.load %arg14[%c0_76, %c0_77] : memref<64x32xf32, #tpu.memory_space<vmem>>, vector<64x32xf32>
    %c0_78 = arith.constant 0 : index
    %c0_79 = arith.constant 0 : index
    %c0_80 = arith.constant 0 : index
    %83 = vector.load %arg4[%c0_78, %c0_79, %c0_80] : memref<2x32x128xf32, #tpu.memory_space<vmem>>, vector<1x32x128xf32>
    %84 = vector.shape_cast %83 : vector<1x32x128xf32> to vector<32x128xf32>
    %cst_81 = arith.constant dense<0.000000e+00> : vector<64x128xf32>
    %85 = tpu.matmul %82, %84, %cst_81 {dimension_numbers = #tpu.dot_dimension_numbers<[1], [0], [0], [1], [0, 0, 1, 1], [], []>} : vector<64x32xf32>, vector<32x128xf32>, vector<64x128xf32> -> vector<64x128xf32>
    %c0_82 = arith.constant 0 : index
    %c0_83 = arith.constant 0 : index
    %c0_84 = arith.constant 0 : index
    %86 = vector.load %arg6[%c0_82, %c0_83, %c0_84] : memref<2x1x128xf32, #tpu.memory_space<vmem>>, vector<1x1x128xf32>
    %87 = vector.shape_cast %86 : vector<1x1x128xf32> to vector<1x128xf32>
    %88 = vector.broadcast %87 : vector<1x128xf32> to vector<64x128xf32>
    %89 = arith.addf %85, %88 : vector<64x128xf32>
    %c0_85 = arith.constant 0 : index
    %c0_86 = arith.constant 0 : index
    %c0_87 = arith.constant 0 : index
    %90 = vector.load %arg5[%c0_85, %c0_86, %c0_87] : memref<2x32x128xf32, #tpu.memory_space<vmem>>, vector<1x32x128xf32>
    %91 = vector.shape_cast %90 : vector<1x32x128xf32> to vector<32x128xf32>
    %c0_88 = arith.constant 0 : index
    %c0_89 = arith.constant 0 : index
    %c0_90 = arith.constant 0 : index
    %92 = vector.load %arg2[%c0_88, %c0_89, %c0_90] : memref<2x8x32xf32, #tpu.memory_space<vmem>>, vector<1x8x32xf32>
    %93 = vector.shape_cast %92 : vector<1x8x32xf32> to vector<8x32xf32>
    %c0_91 = arith.constant 0 : index
    %c0_92 = arith.constant 0 : index
    %c0_93 = arith.constant 0 : index
    %94 = vector.load %arg3[%c0_91, %c0_92, %c0_93] : memref<2x8x32xf32, #tpu.memory_space<vmem>>, vector<1x8x32xf32>
    %95 = vector.shape_cast %94 : vector<1x8x32xf32> to vector<8x32xf32>
    %96 = vector.extract_strided_slice %89 {offsets = [0, 0], sizes = [8, 128], strides = [1, 1]} : vector<64x128xf32> to vector<8x128xf32>
    %cst_94 = arith.constant dense<0.000000e+00> : vector<8x128xf32>
    %97 = tpu.matmul %93, %91, %cst_94 {dimension_numbers = #tpu.dot_dimension_numbers<[1], [0], [0], [1], [0, 0, 1, 1], [], []>} : vector<8x32xf32>, vector<32x128xf32>, vector<8x128xf32> -> vector<8x128xf32>
    %98 = arith.addf %96, %97 : vector<8x128xf32>
    %cst_95 = arith.constant 0.000000e+00 : f32
    %99 = vector.broadcast %cst_95 : f32 to vector<8x128xf32>
    %100 = arith.subf %99, %98 : vector<8x128xf32>
    %101 = math.exp %100 : vector<8x128xf32>
    %cst_96 = arith.constant 1.000000e+00 : f32
    %102 = vector.broadcast %cst_96 : f32 to vector<8x128xf32>
    %103 = arith.addf %102, %101 : vector<8x128xf32>
    %cst_97 = arith.constant 1.000000e+00 : f32
    %104 = vector.broadcast %cst_97 : f32 to vector<8x128xf32>
    %105 = arith.divf %104, %103 : vector<8x128xf32>
    %106 = math.tanh %98 : vector<8x128xf32>
    %107 = vector.extract_strided_slice %105 {offsets = [0, 0], sizes = [8, 32], strides = [1, 1]} : vector<8x128xf32> to vector<8x32xf32>
    %108 = vector.extract_strided_slice %105 {offsets = [0, 32], sizes = [8, 32], strides = [1, 1]} : vector<8x128xf32> to vector<8x32xf32>
    %109 = vector.extract_strided_slice %105 {offsets = [0, 96], sizes = [8, 32], strides = [1, 1]} : vector<8x128xf32> to vector<8x32xf32>
    %110 = vector.extract_strided_slice %106 {offsets = [0, 64], sizes = [8, 32], strides = [1, 1]} : vector<8x128xf32> to vector<8x32xf32>
    %111 = arith.mulf %108, %95 : vector<8x32xf32>
    %112 = arith.mulf %107, %110 : vector<8x32xf32>
    %113 = arith.addf %111, %112 : vector<8x32xf32>
    %114 = math.tanh %113 : vector<8x32xf32>
    %115 = arith.mulf %109, %114 : vector<8x32xf32>
    %c0_98 = arith.constant 0 : index
    %c0_99 = arith.constant 0 : index
    %116 = vector.load %arg14[%c0_98, %c0_99] : memref<64x32xf32, #tpu.memory_space<vmem>>, vector<8x32xf32>
    tpu.vector_store %arg14[%c0_98, %c0_99], %115 {strides = array<i32>} : memref<64x32xf32, #tpu.memory_space<vmem>>, vector<8x32xf32>,
    %117 = vector.extract_strided_slice %89 {offsets = [8, 0], sizes = [8, 128], strides = [1, 1]} : vector<64x128xf32> to vector<8x128xf32>
    %cst_100 = arith.constant dense<0.000000e+00> : vector<8x128xf32>
    %118 = tpu.matmul %115, %91, %cst_100 {dimension_numbers = #tpu.dot_dimension_numbers<[1], [0], [0], [1], [0, 0, 1, 1], [], []>} : vector<8x32xf32>, vector<32x128xf32>, vector<8x128xf32> -> vector<8x128xf32>
    %119 = arith.addf %117, %118 : vector<8x128xf32>
    %cst_101 = arith.constant 0.000000e+00 : f32
    %120 = vector.broadcast %cst_101 : f32 to vector<8x128xf32>
    %121 = arith.subf %120, %119 : vector<8x128xf32>
    %122 = math.exp %121 : vector<8x128xf32>
    %cst_102 = arith.constant 1.000000e+00 : f32
    %123 = vector.broadcast %cst_102 : f32 to vector<8x128xf32>
    %124 = arith.addf %123, %122 : vector<8x128xf32>
    %cst_103 = arith.constant 1.000000e+00 : f32
    %125 = vector.broadcast %cst_103 : f32 to vector<8x128xf32>
    %126 = arith.divf %125, %124 : vector<8x128xf32>
    %127 = math.tanh %119 : vector<8x128xf32>
    %128 = vector.extract_strided_slice %126 {offsets = [0, 0], sizes = [8, 32], strides = [1, 1]} : vector<8x128xf32> to vector<8x32xf32>
    %129 = vector.extract_strided_slice %126 {offsets = [0, 32], sizes = [8, 32], strides = [1, 1]} : vector<8x128xf32> to vector<8x32xf32>
    %130 = vector.extract_strided_slice %126 {offsets = [0, 96], sizes = [8, 32], strides = [1, 1]} : vector<8x128xf32> to vector<8x32xf32>
    %131 = vector.extract_strided_slice %127 {offsets = [0, 64], sizes = [8, 32], strides = [1, 1]} : vector<8x128xf32> to vector<8x32xf32>
    %132 = arith.mulf %129, %113 : vector<8x32xf32>
    %133 = arith.mulf %128, %131 : vector<8x32xf32>
    %134 = arith.addf %132, %133 : vector<8x32xf32>
    %135 = math.tanh %134 : vector<8x32xf32>
    %136 = arith.mulf %130, %135 : vector<8x32xf32>
    %c8_104 = arith.constant 8 : index
    %c0_105 = arith.constant 0 : index
    %137 = vector.load %arg14[%c8_104, %c0_105] : memref<64x32xf32, #tpu.memory_space<vmem>>, vector<8x32xf32>
    tpu.vector_store %arg14[%c8_104, %c0_105], %136 {strides = array<i32>} : memref<64x32xf32, #tpu.memory_space<vmem>>, vector<8x32xf32>,
    %138 = vector.extract_strided_slice %89 {offsets = [16, 0], sizes = [8, 128], strides = [1, 1]} : vector<64x128xf32> to vector<8x128xf32>
    %cst_106 = arith.constant dense<0.000000e+00> : vector<8x128xf32>
    %139 = tpu.matmul %136, %91, %cst_106 {dimension_numbers = #tpu.dot_dimension_numbers<[1], [0], [0], [1], [0, 0, 1, 1], [], []>} : vector<8x32xf32>, vector<32x128xf32>, vector<8x128xf32> -> vector<8x128xf32>
    %140 = arith.addf %138, %139 : vector<8x128xf32>
    %cst_107 = arith.constant 0.000000e+00 : f32
    %141 = vector.broadcast %cst_107 : f32 to vector<8x128xf32>
    %142 = arith.subf %141, %140 : vector<8x128xf32>
    %143 = math.exp %142 : vector<8x128xf32>
    %cst_108 = arith.constant 1.000000e+00 : f32
    %144 = vector.broadcast %cst_108 : f32 to vector<8x128xf32>
    %145 = arith.addf %144, %143 : vector<8x128xf32>
    %cst_109 = arith.constant 1.000000e+00 : f32
    %146 = vector.broadcast %cst_109 : f32 to vector<8x128xf32>
    %147 = arith.divf %146, %145 : vector<8x128xf32>
    %148 = math.tanh %140 : vector<8x128xf32>
    %149 = vector.extract_strided_slice %147 {offsets = [0, 0], sizes = [8, 32], strides = [1, 1]} : vector<8x128xf32> to vector<8x32xf32>
    %150 = vector.extract_strided_slice %147 {offsets = [0, 32], sizes = [8, 32], strides = [1, 1]} : vector<8x128xf32> to vector<8x32xf32>
    %151 = vector.extract_strided_slice %147 {offsets = [0, 96], sizes = [8, 32], strides = [1, 1]} : vector<8x128xf32> to vector<8x32xf32>
    %152 = vector.extract_strided_slice %148 {offsets = [0, 64], sizes = [8, 32], strides = [1, 1]} : vector<8x128xf32> to vector<8x32xf32>
    %153 = arith.mulf %150, %134 : vector<8x32xf32>
    %154 = arith.mulf %149, %152 : vector<8x32xf32>
    %155 = arith.addf %153, %154 : vector<8x32xf32>
    %156 = math.tanh %155 : vector<8x32xf32>
    %157 = arith.mulf %151, %156 : vector<8x32xf32>
    %c16_110 = arith.constant 16 : index
    %c0_111 = arith.constant 0 : index
    %158 = vector.load %arg14[%c16_110, %c0_111] : memref<64x32xf32, #tpu.memory_space<vmem>>, vector<8x32xf32>
    tpu.vector_store %arg14[%c16_110, %c0_111], %157 {strides = array<i32>} : memref<64x32xf32, #tpu.memory_space<vmem>>, vector<8x32xf32>,
    %159 = vector.extract_strided_slice %89 {offsets = [24, 0], sizes = [8, 128], strides = [1, 1]} : vector<64x128xf32> to vector<8x128xf32>
    %cst_112 = arith.constant dense<0.000000e+00> : vector<8x128xf32>
    %160 = tpu.matmul %157, %91, %cst_112 {dimension_numbers = #tpu.dot_dimension_numbers<[1], [0], [0], [1], [0, 0, 1, 1], [], []>} : vector<8x32xf32>, vector<32x128xf32>, vector<8x128xf32> -> vector<8x128xf32>
    %161 = arith.addf %159, %160 : vector<8x128xf32>
    %cst_113 = arith.constant 0.000000e+00 : f32
    %162 = vector.broadcast %cst_113 : f32 to vector<8x128xf32>
    %163 = arith.subf %162, %161 : vector<8x128xf32>
    %164 = math.exp %163 : vector<8x128xf32>
    %cst_114 = arith.constant 1.000000e+00 : f32
    %165 = vector.broadcast %cst_114 : f32 to vector<8x128xf32>
    %166 = arith.addf %165, %164 : vector<8x128xf32>
    %cst_115 = arith.constant 1.000000e+00 : f32
    %167 = vector.broadcast %cst_115 : f32 to vector<8x128xf32>
    %168 = arith.divf %167, %166 : vector<8x128xf32>
    %169 = math.tanh %161 : vector<8x128xf32>
    %170 = vector.extract_strided_slice %168 {offsets = [0, 0], sizes = [8, 32], strides = [1, 1]} : vector<8x128xf32> to vector<8x32xf32>
    %171 = vector.extract_strided_slice %168 {offsets = [0, 32], sizes = [8, 32], strides = [1, 1]} : vector<8x128xf32> to vector<8x32xf32>
    %172 = vector.extract_strided_slice %168 {offsets = [0, 96], sizes = [8, 32], strides = [1, 1]} : vector<8x128xf32> to vector<8x32xf32>
    %173 = vector.extract_strided_slice %169 {offsets = [0, 64], sizes = [8, 32], strides = [1, 1]} : vector<8x128xf32> to vector<8x32xf32>
    %174 = arith.mulf %171, %155 : vector<8x32xf32>
    %175 = arith.mulf %170, %173 : vector<8x32xf32>
    %176 = arith.addf %174, %175 : vector<8x32xf32>
    %177 = math.tanh %176 : vector<8x32xf32>
    %178 = arith.mulf %172, %177 : vector<8x32xf32>
    %c24_116 = arith.constant 24 : index
    %c0_117 = arith.constant 0 : index
    %179 = vector.load %arg14[%c24_116, %c0_117] : memref<64x32xf32, #tpu.memory_space<vmem>>, vector<8x32xf32>
    tpu.vector_store %arg14[%c24_116, %c0_117], %178 {strides = array<i32>} : memref<64x32xf32, #tpu.memory_space<vmem>>, vector<8x32xf32>,
    %180 = vector.extract_strided_slice %89 {offsets = [32, 0], sizes = [8, 128], strides = [1, 1]} : vector<64x128xf32> to vector<8x128xf32>
    %cst_118 = arith.constant dense<0.000000e+00> : vector<8x128xf32>
    %181 = tpu.matmul %178, %91, %cst_118 {dimension_numbers = #tpu.dot_dimension_numbers<[1], [0], [0], [1], [0, 0, 1, 1], [], []>} : vector<8x32xf32>, vector<32x128xf32>, vector<8x128xf32> -> vector<8x128xf32>
    %182 = arith.addf %180, %181 : vector<8x128xf32>
    %cst_119 = arith.constant 0.000000e+00 : f32
    %183 = vector.broadcast %cst_119 : f32 to vector<8x128xf32>
    %184 = arith.subf %183, %182 : vector<8x128xf32>
    %185 = math.exp %184 : vector<8x128xf32>
    %cst_120 = arith.constant 1.000000e+00 : f32
    %186 = vector.broadcast %cst_120 : f32 to vector<8x128xf32>
    %187 = arith.addf %186, %185 : vector<8x128xf32>
    %cst_121 = arith.constant 1.000000e+00 : f32
    %188 = vector.broadcast %cst_121 : f32 to vector<8x128xf32>
    %189 = arith.divf %188, %187 : vector<8x128xf32>
    %190 = math.tanh %182 : vector<8x128xf32>
    %191 = vector.extract_strided_slice %189 {offsets = [0, 0], sizes = [8, 32], strides = [1, 1]} : vector<8x128xf32> to vector<8x32xf32>
    %192 = vector.extract_strided_slice %189 {offsets = [0, 32], sizes = [8, 32], strides = [1, 1]} : vector<8x128xf32> to vector<8x32xf32>
    %193 = vector.extract_strided_slice %189 {offsets = [0, 96], sizes = [8, 32], strides = [1, 1]} : vector<8x128xf32> to vector<8x32xf32>
    %194 = vector.extract_strided_slice %190 {offsets = [0, 64], sizes = [8, 32], strides = [1, 1]} : vector<8x128xf32> to vector<8x32xf32>
    %195 = arith.mulf %192, %176 : vector<8x32xf32>
    %196 = arith.mulf %191, %194 : vector<8x32xf32>
    %197 = arith.addf %195, %196 : vector<8x32xf32>
    %198 = math.tanh %197 : vector<8x32xf32>
    %199 = arith.mulf %193, %198 : vector<8x32xf32>
    %c32_122 = arith.constant 32 : index
    %c0_123 = arith.constant 0 : index
    %200 = vector.load %arg14[%c32_122, %c0_123] : memref<64x32xf32, #tpu.memory_space<vmem>>, vector<8x32xf32>
    tpu.vector_store %arg14[%c32_122, %c0_123], %199 {strides = array<i32>} : memref<64x32xf32, #tpu.memory_space<vmem>>, vector<8x32xf32>,
    %201 = vector.extract_strided_slice %89 {offsets = [40, 0], sizes = [8, 128], strides = [1, 1]} : vector<64x128xf32> to vector<8x128xf32>
    %cst_124 = arith.constant dense<0.000000e+00> : vector<8x128xf32>
    %202 = tpu.matmul %199, %91, %cst_124 {dimension_numbers = #tpu.dot_dimension_numbers<[1], [0], [0], [1], [0, 0, 1, 1], [], []>} : vector<8x32xf32>, vector<32x128xf32>, vector<8x128xf32> -> vector<8x128xf32>
    %203 = arith.addf %201, %202 : vector<8x128xf32>
    %cst_125 = arith.constant 0.000000e+00 : f32
    %204 = vector.broadcast %cst_125 : f32 to vector<8x128xf32>
    %205 = arith.subf %204, %203 : vector<8x128xf32>
    %206 = math.exp %205 : vector<8x128xf32>
    %cst_126 = arith.constant 1.000000e+00 : f32
    %207 = vector.broadcast %cst_126 : f32 to vector<8x128xf32>
    %208 = arith.addf %207, %206 : vector<8x128xf32>
    %cst_127 = arith.constant 1.000000e+00 : f32
    %209 = vector.broadcast %cst_127 : f32 to vector<8x128xf32>
    %210 = arith.divf %209, %208 : vector<8x128xf32>
    %211 = math.tanh %203 : vector<8x128xf32>
    %212 = vector.extract_strided_slice %210 {offsets = [0, 0], sizes = [8, 32], strides = [1, 1]} : vector<8x128xf32> to vector<8x32xf32>
    %213 = vector.extract_strided_slice %210 {offsets = [0, 32], sizes = [8, 32], strides = [1, 1]} : vector<8x128xf32> to vector<8x32xf32>
    %214 = vector.extract_strided_slice %210 {offsets = [0, 96], sizes = [8, 32], strides = [1, 1]} : vector<8x128xf32> to vector<8x32xf32>
    %215 = vector.extract_strided_slice %211 {offsets = [0, 64], sizes = [8, 32], strides = [1, 1]} : vector<8x128xf32> to vector<8x32xf32>
    %216 = arith.mulf %213, %197 : vector<8x32xf32>
    %217 = arith.mulf %212, %215 : vector<8x32xf32>
    %218 = arith.addf %216, %217 : vector<8x32xf32>
    %219 = math.tanh %218 : vector<8x32xf32>
    %220 = arith.mulf %214, %219 : vector<8x32xf32>
    %c40_128 = arith.constant 40 : index
    %c0_129 = arith.constant 0 : index
    %221 = vector.load %arg14[%c40_128, %c0_129] : memref<64x32xf32, #tpu.memory_space<vmem>>, vector<8x32xf32>
    tpu.vector_store %arg14[%c40_128, %c0_129], %220 {strides = array<i32>} : memref<64x32xf32, #tpu.memory_space<vmem>>, vector<8x32xf32>,
    %222 = vector.extract_strided_slice %89 {offsets = [48, 0], sizes = [8, 128], strides = [1, 1]} : vector<64x128xf32> to vector<8x128xf32>
    %cst_130 = arith.constant dense<0.000000e+00> : vector<8x128xf32>
    %223 = tpu.matmul %220, %91, %cst_130 {dimension_numbers = #tpu.dot_dimension_numbers<[1], [0], [0], [1], [0, 0, 1, 1], [], []>} : vector<8x32xf32>, vector<32x128xf32>, vector<8x128xf32> -> vector<8x128xf32>
    %224 = arith.addf %222, %223 : vector<8x128xf32>
    %cst_131 = arith.constant 0.000000e+00 : f32
    %225 = vector.broadcast %cst_131 : f32 to vector<8x128xf32>
    %226 = arith.subf %225, %224 : vector<8x128xf32>
    %227 = math.exp %226 : vector<8x128xf32>
    %cst_132 = arith.constant 1.000000e+00 : f32
    %228 = vector.broadcast %cst_132 : f32 to vector<8x128xf32>
    %229 = arith.addf %228, %227 : vector<8x128xf32>
    %cst_133 = arith.constant 1.000000e+00 : f32
    %230 = vector.broadcast %cst_133 : f32 to vector<8x128xf32>
    %231 = arith.divf %230, %229 : vector<8x128xf32>
    %232 = math.tanh %224 : vector<8x128xf32>
    %233 = vector.extract_strided_slice %231 {offsets = [0, 0], sizes = [8, 32], strides = [1, 1]} : vector<8x128xf32> to vector<8x32xf32>
    %234 = vector.extract_strided_slice %231 {offsets = [0, 32], sizes = [8, 32], strides = [1, 1]} : vector<8x128xf32> to vector<8x32xf32>
    %235 = vector.extract_strided_slice %231 {offsets = [0, 96], sizes = [8, 32], strides = [1, 1]} : vector<8x128xf32> to vector<8x32xf32>
    %236 = vector.extract_strided_slice %232 {offsets = [0, 64], sizes = [8, 32], strides = [1, 1]} : vector<8x128xf32> to vector<8x32xf32>
    %237 = arith.mulf %234, %218 : vector<8x32xf32>
    %238 = arith.mulf %233, %236 : vector<8x32xf32>
    %239 = arith.addf %237, %238 : vector<8x32xf32>
    %240 = math.tanh %239 : vector<8x32xf32>
    %241 = arith.mulf %235, %240 : vector<8x32xf32>
    %c48_134 = arith.constant 48 : index
    %c0_135 = arith.constant 0 : index
    %242 = vector.load %arg14[%c48_134, %c0_135] : memref<64x32xf32, #tpu.memory_space<vmem>>, vector<8x32xf32>
    tpu.vector_store %arg14[%c48_134, %c0_135], %241 {strides = array<i32>} : memref<64x32xf32, #tpu.memory_space<vmem>>, vector<8x32xf32>,
    %243 = vector.extract_strided_slice %89 {offsets = [56, 0], sizes = [8, 128], strides = [1, 1]} : vector<64x128xf32> to vector<8x128xf32>
    %cst_136 = arith.constant dense<0.000000e+00> : vector<8x128xf32>
    %244 = tpu.matmul %241, %91, %cst_136 {dimension_numbers = #tpu.dot_dimension_numbers<[1], [0], [0], [1], [0, 0, 1, 1], [], []>} : vector<8x32xf32>, vector<32x128xf32>, vector<8x128xf32> -> vector<8x128xf32>
    %245 = arith.addf %243, %244 : vector<8x128xf32>
    %cst_137 = arith.constant 0.000000e+00 : f32
    %246 = vector.broadcast %cst_137 : f32 to vector<8x128xf32>
    %247 = arith.subf %246, %245 : vector<8x128xf32>
    %248 = math.exp %247 : vector<8x128xf32>
    %cst_138 = arith.constant 1.000000e+00 : f32
    %249 = vector.broadcast %cst_138 : f32 to vector<8x128xf32>
    %250 = arith.addf %249, %248 : vector<8x128xf32>
    %cst_139 = arith.constant 1.000000e+00 : f32
    %251 = vector.broadcast %cst_139 : f32 to vector<8x128xf32>
    %252 = arith.divf %251, %250 : vector<8x128xf32>
    %253 = math.tanh %245 : vector<8x128xf32>
    %254 = vector.extract_strided_slice %252 {offsets = [0, 0], sizes = [8, 32], strides = [1, 1]} : vector<8x128xf32> to vector<8x32xf32>
    %255 = vector.extract_strided_slice %252 {offsets = [0, 32], sizes = [8, 32], strides = [1, 1]} : vector<8x128xf32> to vector<8x32xf32>
    %256 = vector.extract_strided_slice %252 {offsets = [0, 96], sizes = [8, 32], strides = [1, 1]} : vector<8x128xf32> to vector<8x32xf32>
    %257 = vector.extract_strided_slice %253 {offsets = [0, 64], sizes = [8, 32], strides = [1, 1]} : vector<8x128xf32> to vector<8x32xf32>
    %258 = arith.mulf %255, %239 : vector<8x32xf32>
    %259 = arith.mulf %254, %257 : vector<8x32xf32>
    %260 = arith.addf %258, %259 : vector<8x32xf32>
    %261 = math.tanh %260 : vector<8x32xf32>
    %262 = arith.mulf %256, %261 : vector<8x32xf32>
    %c56_140 = arith.constant 56 : index
    %c0_141 = arith.constant 0 : index
    %263 = vector.load %arg14[%c56_140, %c0_141] : memref<64x32xf32, #tpu.memory_space<vmem>>, vector<8x32xf32>
    tpu.vector_store %arg14[%c56_140, %c0_141], %262 {strides = array<i32>} : memref<64x32xf32, #tpu.memory_space<vmem>>, vector<8x32xf32>,
    %c0_142 = arith.constant 0 : index
    %c0_143 = arith.constant 0 : index
    %c0_144 = arith.constant 0 : index
    %264 = vector.load %arg12[%c0_142, %c0_143, %c0_144] : memref<2x8x32xf32, #tpu.memory_space<vmem>>, vector<1x8x32xf32>
    %265 = vector.shape_cast %264 : vector<1x8x32xf32> to vector<8x32xf32>
    %266 = vector.shape_cast %262 : vector<8x32xf32> to vector<1x8x32xf32>
    tpu.vector_store %arg12[%c0_142, %c0_143, %c0_144], %266 {strides = array<i32>} : memref<2x8x32xf32, #tpu.memory_space<vmem>>, vector<1x8x32xf32>,
    %c0_145 = arith.constant 0 : index
    %c0_146 = arith.constant 0 : index
    %c0_147 = arith.constant 0 : index
    %267 = vector.load %arg13[%c0_145, %c0_146, %c0_147] : memref<2x8x32xf32, #tpu.memory_space<vmem>>, vector<1x8x32xf32>
    %268 = vector.shape_cast %267 : vector<1x8x32xf32> to vector<8x32xf32>
    %269 = vector.shape_cast %260 : vector<8x32xf32> to vector<1x8x32xf32>
    tpu.vector_store %arg13[%c0_145, %c0_146, %c0_147], %269 {strides = array<i32>} : memref<2x8x32xf32, #tpu.memory_space<vmem>>, vector<1x8x32xf32>,
    %c0_148 = arith.constant 0 : index
    %c0_149 = arith.constant 0 : index
    %270 = vector.load %arg14[%c0_148, %c0_149] : memref<64x32xf32, #tpu.memory_space<vmem>>, vector<64x32xf32>
    %c1_150 = arith.constant 1 : index
    %c0_151 = arith.constant 0 : index
    %c0_152 = arith.constant 0 : index
    %271 = vector.load %arg4[%c1_150, %c0_151, %c0_152] : memref<2x32x128xf32, #tpu.memory_space<vmem>>, vector<1x32x128xf32>
    %272 = vector.shape_cast %271 : vector<1x32x128xf32> to vector<32x128xf32>
    %cst_153 = arith.constant dense<0.000000e+00> : vector<64x128xf32>
    %273 = tpu.matmul %270, %272, %cst_153 {dimension_numbers = #tpu.dot_dimension_numbers<[1], [0], [0], [1], [0, 0, 1, 1], [], []>} : vector<64x32xf32>, vector<32x128xf32>, vector<64x128xf32> -> vector<64x128xf32>
    %c1_154 = arith.constant 1 : index
    %c0_155 = arith.constant 0 : index
    %c0_156 = arith.constant 0 : index
    %274 = vector.load %arg6[%c1_154, %c0_155, %c0_156] : memref<2x1x128xf32, #tpu.memory_space<vmem>>, vector<1x1x128xf32>
    %275 = vector.shape_cast %274 : vector<1x1x128xf32> to vector<1x128xf32>
    %276 = vector.broadcast %275 : vector<1x128xf32> to vector<64x128xf32>
    %277 = arith.addf %273, %276 : vector<64x128xf32>
    %c1_157 = arith.constant 1 : index
    %c0_158 = arith.constant 0 : index
    %c0_159 = arith.constant 0 : index
    %278 = vector.load %arg5[%c1_157, %c0_158, %c0_159] : memref<2x32x128xf32, #tpu.memory_space<vmem>>, vector<1x32x128xf32>
    %279 = vector.shape_cast %278 : vector<1x32x128xf32> to vector<32x128xf32>
    %c1_160 = arith.constant 1 : index
    %c0_161 = arith.constant 0 : index
    %c0_162 = arith.constant 0 : index
    %280 = vector.load %arg2[%c1_160, %c0_161, %c0_162] : memref<2x8x32xf32, #tpu.memory_space<vmem>>, vector<1x8x32xf32>
    %281 = vector.shape_cast %280 : vector<1x8x32xf32> to vector<8x32xf32>
    %c1_163 = arith.constant 1 : index
    %c0_164 = arith.constant 0 : index
    %c0_165 = arith.constant 0 : index
    %282 = vector.load %arg3[%c1_163, %c0_164, %c0_165] : memref<2x8x32xf32, #tpu.memory_space<vmem>>, vector<1x8x32xf32>
    %283 = vector.shape_cast %282 : vector<1x8x32xf32> to vector<8x32xf32>
    %284 = vector.extract_strided_slice %277 {offsets = [0, 0], sizes = [8, 128], strides = [1, 1]} : vector<64x128xf32> to vector<8x128xf32>
    %cst_166 = arith.constant dense<0.000000e+00> : vector<8x128xf32>
    %285 = tpu.matmul %281, %279, %cst_166 {dimension_numbers = #tpu.dot_dimension_numbers<[1], [0], [0], [1], [0, 0, 1, 1], [], []>} : vector<8x32xf32>, vector<32x128xf32>, vector<8x128xf32> -> vector<8x128xf32>
    %286 = arith.addf %284, %285 : vector<8x128xf32>
    %cst_167 = arith.constant 0.000000e+00 : f32
    %287 = vector.broadcast %cst_167 : f32 to vector<8x128xf32>
    %288 = arith.subf %287, %286 : vector<8x128xf32>
    %289 = math.exp %288 : vector<8x128xf32>
    %cst_168 = arith.constant 1.000000e+00 : f32
    %290 = vector.broadcast %cst_168 : f32 to vector<8x128xf32>
    %291 = arith.addf %290, %289 : vector<8x128xf32>
    %cst_169 = arith.constant 1.000000e+00 : f32
    %292 = vector.broadcast %cst_169 : f32 to vector<8x128xf32>
    %293 = arith.divf %292, %291 : vector<8x128xf32>
    %294 = math.tanh %286 : vector<8x128xf32>
    %295 = vector.extract_strided_slice %293 {offsets = [0, 0], sizes = [8, 32], strides = [1, 1]} : vector<8x128xf32> to vector<8x32xf32>
    %296 = vector.extract_strided_slice %293 {offsets = [0, 32], sizes = [8, 32], strides = [1, 1]} : vector<8x128xf32> to vector<8x32xf32>
    %297 = vector.extract_strided_slice %293 {offsets = [0, 96], sizes = [8, 32], strides = [1, 1]} : vector<8x128xf32> to vector<8x32xf32>
    %298 = vector.extract_strided_slice %294 {offsets = [0, 64], sizes = [8, 32], strides = [1, 1]} : vector<8x128xf32> to vector<8x32xf32>
    %299 = arith.mulf %296, %283 : vector<8x32xf32>
    %300 = arith.mulf %295, %298 : vector<8x32xf32>
    %301 = arith.addf %299, %300 : vector<8x32xf32>
    %302 = math.tanh %301 : vector<8x32xf32>
    %303 = arith.mulf %297, %302 : vector<8x32xf32>
    %304 = vector.extract_strided_slice %277 {offsets = [8, 0], sizes = [8, 128], strides = [1, 1]} : vector<64x128xf32> to vector<8x128xf32>
    %cst_170 = arith.constant dense<0.000000e+00> : vector<8x128xf32>
    %305 = tpu.matmul %303, %279, %cst_170 {dimension_numbers = #tpu.dot_dimension_numbers<[1], [0], [0], [1], [0, 0, 1, 1], [], []>} : vector<8x32xf32>, vector<32x128xf32>, vector<8x128xf32> -> vector<8x128xf32>
    %306 = arith.addf %304, %305 : vector<8x128xf32>
    %cst_171 = arith.constant 0.000000e+00 : f32
    %307 = vector.broadcast %cst_171 : f32 to vector<8x128xf32>
    %308 = arith.subf %307, %306 : vector<8x128xf32>
    %309 = math.exp %308 : vector<8x128xf32>
    %cst_172 = arith.constant 1.000000e+00 : f32
    %310 = vector.broadcast %cst_172 : f32 to vector<8x128xf32>
    %311 = arith.addf %310, %309 : vector<8x128xf32>
    %cst_173 = arith.constant 1.000000e+00 : f32
    %312 = vector.broadcast %cst_173 : f32 to vector<8x128xf32>
    %313 = arith.divf %312, %311 : vector<8x128xf32>
    %314 = math.tanh %306 : vector<8x128xf32>
    %315 = vector.extract_strided_slice %313 {offsets = [0, 0], sizes = [8, 32], strides = [1, 1]} : vector<8x128xf32> to vector<8x32xf32>
    %316 = vector.extract_strided_slice %313 {offsets = [0, 32], sizes = [8, 32], strides = [1, 1]} : vector<8x128xf32> to vector<8x32xf32>
    %317 = vector.extract_strided_slice %313 {offsets = [0, 96], sizes = [8, 32], strides = [1, 1]} : vector<8x128xf32> to vector<8x32xf32>
    %318 = vector.extract_strided_slice %314 {offsets = [0, 64], sizes = [8, 32], strides = [1, 1]} : vector<8x128xf32> to vector<8x32xf32>
    %319 = arith.mulf %316, %301 : vector<8x32xf32>
    %320 = arith.mulf %315, %318 : vector<8x32xf32>
    %321 = arith.addf %319, %320 : vector<8x32xf32>
    %322 = math.tanh %321 : vector<8x32xf32>
    %323 = arith.mulf %317, %322 : vector<8x32xf32>
    %324 = vector.extract_strided_slice %277 {offsets = [16, 0], sizes = [8, 128], strides = [1, 1]} : vector<64x128xf32> to vector<8x128xf32>
    %cst_174 = arith.constant dense<0.000000e+00> : vector<8x128xf32>
    %325 = tpu.matmul %323, %279, %cst_174 {dimension_numbers = #tpu.dot_dimension_numbers<[1], [0], [0], [1], [0, 0, 1, 1], [], []>} : vector<8x32xf32>, vector<32x128xf32>, vector<8x128xf32> -> vector<8x128xf32>
    %326 = arith.addf %324, %325 : vector<8x128xf32>
    %cst_175 = arith.constant 0.000000e+00 : f32
    %327 = vector.broadcast %cst_175 : f32 to vector<8x128xf32>
    %328 = arith.subf %327, %326 : vector<8x128xf32>
    %329 = math.exp %328 : vector<8x128xf32>
    %cst_176 = arith.constant 1.000000e+00 : f32
    %330 = vector.broadcast %cst_176 : f32 to vector<8x128xf32>
    %331 = arith.addf %330, %329 : vector<8x128xf32>
    %cst_177 = arith.constant 1.000000e+00 : f32
    %332 = vector.broadcast %cst_177 : f32 to vector<8x128xf32>
    %333 = arith.divf %332, %331 : vector<8x128xf32>
    %334 = math.tanh %326 : vector<8x128xf32>
    %335 = vector.extract_strided_slice %333 {offsets = [0, 0], sizes = [8, 32], strides = [1, 1]} : vector<8x128xf32> to vector<8x32xf32>
    %336 = vector.extract_strided_slice %333 {offsets = [0, 32], sizes = [8, 32], strides = [1, 1]} : vector<8x128xf32> to vector<8x32xf32>
    %337 = vector.extract_strided_slice %333 {offsets = [0, 96], sizes = [8, 32], strides = [1, 1]} : vector<8x128xf32> to vector<8x32xf32>
    %338 = vector.extract_strided_slice %334 {offsets = [0, 64], sizes = [8, 32], strides = [1, 1]} : vector<8x128xf32> to vector<8x32xf32>
    %339 = arith.mulf %336, %321 : vector<8x32xf32>
    %340 = arith.mulf %335, %338 : vector<8x32xf32>
    %341 = arith.addf %339, %340 : vector<8x32xf32>
    %342 = math.tanh %341 : vector<8x32xf32>
    %343 = arith.mulf %337, %342 : vector<8x32xf32>
    %344 = vector.extract_strided_slice %277 {offsets = [24, 0], sizes = [8, 128], strides = [1, 1]} : vector<64x128xf32> to vector<8x128xf32>
    %cst_178 = arith.constant dense<0.000000e+00> : vector<8x128xf32>
    %345 = tpu.matmul %343, %279, %cst_178 {dimension_numbers = #tpu.dot_dimension_numbers<[1], [0], [0], [1], [0, 0, 1, 1], [], []>} : vector<8x32xf32>, vector<32x128xf32>, vector<8x128xf32> -> vector<8x128xf32>
    %346 = arith.addf %344, %345 : vector<8x128xf32>
    %cst_179 = arith.constant 0.000000e+00 : f32
    %347 = vector.broadcast %cst_179 : f32 to vector<8x128xf32>
    %348 = arith.subf %347, %346 : vector<8x128xf32>
    %349 = math.exp %348 : vector<8x128xf32>
    %cst_180 = arith.constant 1.000000e+00 : f32
    %350 = vector.broadcast %cst_180 : f32 to vector<8x128xf32>
    %351 = arith.addf %350, %349 : vector<8x128xf32>
    %cst_181 = arith.constant 1.000000e+00 : f32
    %352 = vector.broadcast %cst_181 : f32 to vector<8x128xf32>
    %353 = arith.divf %352, %351 : vector<8x128xf32>
    %354 = math.tanh %346 : vector<8x128xf32>
    %355 = vector.extract_strided_slice %353 {offsets = [0, 0], sizes = [8, 32], strides = [1, 1]} : vector<8x128xf32> to vector<8x32xf32>
    %356 = vector.extract_strided_slice %353 {offsets = [0, 32], sizes = [8, 32], strides = [1, 1]} : vector<8x128xf32> to vector<8x32xf32>
    %357 = vector.extract_strided_slice %353 {offsets = [0, 96], sizes = [8, 32], strides = [1, 1]} : vector<8x128xf32> to vector<8x32xf32>
    %358 = vector.extract_strided_slice %354 {offsets = [0, 64], sizes = [8, 32], strides = [1, 1]} : vector<8x128xf32> to vector<8x32xf32>
    %359 = arith.mulf %356, %341 : vector<8x32xf32>
    %360 = arith.mulf %355, %358 : vector<8x32xf32>
    %361 = arith.addf %359, %360 : vector<8x32xf32>
    %362 = math.tanh %361 : vector<8x32xf32>
    %363 = arith.mulf %357, %362 : vector<8x32xf32>
    %364 = vector.extract_strided_slice %277 {offsets = [32, 0], sizes = [8, 128], strides = [1, 1]} : vector<64x128xf32> to vector<8x128xf32>
    %cst_182 = arith.constant dense<0.000000e+00> : vector<8x128xf32>
    %365 = tpu.matmul %363, %279, %cst_182 {dimension_numbers = #tpu.dot_dimension_numbers<[1], [0], [0], [1], [0, 0, 1, 1], [], []>} : vector<8x32xf32>, vector<32x128xf32>, vector<8x128xf32> -> vector<8x128xf32>
    %366 = arith.addf %364, %365 : vector<8x128xf32>
    %cst_183 = arith.constant 0.000000e+00 : f32
    %367 = vector.broadcast %cst_183 : f32 to vector<8x128xf32>
    %368 = arith.subf %367, %366 : vector<8x128xf32>
    %369 = math.exp %368 : vector<8x128xf32>
    %cst_184 = arith.constant 1.000000e+00 : f32
    %370 = vector.broadcast %cst_184 : f32 to vector<8x128xf32>
    %371 = arith.addf %370, %369 : vector<8x128xf32>
    %cst_185 = arith.constant 1.000000e+00 : f32
    %372 = vector.broadcast %cst_185 : f32 to vector<8x128xf32>
    %373 = arith.divf %372, %371 : vector<8x128xf32>
    %374 = math.tanh %366 : vector<8x128xf32>
    %375 = vector.extract_strided_slice %373 {offsets = [0, 0], sizes = [8, 32], strides = [1, 1]} : vector<8x128xf32> to vector<8x32xf32>
    %376 = vector.extract_strided_slice %373 {offsets = [0, 32], sizes = [8, 32], strides = [1, 1]} : vector<8x128xf32> to vector<8x32xf32>
    %377 = vector.extract_strided_slice %373 {offsets = [0, 96], sizes = [8, 32], strides = [1, 1]} : vector<8x128xf32> to vector<8x32xf32>
    %378 = vector.extract_strided_slice %374 {offsets = [0, 64], sizes = [8, 32], strides = [1, 1]} : vector<8x128xf32> to vector<8x32xf32>
    %379 = arith.mulf %376, %361 : vector<8x32xf32>
    %380 = arith.mulf %375, %378 : vector<8x32xf32>
    %381 = arith.addf %379, %380 : vector<8x32xf32>
    %382 = math.tanh %381 : vector<8x32xf32>
    %383 = arith.mulf %377, %382 : vector<8x32xf32>
    %384 = vector.extract_strided_slice %277 {offsets = [40, 0], sizes = [8, 128], strides = [1, 1]} : vector<64x128xf32> to vector<8x128xf32>
    %cst_186 = arith.constant dense<0.000000e+00> : vector<8x128xf32>
    %385 = tpu.matmul %383, %279, %cst_186 {dimension_numbers = #tpu.dot_dimension_numbers<[1], [0], [0], [1], [0, 0, 1, 1], [], []>} : vector<8x32xf32>, vector<32x128xf32>, vector<8x128xf32> -> vector<8x128xf32>
    %386 = arith.addf %384, %385 : vector<8x128xf32>
    %cst_187 = arith.constant 0.000000e+00 : f32
    %387 = vector.broadcast %cst_187 : f32 to vector<8x128xf32>
    %388 = arith.subf %387, %386 : vector<8x128xf32>
    %389 = math.exp %388 : vector<8x128xf32>
    %cst_188 = arith.constant 1.000000e+00 : f32
    %390 = vector.broadcast %cst_188 : f32 to vector<8x128xf32>
    %391 = arith.addf %390, %389 : vector<8x128xf32>
    %cst_189 = arith.constant 1.000000e+00 : f32
    %392 = vector.broadcast %cst_189 : f32 to vector<8x128xf32>
    %393 = arith.divf %392, %391 : vector<8x128xf32>
    %394 = math.tanh %386 : vector<8x128xf32>
    %395 = vector.extract_strided_slice %393 {offsets = [0, 0], sizes = [8, 32], strides = [1, 1]} : vector<8x128xf32> to vector<8x32xf32>
    %396 = vector.extract_strided_slice %393 {offsets = [0, 32], sizes = [8, 32], strides = [1, 1]} : vector<8x128xf32> to vector<8x32xf32>
    %397 = vector.extract_strided_slice %393 {offsets = [0, 96], sizes = [8, 32], strides = [1, 1]} : vector<8x128xf32> to vector<8x32xf32>
    %398 = vector.extract_strided_slice %394 {offsets = [0, 64], sizes = [8, 32], strides = [1, 1]} : vector<8x128xf32> to vector<8x32xf32>
    %399 = arith.mulf %396, %381 : vector<8x32xf32>
    %400 = arith.mulf %395, %398 : vector<8x32xf32>
    %401 = arith.addf %399, %400 : vector<8x32xf32>
    %402 = math.tanh %401 : vector<8x32xf32>
    %403 = arith.mulf %397, %402 : vector<8x32xf32>
    %404 = vector.extract_strided_slice %277 {offsets = [48, 0], sizes = [8, 128], strides = [1, 1]} : vector<64x128xf32> to vector<8x128xf32>
    %cst_190 = arith.constant dense<0.000000e+00> : vector<8x128xf32>
    %405 = tpu.matmul %403, %279, %cst_190 {dimension_numbers = #tpu.dot_dimension_numbers<[1], [0], [0], [1], [0, 0, 1, 1], [], []>} : vector<8x32xf32>, vector<32x128xf32>, vector<8x128xf32> -> vector<8x128xf32>
    %406 = arith.addf %404, %405 : vector<8x128xf32>
    %cst_191 = arith.constant 0.000000e+00 : f32
    %407 = vector.broadcast %cst_191 : f32 to vector<8x128xf32>
    %408 = arith.subf %407, %406 : vector<8x128xf32>
    %409 = math.exp %408 : vector<8x128xf32>
    %cst_192 = arith.constant 1.000000e+00 : f32
    %410 = vector.broadcast %cst_192 : f32 to vector<8x128xf32>
    %411 = arith.addf %410, %409 : vector<8x128xf32>
    %cst_193 = arith.constant 1.000000e+00 : f32
    %412 = vector.broadcast %cst_193 : f32 to vector<8x128xf32>
    %413 = arith.divf %412, %411 : vector<8x128xf32>
    %414 = math.tanh %406 : vector<8x128xf32>
    %415 = vector.extract_strided_slice %413 {offsets = [0, 0], sizes = [8, 32], strides = [1, 1]} : vector<8x128xf32> to vector<8x32xf32>
    %416 = vector.extract_strided_slice %413 {offsets = [0, 32], sizes = [8, 32], strides = [1, 1]} : vector<8x128xf32> to vector<8x32xf32>
    %417 = vector.extract_strided_slice %413 {offsets = [0, 96], sizes = [8, 32], strides = [1, 1]} : vector<8x128xf32> to vector<8x32xf32>
    %418 = vector.extract_strided_slice %414 {offsets = [0, 64], sizes = [8, 32], strides = [1, 1]} : vector<8x128xf32> to vector<8x32xf32>
    %419 = arith.mulf %416, %401 : vector<8x32xf32>
    %420 = arith.mulf %415, %418 : vector<8x32xf32>
    %421 = arith.addf %419, %420 : vector<8x32xf32>
    %422 = math.tanh %421 : vector<8x32xf32>
    %423 = arith.mulf %417, %422 : vector<8x32xf32>
    %424 = vector.extract_strided_slice %277 {offsets = [56, 0], sizes = [8, 128], strides = [1, 1]} : vector<64x128xf32> to vector<8x128xf32>
    %cst_194 = arith.constant dense<0.000000e+00> : vector<8x128xf32>
    %425 = tpu.matmul %423, %279, %cst_194 {dimension_numbers = #tpu.dot_dimension_numbers<[1], [0], [0], [1], [0, 0, 1, 1], [], []>} : vector<8x32xf32>, vector<32x128xf32>, vector<8x128xf32> -> vector<8x128xf32>
    %426 = arith.addf %424, %425 : vector<8x128xf32>
    %cst_195 = arith.constant 0.000000e+00 : f32
    %427 = vector.broadcast %cst_195 : f32 to vector<8x128xf32>
    %428 = arith.subf %427, %426 : vector<8x128xf32>
    %429 = math.exp %428 : vector<8x128xf32>
    %cst_196 = arith.constant 1.000000e+00 : f32
    %430 = vector.broadcast %cst_196 : f32 to vector<8x128xf32>
    %431 = arith.addf %430, %429 : vector<8x128xf32>
    %cst_197 = arith.constant 1.000000e+00 : f32
    %432 = vector.broadcast %cst_197 : f32 to vector<8x128xf32>
    %433 = arith.divf %432, %431 : vector<8x128xf32>
    %434 = math.tanh %426 : vector<8x128xf32>
    %435 = vector.extract_strided_slice %433 {offsets = [0, 0], sizes = [8, 32], strides = [1, 1]} : vector<8x128xf32> to vector<8x32xf32>
    %436 = vector.extract_strided_slice %433 {offsets = [0, 32], sizes = [8, 32], strides = [1, 1]} : vector<8x128xf32> to vector<8x32xf32>
    %437 = vector.extract_strided_slice %433 {offsets = [0, 96], sizes = [8, 32], strides = [1, 1]} : vector<8x128xf32> to vector<8x32xf32>
    %438 = vector.extract_strided_slice %434 {offsets = [0, 64], sizes = [8, 32], strides = [1, 1]} : vector<8x128xf32> to vector<8x32xf32>
    %439 = arith.mulf %436, %421 : vector<8x32xf32>
    %440 = arith.mulf %435, %438 : vector<8x32xf32>
    %441 = arith.addf %439, %440 : vector<8x32xf32>
    %442 = math.tanh %441 : vector<8x32xf32>
    %443 = arith.mulf %437, %442 : vector<8x32xf32>
    %c1_198 = arith.constant 1 : index
    %c0_199 = arith.constant 0 : index
    %c0_200 = arith.constant 0 : index
    %444 = vector.load %arg12[%c1_198, %c0_199, %c0_200] : memref<2x8x32xf32, #tpu.memory_space<vmem>>, vector<1x8x32xf32>
    %445 = vector.shape_cast %444 : vector<1x8x32xf32> to vector<8x32xf32>
    %446 = vector.shape_cast %443 : vector<8x32xf32> to vector<1x8x32xf32>
    tpu.vector_store %arg12[%c1_198, %c0_199, %c0_200], %446 {strides = array<i32>} : memref<2x8x32xf32, #tpu.memory_space<vmem>>, vector<1x8x32xf32>,
    %c1_201 = arith.constant 1 : index
    %c0_202 = arith.constant 0 : index
    %c0_203 = arith.constant 0 : index
    %447 = vector.load %arg13[%c1_201, %c0_202, %c0_203] : memref<2x8x32xf32, #tpu.memory_space<vmem>>, vector<1x8x32xf32>
    %448 = vector.shape_cast %447 : vector<1x8x32xf32> to vector<8x32xf32>
    %449 = vector.shape_cast %441 : vector<8x32xf32> to vector<1x8x32xf32>
    tpu.vector_store %arg13[%c1_201, %c0_202, %c0_203], %449 {strides = array<i32>} : memref<2x8x32xf32, #tpu.memory_space<vmem>>, vector<1x8x32xf32>,
    %c0_204 = arith.constant 0 : index
    %c0_205 = arith.constant 0 : index
    %450 = vector.load %arg7[%c0_204, %c0_205] : memref<32x64xf32, #tpu.memory_space<vmem>>, vector<32x64xf32>
    %cst_206 = arith.constant dense<0.000000e+00> : vector<8x64xf32>
    %451 = tpu.matmul %443, %450, %cst_206 {dimension_numbers = #tpu.dot_dimension_numbers<[1], [0], [0], [1], [0, 0, 1, 1], [], []>} : vector<8x32xf32>, vector<32x64xf32>, vector<8x64xf32> -> vector<8x64xf32>
    %c0_207 = arith.constant 0 : index
    %c0_208 = arith.constant 0 : index
    %452 = vector.load %arg8[%c0_207, %c0_208] : memref<1x64xf32, #tpu.memory_space<vmem>>, vector<1x64xf32>
    %453 = vector.broadcast %452 : vector<1x64xf32> to vector<8x64xf32>
    %454 = arith.addf %451, %453 : vector<8x64xf32>
    %cst_209 = arith.constant 0.000000e+00 : f32
    %455 = vector.broadcast %cst_209 : f32 to vector<8x64xf32>
    %456 = arith.maximumf %454, %455 : vector<8x64xf32>
    %c0_210 = arith.constant 0 : index
    %c0_211 = arith.constant 0 : index
    %457 = vector.load %arg9[%c0_210, %c0_211] : memref<64x4xf32, #tpu.memory_space<vmem>>, vector<64x4xf32>
    %cst_212 = arith.constant dense<0.000000e+00> : vector<8x4xf32>
    %458 = tpu.matmul %456, %457, %cst_212 {dimension_numbers = #tpu.dot_dimension_numbers<[1], [0], [0], [1], [0, 0, 1, 1], [], []>} : vector<8x64xf32>, vector<64x4xf32>, vector<8x4xf32> -> vector<8x4xf32>
    %c0_213 = arith.constant 0 : index
    %c0_214 = arith.constant 0 : index
    %459 = vector.load %arg10[%c0_213, %c0_214] : memref<1x4xf32, #tpu.memory_space<vmem>>, vector<1x4xf32>
    %460 = vector.broadcast %459 : vector<1x4xf32> to vector<8x4xf32>
    %461 = arith.addf %458, %460 : vector<8x4xf32>
    %c0_215 = arith.constant 0 : index
    %c0_216 = arith.constant 0 : index
    %462 = vector.load %arg11[%c0_215, %c0_216] : memref<8x4xf32, #tpu.memory_space<vmem>>, vector<8x4xf32>
    tpu.vector_store %arg11[%c0_215, %c0_216], %461 {strides = array<i32>} : memref<8x4xf32, #tpu.memory_space<vmem>>, vector<8x4xf32>,
    return
  }
}

</mosaic_0001>

<llo_original>
// kernel: dialect_rnn_forward.1
$region0: #{dialect_rnn_forward.1}
  #allocation0 [shape = 'u32[]', space=smem, size = 0x4, offset = 0x4, fixed_abs, tag = 'smem constant byte address 0x4 - core index']
  #allocation1 [shape = 'u32[144,128]{1,0:T(1,128)}', space=vmem, size = 0x12000, scoped, tag = 'internal scratch']
  #allocation2 [shape = 'f32[64,32]{1,0:T(8,128)}', space=vmem, size = 0x8000, scoped, tag = 'scratch operand']
  %s0 = inlined_call_operand.vmem [shape: s32[2,8], index: 0, kind: input, shape index: {}]
  %s1 = inlined_call_operand.vmem [shape: f32[50,1,32], index: 1, kind: input, shape index: {}]
  %s2 = inlined_call_operand.vmem [shape: f32[2,8,32], index: 2, kind: input, shape index: {}]
  %s3 = inlined_call_operand.vmem [shape: f32[2,8,32], index: 3, kind: input, shape index: {}]
  %s4 = inlined_call_operand.vmem [shape: f32[2,32,128], index: 4, kind: input, shape index: {}]
  %s5 = inlined_call_operand.vmem [shape: f32[2,32,128], index: 5, kind: input, shape index: {}]
  %s6 = inlined_call_operand.vmem [shape: f32[2,1,128], index: 6, kind: input, shape index: {}]
  %s7 = inlined_call_operand.vmem [shape: f32[32,64], index: 7, kind: input, shape index: {}]
  %s8 = inlined_call_operand.vmem [shape: f32[1,64], index: 8, kind: input, shape index: {}]
  %s9 = inlined_call_operand.vmem [shape: f32[64,4], index: 9, kind: input, shape index: {}]
  %s10 = inlined_call_operand.vmem [shape: f32[1,4], index: 10, kind: input, shape index: {}]
  %s11 = inlined_call_operand.vmem [shape: f32[8,4], index: 11, kind: output, shape index: {0}]
  %s12 = inlined_call_operand.vmem [shape: f32[2,8,32], index: 12, kind: output, shape index: {1}]
  %s13 = inlined_call_operand.vmem [shape: f32[2,8,32], index: 13, kind: output, shape index: {2}]
  %14 = xla_tuple %s11, %s12, %s13
  %s15 = sld [smem:[#allocation0]]
  $region74: #{dialect_rnn_forward.1} parent=0
    _
  %s17 = ssub.s32 1, %s15
  %s18 = scalar_select 0, %s17, %s15
  $region1: #{dialect_rnn_forward.1} parent=0
    #allocation3 [shape = 'u8[1024]{0}', space=smem, size = 0x400, scoped, tag = 'input window, operand 0, single buffered']
    #allocation4 [shape = 's32[1]{0}', space=sflag, size = 0x4, scoped, tag = 'scoped memory for dialect_rnn_forward.1']
    %19 = vsyncpa [#allocation4], 0
    // Predicated region
    $region2: #{dialect_rnn_forward.1} parent=1 // pred_check
      _
    $region3: #{dialect_rnn_forward.1} parent=1 // pred_check_branch
      %21 = sbr.rel (0) target = $region5
    $region4: #{dialect_rnn_forward.1} parent=1 // pred_region
      %s23 = ssub.s32 32, 32
      %24 = vsyncadd [#allocation4], %s23
      %s26 = sshll.u32 %s0, 4
      %s27 = int_to_ptr.vmem [resolvable:$true] %s26
      %29 = dma.vmem_to_smem %s27, 32, [#allocation3], [#allocation4]
    $region5: #{dialect_rnn_forward.1} parent=1 // pred_fallthru
      _
    // Predicated region
    $region6: #{dialect_rnn_forward.1} parent=1 // pred_check
      _
    $region7: #{dialect_rnn_forward.1} parent=1 // pred_check_branch
      %31 = sbr.rel (0) target = $region9
    $region8: #{dialect_rnn_forward.1} parent=1 // pred_region
      _
    $region9: #{dialect_rnn_forward.1} parent=1 // pred_fallthru
      _
    // Predicated region
    $region10: #{dialect_rnn_forward.1} parent=1 // pred_check
      _
    $region11: #{dialect_rnn_forward.1} parent=1 // pred_check_branch
      %33 = sbr.rel (0) target = $region13
    $region12: #{dialect_rnn_forward.1} parent=1 // pred_region
      _
    $region13: #{dialect_rnn_forward.1} parent=1 // pred_fallthru
      _
    // Predicated region
    $region14: #{dialect_rnn_forward.1} parent=1 // pred_check
      _
    $region15: #{dialect_rnn_forward.1} parent=1 // pred_check_branch
      %35 = sbr.rel (0) target = $region17
    $region16: #{dialect_rnn_forward.1} parent=1 // pred_region
      _
    $region17: #{dialect_rnn_forward.1} parent=1 // pred_fallthru
      _
    // Predicated region
    $region18: #{dialect_rnn_forward.1} parent=1 // pred_check
      _
    $region19: #{dialect_rnn_forward.1} parent=1 // pred_check_branch
      %37 = sbr.rel (0) target = $region21
    $region20: #{dialect_rnn_forward.1} parent=1 // pred_region
      _
    $region21: #{dialect_rnn_forward.1} parent=1 // pred_fallthru
      _
    // Predicated region
    $region22: #{dialect_rnn_forward.1} parent=1 // pred_check
      _
    $region23: #{dialect_rnn_forward.1} parent=1 // pred_check_branch
      %39 = sbr.rel (0) target = $region25
    $region24: #{dialect_rnn_forward.1} parent=1 // pred_region
      _
    $region25: #{dialect_rnn_forward.1} parent=1 // pred_fallthru
      _
    // Predicated region
    $region26: #{dialect_rnn_forward.1} parent=1 // pred_check
      _
    $region27: #{dialect_rnn_forward.1} parent=1 // pred_check_branch
      %41 = sbr.rel (0) target = $region29
    $region28: #{dialect_rnn_forward.1} parent=1 // pred_region
      _
    $region29: #{dialect_rnn_forward.1} parent=1 // pred_fallthru
      _
    // Predicated region
    $region30: #{dialect_rnn_forward.1} parent=1 // pred_check
      _
    $region31: #{dialect_rnn_forward.1} parent=1 // pred_check_branch
      %43 = sbr.rel (0) target = $region33
    $region32: #{dialect_rnn_forward.1} parent=1 // pred_region
      _
    $region33: #{dialect_rnn_forward.1} parent=1 // pred_fallthru
      _
    // Predicated region
    $region34: #{dialect_rnn_forward.1} parent=1 // pred_check
      _
    $region35: #{dialect_rnn_forward.1} parent=1 // pred_check_branch
      %45 = sbr.rel (0) target = $region37
    $region36: #{dialect_rnn_forward.1} parent=1 // pred_region
      _
    $region37: #{dialect_rnn_forward.1} parent=1 // pred_fallthru
      _
    // Predicated region
    $region38: #{dialect_rnn_forward.1} parent=1 // pred_check
      _
    $region39: #{dialect_rnn_forward.1} parent=1 // pred_check_branch
      %47 = sbr.rel (0) target = $region41
    $region40: #{dialect_rnn_forward.1} parent=1 // pred_region
      _
    $region41: #{dialect_rnn_forward.1} parent=1 // pred_fallthru
      _
    // Predicated region
    $region42: #{dialect_rnn_forward.1} parent=1 // pred_check
      _
    $region43: #{dialect_rnn_forward.1} parent=1 // pred_check_branch
      %49 = sbr.rel (0) target = $region45
    $region44: #{dialect_rnn_forward.1} parent=1 // pred_region
      _
    $region45: #{dialect_rnn_forward.1} parent=1 // pred_fallthru
      _
    // Predicated region
    $region46: #{dialect_rnn_forward.1} parent=1 // pred_check
      _
    $region47: #{dialect_rnn_forward.1} parent=1 // pred_check_branch
      %51 = sbr.rel (0) target = $region49
    $region48: #{dialect_rnn_forward.1} parent=1 // pred_region
      %52 = dma.done [#allocation4], 32
    $region49: #{dialect_rnn_forward.1} parent=1 // pred_fallthru
      _
    %53 = sfence
    %vm54 = vcmask 261120
    %55 = vst.msk [vmem:[#allocation2] sm:$0xff] %vm54, 0.0
    %56 = vst.msk [vmem:[#allocation2 + $0x8] sm:$0xff] %vm54, 0.0
    %57 = vst.msk [vmem:[#allocation2 + $0x10] sm:$0xff] %vm54, 0.0
    %58 = vst.msk [vmem:[#allocation2 + $0x18] sm:$0xff] %vm54, 0.0
    %59 = vst.msk [vmem:[#allocation2 + $0x20] sm:$0xff] %vm54, 0.0
    %60 = vst.msk [vmem:[#allocation2 + $0x28] sm:$0xff] %vm54, 0.0
    %61 = vst.msk [vmem:[#allocation2 + $0x30] sm:$0xff] %vm54, 0.0
    %62 = vst.msk [vmem:[#allocation2 + $0x38] sm:$0xff] %vm54, 0.0
    %s63 = sld [smem:[#allocation3]]
    %s64 = scalar_lea.vmem %s1, %s63
    %v65 = vld [vmem:[%s64] sm:$0x1]
    %vm66 = vcmask 253952
    %67 = vst.msk [vmem:[#allocation2] sm:$0x1] %vm66, %v65
    %s68 = sld [smem:[#allocation3 + $0x80]]
    %s69 = scalar_lea.vmem %s1, %s68
    %v70 = vld [vmem:[%s69] sm:$0x1]
    %71 = vst.msk [vmem:[#allocation2 + $0x1] sm:$0x1] %vm66, %v70
    %s72 = sld [smem:[#allocation3 + $0x1]]
    %s73 = scalar_lea.vmem %s1, %s72
    %v74 = vld [vmem:[%s73] sm:$0x1]
    %75 = vst.msk [vmem:[#allocation2 + $0x8] sm:$0x1] %vm66, %v74
    %s76 = sld [smem:[#allocation3 + $0x81]]
    %s77 = scalar_lea.vmem %s1, %s76
    %v78 = vld [vmem:[%s77] sm:$0x1]
    %79 = vst.msk [vmem:[#allocation2 + $0x9] sm:$0x1] %vm66, %v78
    %s80 = sld [smem:[#allocation3 + $0x2]]
    %s81 = scalar_lea.vmem %s1, %s80
    %v82 = vld [vmem:[%s81] sm:$0x1]
    %83 = vst.msk [vmem:[#allocation2 + $0x10] sm:$0x1] %vm66, %v82
    %s84 = sld [smem:[#allocation3 + $0x82]]
    %s85 = scalar_lea.vmem %s1, %s84
    %v86 = vld [vmem:[%s85] sm:$0x1]
    %87 = vst.msk [vmem:[#allocation2 + $0x11] sm:$0x1] %vm66, %v86
    %s88 = sld [smem:[#allocation3 + $0x3]]
    %s89 = scalar_lea.vmem %s1, %s88
    %v90 = vld [vmem:[%s89] sm:$0x1]
    %91 = vst.msk [vmem:[#allocation2 + $0x18] sm:$0x1] %vm66, %v90
    %s92 = sld [smem:[#allocation3 + $0x83]]
    %s93 = scalar_lea.vmem %s1, %s92
    %v94 = vld [vmem:[%s93] sm:$0x1]
    %95 = vst.msk [vmem:[#allocation2 + $0x19] sm:$0x1] %vm66, %v94
    %s96 = sld [smem:[#allocation3 + $0x4]]
    %s97 = scalar_lea.vmem %s1, %s96
    %v98 = vld [vmem:[%s97] sm:$0x1]
    %99 = vst.msk [vmem:[#allocation2 + $0x20] sm:$0x1] %vm66, %v98
    %s100 = sld [smem:[#allocation3 + $0x84]]
    %s101 = scalar_lea.vmem %s1, %s100
    %v102 = vld [vmem:[%s101] sm:$0x1]
    %103 = vst.msk [vmem:[#allocation2 + $0x21] sm:$0x1] %vm66, %v102
    %s104 = sld [smem:[#allocation3 + $0x5]]
    %s105 = scalar_lea.vmem %s1, %s104
    %v106 = vld [vmem:[%s105] sm:$0x1]
    %107 = vst.msk [vmem:[#allocation2 + $0x28] sm:$0x1] %vm66, %v106
    %s108 = sld [smem:[#allocation3 + $0x85]]
    %s109 = scalar_lea.vmem %s1, %s108
    %v110 = vld [vmem:[%s109] sm:$0x1]
    %111 = vst.msk [vmem:[#allocation2 + $0x29] sm:$0x1] %vm66, %v110
    %s112 = sld [smem:[#allocation3 + $0x6]]
    %s113 = scalar_lea.vmem %s1, %s112
    %v114 = vld [vmem:[%s113] sm:$0x1]
    %115 = vst.msk [vmem:[#allocation2 + $0x30] sm:$0x1] %vm66, %v114
    %s116 = sld [smem:[#allocation3 + $0x86]]
    %s117 = scalar_lea.vmem %s1, %s116
    %v118 = vld [vmem:[%s117] sm:$0x1]
    %119 = vst.msk [vmem:[#allocation2 + $0x31] sm:$0x1] %vm66, %v118
    %s120 = sld [smem:[#allocation3 + $0x7]]
    %s121 = scalar_lea.vmem %s1, %s120
    %v122 = vld [vmem:[%s121] sm:$0x1]
    %123 = vst.msk [vmem:[#allocation2 + $0x38] sm:$0x1] %vm66, %v122
    %s124 = sld [smem:[#allocation3 + $0x87]]
    %s125 = scalar_lea.vmem %s1, %s124
    %v126 = vld [vmem:[%s125] sm:$0x1]
    %127 = vst.msk [vmem:[#allocation2 + $0x39] sm:$0x1] %vm66, %v126
    %v128 = vld [vmem:[#allocation2] sm:$0xff]
    %v129 = vld [vmem:[#allocation2 + $0x8] sm:$0xff]
    %v130 = vld [vmem:[#allocation2 + $0x10] sm:$0xff]
    %v131 = vld [vmem:[#allocation2 + $0x18] sm:$0xff]
    %v132 = vld [vmem:[#allocation2 + $0x20] sm:$0xff]
    %v133 = vld [vmem:[#allocation2 + $0x28] sm:$0xff]
    %v134 = vld [vmem:[#allocation2 + $0x30] sm:$0xff]
    %v135 = vld [vmem:[#allocation2 + $0x38] sm:$0xff]
    %v136 = vld [vmem:[%s4] sm:$0xff]
    %v137 = vld [vmem:[%s4 + $0x8] sm:$0xff]
    %v138 = vld [vmem:[%s4 + $0x10] sm:$0xff]
    %v139 = vld [vmem:[%s4 + $0x18] sm:$0xff]
    %v140 = vld [vmem:[%s6] sm:$0x1]
    %v142 = vlaneseq
    %v143 = vshrl.u32 %v142, 7
    %v144 = vsub.s32 0, %v143
    %v145 = vrot.slane %v140, %v144
    %v148 = vsel %vm54, %v128, 0
    %v151 = vsel %vm54, %v129, 0
    %v154 = vsel %vm54, %v130, 0
    %v157 = vsel %vm54, %v131, 0
    %v160 = vsel %vm54, %v132, 0
    %v163 = vsel %vm54, %v133, 0
    %v166 = vsel %vm54, %v134, 0
    %v169 = vsel %vm54, %v135, 0
    %171 = vmatprep.subr.mxu0 0.0
    %172 = vmatpush1.msra.mxu0 %v136
    %173 = vmatprep.subr.mxu0 0.0
    %174 = vmatpush1.msra.mxu0 %v137
    %175 = vmatprep.subr.mxu0 0.0
    %176 = vmatpush1.msra.mxu0 %v138
    %177 = vmatprep.subr.mxu0 0.0
    %178 = vmatpush1.msra.mxu0 %v139
    %179 = vmatprep.subr.mxu0 0.0
    %180 = vmatpush1.msra.mxu0 0.0
    %181 = vmatprep.subr.mxu0 0.0
    %182 = vmatpush1.msra.mxu0 0.0
    %183 = vmatprep.subr.mxu0 0.0
    %184 = vmatpush1.msra.mxu0 0.0
    %185 = vmatprep.subr.mxu0 0.0
    %186 = vmatpush1.msra.mxu0 0.0
    %187 = vmatprep.subr.mxu0 0.0
    %188 = vmatpush1.msra.mxu0 0.0
    %189 = vmatprep.subr.mxu0 0.0
    %190 = vmatpush1.msra.mxu0 0.0
    %191 = vmatprep.subr.mxu0 0.0
    %192 = vmatpush1.msra.mxu0 0.0
    %193 = vmatprep.subr.mxu0 0.0
    %194 = vmatpush1.msra.mxu0 0.0
    %195 = vmatprep.subr.mxu0 0.0
    %196 = vmatpush1.msra.mxu0 0.0
    %197 = vmatprep.subr.mxu0 0.0
    %198 = vmatpush1.msra.mxu0 0.0
    %199 = vmatprep.subr.mxu0 0.0
    %200 = vmatpush1.msra.mxu0 0.0
    %201 = vmatprep.subr.mxu0 0.0
    %202 = vmatpush1.msra.mxu0 0.0
    %203 = vmatprep.subr.mxu0 0.0
    %204 = vmatpush1.msra.mxu0 0.0
    %205 = vmatprep.subr.mxu0 0.0
    %206 = vmatpush1.msra.mxu0 0.0
    %207 = vmatprep.subr.mxu0 0.0
    %208 = vmatpush1.msra.mxu0 0.0
    %209 = vmatprep.subr.mxu0 0.0
    %210 = vmatpush1.msra.mxu0 0.0
    %211 = vmatprep.subr.mxu0 0.0
    %212 = vmatpush1.msra.mxu0 0.0
    %213 = vmatprep.subr.mxu0 0.0
    %214 = vmatpush1.msra.mxu0 0.0
    %215 = vmatprep.subr.mxu0 0.0
    %216 = vmatpush1.msra.mxu0 0.0
    %217 = vmatprep.subr.mxu0 0.0
    %218 = vmatpush1.msra.mxu0 0.0
    %219 = vmatprep.subr.mxu0 0.0
    %220 = vmatpush1.msra.mxu0 0.0
    %221 = vmatprep.subr.mxu0 0.0
    %222 = vmatpush1.msra.mxu0 0.0
    %223 = vmatprep.subr.mxu0 0.0
    %224 = vmatpush1.msra.mxu0 0.0
    %225 = vmatprep.subr.mxu0 0.0
    %226 = vmatpush1.msra.mxu0 0.0
    %227 = vmatprep.subr.mxu0 0.0
    %228 = vmatpush1.msra.mxu0 0.0
    %229 = vmatprep.subr.mxu0 0.0
    %230 = vmatpush1.msra.mxu0 0.0
    %231 = vmatprep.subr.mxu0 0.0
    %232 = vmatpush1.msra.mxu0 0.0
    %233 = vmatprep.subr.mxu0 0.0
    %234 = vmatpush1.msra.mxu0 0.0
    %235 = vmatprep.mubr.f32.mxu0 0.0
    %236 = vmatmul.mubr.f32.gmra.mrb[0].mxu0 %v148
    %v237 = vpop.f32.mrb[0].mxu0
    %v238 = vadd.f32 %v145, %v237
    %v239 = vpop.f32.mrb[0].mxu0
    %240 = vmatprep.mubr.f32.mxu0 0.0
    %241 = vmatmul.mubr.f32.gmra.mrb[0].mxu0 %v151
    %v242 = vpop.f32.mrb[0].mxu0
    %v243 = vadd.f32 %v145, %v242
    %v244 = vpop.f32.mrb[0].mxu0
    %245 = vmatprep.mubr.f32.mxu0 0.0
    %246 = vmatmul.mubr.f32.gmra.mrb[0].mxu0 %v154
    %v247 = vpop.f32.mrb[0].mxu0
    %v248 = vadd.f32 %v145, %v247
    %v249 = vpop.f32.mrb[0].mxu0
    %250 = vmatprep.mubr.f32.mxu0 0.0
    %251 = vmatmul.mubr.f32.gmra.mrb[0].mxu0 %v157
    %v252 = vpop.f32.mrb[0].mxu0
    %v253 = vadd.f32 %v145, %v252
    %v254 = vpop.f32.mrb[0].mxu0
    %255 = vmatprep.mubr.f32.mxu0 0.0
    %256 = vmatmul.mubr.f32.gmra.mrb[0].mxu0 %v160
    %v257 = vpop.f32.mrb[0].mxu0
    %v258 = vadd.f32 %v145, %v257
    %v259 = vpop.f32.mrb[0].mxu0
    %260 = vmatprep.mubr.f32.mxu0 0.0
    %261 = vmatmul.mubr.f32.gmra.mrb[0].mxu0 %v163
    %v262 = vpop.f32.mrb[0].mxu0
    %v263 = vadd.f32 %v145, %v262
    %v264 = vpop.f32.mrb[0].mxu0
    %265 = vmatprep.mubr.f32.mxu0 0.0
    %266 = vmatmul.mubr.f32.gmra.mrb[0].mxu0 %v166
    %v267 = vpop.f32.mrb[0].mxu0
    %v268 = vadd.f32 %v145, %v267
    %v269 = vpop.f32.mrb[0].mxu0
    %270 = vmatprep.mubr.f32.mxu0 0.0
    %271 = vmatmul.mubr.f32.gmra.mrb[0].mxu0 %v169
    %v272 = vpop.f32.mrb[0].mxu0
    %v273 = vadd.f32 %v145, %v272
    %v274 = vpop.f32.mrb[0].mxu0
    %275 = vdwg.mxu0
    %v276 = vld [vmem:[%s5] sm:$0xff]
    %v277 = vld [vmem:[%s5 + $0x8] sm:$0xff]
    %v278 = vld [vmem:[%s5 + $0x10] sm:$0xff]
    %v279 = vld [vmem:[%s5 + $0x18] sm:$0xff]
    %v280 = vld [vmem:[%s2] sm:$0xff]
    %v281 = vld [vmem:[%s3] sm:$0xff]
    %v283 = vsel %vm54, %v280, 0
    %285 = vmatprep.subr.mxu0 0.0
    %286 = vmatpush1.msra.mxu0 %v276
    %287 = vmatprep.subr.mxu0 0.0
    %288 = vmatpush1.msra.mxu0 %v277
    %289 = vmatprep.subr.mxu0 0.0
    %290 = vmatpush1.msra.mxu0 %v278
    %291 = vmatprep.subr.mxu0 0.0
    %292 = vmatpush1.msra.mxu0 %v279
    %293 = vmatprep.subr.mxu0 0.0
    %294 = vmatpush1.msra.mxu0 0.0
    %295 = vmatprep.subr.mxu0 0.0
    %296 = vmatpush1.msra.mxu0 0.0
    %297 = vmatprep.subr.mxu0 0.0
    %298 = vmatpush1.msra.mxu0 0.0
    %299 = vmatprep.subr.mxu0 0.0
    %300 = vmatpush1.msra.mxu0 0.0
    %301 = vmatprep.subr.mxu0 0.0
    %302 = vmatpush1.msra.mxu0 0.0
    %303 = vmatprep.subr.mxu0 0.0
    %304 = vmatpush1.msra.mxu0 0.0
    %305 = vmatprep.subr.mxu0 0.0
    %306 = vmatpush1.msra.mxu0 0.0
    %307 = vmatprep.subr.mxu0 0.0
    %308 = vmatpush1.msra.mxu0 0.0
    %309 = vmatprep.subr.mxu0 0.0
    %310 = vmatpush1.msra.mxu0 0.0
    %311 = vmatprep.subr.mxu0 0.0
    %312 = vmatpush1.msra.mxu0 0.0
    %313 = vmatprep.subr.mxu0 0.0
    %314 = vmatpush1.msra.mxu0 0.0
    %315 = vmatprep.subr.mxu0 0.0
    %316 = vmatpush1.msra.mxu0 0.0
    %317 = vmatprep.subr.mxu0 0.0
    %318 = vmatpush1.msra.mxu0 0.0
    %319 = vmatprep.subr.mxu0 0.0
    %320 = vmatpush1.msra.mxu0 0.0
    %321 = vmatprep.subr.mxu0 0.0
    %322 = vmatpush1.msra.mxu0 0.0
    %323 = vmatprep.subr.mxu0 0.0
    %324 = vmatpush1.msra.mxu0 0.0
    %325 = vmatprep.subr.mxu0 0.0
    %326 = vmatpush1.msra.mxu0 0.0
    %327 = vmatprep.subr.mxu0 0.0
    %328 = vmatpush1.msra.mxu0 0.0
    %329 = vmatprep.subr.mxu0 0.0
    %330 = vmatpush1.msra.mxu0 0.0
    %331 = vmatprep.subr.mxu0 0.0
    %332 = vmatpush1.msra.mxu0 0.0
    %333 = vmatprep.subr.mxu0 0.0
    %334 = vmatpush1.msra.mxu0 0.0
    %335 = vmatprep.subr.mxu0 0.0
    %336 = vmatpush1.msra.mxu0 0.0
    %337 = vmatprep.subr.mxu0 0.0
    %338 = vmatpush1.msra.mxu0 0.0
    %339 = vmatprep.subr.mxu0 0.0
    %340 = vmatpush1.msra.mxu0 0.0
    %341 = vmatprep.subr.mxu0 0.0
    %342 = vmatpush1.msra.mxu0 0.0
    %343 = vmatprep.subr.mxu0 0.0
    %344 = vmatpush1.msra.mxu0 0.0
    %345 = vmatprep.subr.mxu0 0.0
    %346 = vmatpush1.msra.mxu0 0.0
    %347 = vmatprep.subr.mxu0 0.0
    %348 = vmatpush1.msra.mxu0 0.0
    %349 = vmatprep.mubr.f32.mxu0 0.0
    %350 = vmatmul.mubr.f32.gmra.mrb[0].mxu0 %v283
    %v351 = vpop.f32.mrb[0].mxu0
    %v352 = vadd.f32 0.0, %v351
    %v353 = vpop.f32.mrb[0].mxu0
    %354 = vdwg.mxu0
    %v355 = vadd.f32 %v238, %v352
    %v356 = vsub.f32 0.0, %v355
    %v357 = vmul.f32 %v356, 1.442695
    %v358 = vpow.pop %v357
    %v359 = vadd.f32 %v358, 1.0
    %v360 = vrcp.pop %v359
    %v361 = vmul.f32 1.0, %v360
    %v362 = vtanh.pop %v355
    %364 = vrot.lane.b32.xlu0 %v281, 32
    %v365 = vpop.permute.xlu0 %364
    %v367 = vmul.f32 %v361, %v365
    %369 = vrot.lane.b32.xlu0 %v362, 64
    %v370 = vpop.permute.xlu0 %369
    %v372 = vmul.f32 %v361, %v370
    %374 = vrot.lane.b32.xlu0 %v372, 32
    %v375 = vpop.permute.xlu0 %374
    %v377 = vadd.f32 %v367, %v375
    %v378 = vtanh.pop %v377
    %380 = vrot.lane.b32.xlu0 %v378, 64
    %v381 = vpop.permute.xlu0 %380
    %v383 = vmul.f32 %v361, %v381
    %385 = vrot.lane.b32.xlu0 %v383, 32
    %v386 = vpop.permute.xlu0 %385
    %388 = vst.msk [vmem:[#allocation2] sm:$0xff] %vm54, %v386
    %v389 = vsel %vm54, %v386, 0
    %391 = vmatprep.subr.mxu0 0.0
    %392 = vmatpush1.msra.mxu0 %v276
    %393 = vmatprep.subr.mxu0 0.0
    %394 = vmatpush1.msra.mxu0 %v277
    %395 = vmatprep.subr.mxu0 0.0
    %396 = vmatpush1.msra.mxu0 %v278
    %397 = vmatprep.subr.mxu0 0.0
    %398 = vmatpush1.msra.mxu0 %v279
    %399 = vmatprep.subr.mxu0 0.0
    %400 = vmatpush1.msra.mxu0 0.0
    %401 = vmatprep.subr.mxu0 0.0
    %402 = vmatpush1.msra.mxu0 0.0
    %403 = vmatprep.subr.mxu0 0.0
    %404 = vmatpush1.msra.mxu0 0.0
    %405 = vmatprep.subr.mxu0 0.0
    %406 = vmatpush1.msra.mxu0 0.0
    %407 = vmatprep.subr.mxu0 0.0
    %408 = vmatpush1.msra.mxu0 0.0
    %409 = vmatprep.subr.mxu0 0.0
    %410 = vmatpush1.msra.mxu0 0.0
    %411 = vmatprep.subr.mxu0 0.0
    %412 = vmatpush1.msra.mxu0 0.0
    %413 = vmatprep.subr.mxu0 0.0
    %414 = vmatpush1.msra.mxu0 0.0
    %415 = vmatprep.subr.mxu0 0.0
    %416 = vmatpush1.msra.mxu0 0.0
    %417 = vmatprep.subr.mxu0 0.0
    %418 = vmatpush1.msra.mxu0 0.0
    %419 = vmatprep.subr.mxu0 0.0
    %420 = vmatpush1.msra.mxu0 0.0
    %421 = vmatprep.subr.mxu0 0.0
    %422 = vmatpush1.msra.mxu0 0.0
    %423 = vmatprep.subr.mxu0 0.0
    %424 = vmatpush1.msra.mxu0 0.0
    %425 = vmatprep.subr.mxu0 0.0
    %426 = vmatpush1.msra.mxu0 0.0
    %427 = vmatprep.subr.mxu0 0.0
    %428 = vmatpush1.msra.mxu0 0.0
    %429 = vmatprep.subr.mxu0 0.0
    %430 = vmatpush1.msra.mxu0 0.0
    %431 = vmatprep.subr.mxu0 0.0
    %432 = vmatpush1.msra.mxu0 0.0
    %433 = vmatprep.subr.mxu0 0.0
    %434 = vmatpush1.msra.mxu0 0.0
    %435 = vmatprep.subr.mxu0 0.0
    %436 = vmatpush1.msra.mxu0 0.0
    %437 = vmatprep.subr.mxu0 0.0
    %438 = vmatpush1.msra.mxu0 0.0
    %439 = vmatprep.subr.mxu0 0.0
    %440 = vmatpush1.msra.mxu0 0.0
    %441 = vmatprep.subr.mxu0 0.0
    %442 = vmatpush1.msra.mxu0 0.0
    %443 = vmatprep.subr.mxu0 0.0
    %444 = vmatpush1.msra.mxu0 0.0
    %445 = vmatprep.subr.mxu0 0.0
    %446 = vmatpush1.msra.mxu0 0.0
    %447 = vmatprep.subr.mxu0 0.0
    %448 = vmatpush1.msra.mxu0 0.0
    %449 = vmatprep.subr.mxu0 0.0
    %450 = vmatpush1.msra.mxu0 0.0
    %451 = vmatprep.subr.mxu0 0.0
    %452 = vmatpush1.msra.mxu0 0.0
    %453 = vmatprep.subr.mxu0 0.0
    %454 = vmatpush1.msra.mxu0 0.0
    %455 = vmatprep.mubr.f32.mxu0 0.0
    %456 = vmatmul.mubr.f32.gmra.mrb[0].mxu0 %v389
    %v457 = vpop.f32.mrb[0].mxu0
    %v458 = vadd.f32 0.0, %v457
    %v459 = vpop.f32.mrb[0].mxu0
    %460 = vdwg.mxu0
    %v461 = vadd.f32 %v243, %v458
    %v462 = vsub.f32 0.0, %v461
    %v463 = vmul.f32 %v462, 1.442695
    %v464 = vpow.pop %v463
    %v465 = vadd.f32 %v464, 1.0
    %v466 = vrcp.pop %v465
    %v467 = vmul.f32 1.0, %v466
    %v468 = vtanh.pop %v461
    %v469 = vmul.f32 %v467, %v377
    %471 = vrot.lane.b32.xlu0 %v468, 64
    %v472 = vpop.permute.xlu0 %471
    %v474 = vmul.f32 %v467, %v472
    %476 = vrot.lane.b32.xlu0 %v474, 32
    %v477 = vpop.permute.xlu0 %476
    %v479 = vadd.f32 %v469, %v477
    %v480 = vtanh.pop %v479
    %482 = vrot.lane.b32.xlu0 %v480, 64
    %v483 = vpop.permute.xlu0 %482
    %v485 = vmul.f32 %v467, %v483
    %487 = vrot.lane.b32.xlu0 %v485, 32
    %v488 = vpop.permute.xlu0 %487
    %490 = vst.msk [vmem:[#allocation2 + $0x8] sm:$0xff] %vm54, %v488
    %v491 = vsel %vm54, %v488, 0
    %493 = vmatprep.subr.mxu0 0.0
    %494 = vmatpush1.msra.mxu0 %v276
    %495 = vmatprep.subr.mxu0 0.0
    %496 = vmatpush1.msra.mxu0 %v277
    %497 = vmatprep.subr.mxu0 0.0
    %498 = vmatpush1.msra.mxu0 %v278
    %499 = vmatprep.subr.mxu0 0.0
    %500 = vmatpush1.msra.mxu0 %v279
    %501 = vmatprep.subr.mxu0 0.0
    %502 = vmatpush1.msra.mxu0 0.0
    %503 = vmatprep.subr.mxu0 0.0
    %504 = vmatpush1.msra.mxu0 0.0
    %505 = vmatprep.subr.mxu0 0.0
    %506 = vmatpush1.msra.mxu0 0.0
    %507 = vmatprep.subr.mxu0 0.0
    %508 = vmatpush1.msra.mxu0 0.0
    %509 = vmatprep.subr.mxu0 0.0
    %510 = vmatpush1.msra.mxu0 0.0
    %511 = vmatprep.subr.mxu0 0.0
    %512 = vmatpush1.msra.mxu0 0.0
    %513 = vmatprep.subr.mxu0 0.0
    %514 = vmatpush1.msra.mxu0 0.0
    %515 = vmatprep.subr.mxu0 0.0
    %516 = vmatpush1.msra.mxu0 0.0
    %517 = vmatprep.subr.mxu0 0.0
    %518 = vmatpush1.msra.mxu0 0.0
    %519 = vmatprep.subr.mxu0 0.0
    %520 = vmatpush1.msra.mxu0 0.0
    %521 = vmatprep.subr.mxu0 0.0
    %522 = vmatpush1.msra.mxu0 0.0
    %523 = vmatprep.subr.mxu0 0.0
    %524 = vmatpush1.msra.mxu0 0.0
    %525 = vmatprep.subr.mxu0 0.0
    %526 = vmatpush1.msra.mxu0 0.0
    %527 = vmatprep.subr.mxu0 0.0
    %528 = vmatpush1.msra.mxu0 0.0
    %529 = vmatprep.subr.mxu0 0.0
    %530 = vmatpush1.msra.mxu0 0.0
    %531 = vmatprep.subr.mxu0 0.0
    %532 = vmatpush1.msra.mxu0 0.0
    %533 = vmatprep.subr.mxu0 0.0
    %534 = vmatpush1.msra.mxu0 0.0
    %535 = vmatprep.subr.mxu0 0.0
    %536 = vmatpush1.msra.mxu0 0.0
    %537 = vmatprep.subr.mxu0 0.0
    %538 = vmatpush1.msra.mxu0 0.0
    %539 = vmatprep.subr.mxu0 0.0
    %540 = vmatpush1.msra.mxu0 0.0
    %541 = vmatprep.subr.mxu0 0.0
    %542 = vmatpush1.msra.mxu0 0.0
    %543 = vmatprep.subr.mxu0 0.0
    %544 = vmatpush1.msra.mxu0 0.0
    %545 = vmatprep.subr.mxu0 0.0
    %546 = vmatpush1.msra.mxu0 0.0
    %547 = vmatprep.subr.mxu0 0.0
    %548 = vmatpush1.msra.mxu0 0.0
    %549 = vmatprep.subr.mxu0 0.0
    %550 = vmatpush1.msra.mxu0 0.0
    %551 = vmatprep.subr.mxu0 0.0
    %552 = vmatpush1.msra.mxu0 0.0
    %553 = vmatprep.subr.mxu0 0.0
    %554 = vmatpush1.msra.mxu0 0.0
    %555 = vmatprep.subr.mxu0 0.0
    %556 = vmatpush1.msra.mxu0 0.0
    %557 = vmatprep.mubr.f32.mxu0 0.0
    %558 = vmatmul.mubr.f32.gmra.mrb[0].mxu0 %v491
    %v559 = vpop.f32.mrb[0].mxu0
    %v560 = vadd.f32 0.0, %v559
    %v561 = vpop.f32.mrb[0].mxu0
    %562 = vdwg.mxu0
    %v563 = vadd.f32 %v248, %v560
    %v564 = vsub.f32 0.0, %v563
    %v565 = vmul.f32 %v564, 1.442695
    %v566 = vpow.pop %v565
    %v567 = vadd.f32 %v566, 1.0
    %v568 = vrcp.pop %v567
    %v569 = vmul.f32 1.0, %v568
    %v570 = vtanh.pop %v563
    %v571 = vmul.f32 %v569, %v479
    %573 = vrot.lane.b32.xlu0 %v570, 64
    %v574 = vpop.permute.xlu0 %573
    %v576 = vmul.f32 %v569, %v574
    %578 = vrot.lane.b32.xlu0 %v576, 32
    %v579 = vpop.permute.xlu0 %578
    %v581 = vadd.f32 %v571, %v579
    %v582 = vtanh.pop %v581
    %584 = vrot.lane.b32.xlu0 %v582, 64
    %v585 = vpop.permute.xlu0 %584
    %v587 = vmul.f32 %v569, %v585
    %589 = vrot.lane.b32.xlu0 %v587, 32
    %v590 = vpop.permute.xlu0 %589
    %592 = vst.msk [vmem:[#allocation2 + $0x10] sm:$0xff] %vm54, %v590
    %v593 = vsel %vm54, %v590, 0
    %595 = vmatprep.subr.mxu0 0.0
    %596 = vmatpush1.msra.mxu0 %v276
    %597 = vmatprep.subr.mxu0 0.0
    %598 = vmatpush1.msra.mxu0 %v277
    %599 = vmatprep.subr.mxu0 0.0
    %600 = vmatpush1.msra.mxu0 %v278
    %601 = vmatprep.subr.mxu0 0.0
    %602 = vmatpush1.msra.mxu0 %v279
    %603 = vmatprep.subr.mxu0 0.0
    %604 = vmatpush1.msra.mxu0 0.0
    %605 = vmatprep.subr.mxu0 0.0
    %606 = vmatpush1.msra.mxu0 0.0
    %607 = vmatprep.subr.mxu0 0.0
    %608 = vmatpush1.msra.mxu0 0.0
    %609 = vmatprep.subr.mxu0 0.0
    %610 = vmatpush1.msra.mxu0 0.0
    %611 = vmatprep.subr.mxu0 0.0
    %612 = vmatpush1.msra.mxu0 0.0
    %613 = vmatprep.subr.mxu0 0.0
    %614 = vmatpush1.msra.mxu0 0.0
    %615 = vmatprep.subr.mxu0 0.0
    %616 = vmatpush1.msra.mxu0 0.0
    %617 = vmatprep.subr.mxu0 0.0
    %618 = vmatpush1.msra.mxu0 0.0
    %619 = vmatprep.subr.mxu0 0.0
    %620 = vmatpush1.msra.mxu0 0.0
    %621 = vmatprep.subr.mxu0 0.0
    %622 = vmatpush1.msra.mxu0 0.0
    %623 = vmatprep.subr.mxu0 0.0
    %624 = vmatpush1.msra.mxu0 0.0
    %625 = vmatprep.subr.mxu0 0.0
    %626 = vmatpush1.msra.mxu0 0.0
    %627 = vmatprep.subr.mxu0 0.0
    %628 = vmatpush1.msra.mxu0 0.0
    %629 = vmatprep.subr.mxu0 0.0
    %630 = vmatpush1.msra.mxu0 0.0
    %631 = vmatprep.subr.mxu0 0.0
    %632 = vmatpush1.msra.mxu0 0.0
    %633 = vmatprep.subr.mxu0 0.0
    %634 = vmatpush1.msra.mxu0 0.0
    %635 = vmatprep.subr.mxu0 0.0
    %636 = vmatpush1.msra.mxu0 0.0
    %637 = vmatprep.subr.mxu0 0.0
    %638 = vmatpush1.msra.mxu0 0.0
    %639 = vmatprep.subr.mxu0 0.0
    %640 = vmatpush1.msra.mxu0 0.0
    %641 = vmatprep.subr.mxu0 0.0
    %642 = vmatpush1.msra.mxu0 0.0
    %643 = vmatprep.subr.mxu0 0.0
    %644 = vmatpush1.msra.mxu0 0.0
    %645 = vmatprep.subr.mxu0 0.0
    %646 = vmatpush1.msra.mxu0 0.0
    %647 = vmatprep.subr.mxu0 0.0
    %648 = vmatpush1.msra.mxu0 0.0
    %649 = vmatprep.subr.mxu0 0.0
    %650 = vmatpush1.msra.mxu0 0.0
    %651 = vmatprep.subr.mxu0 0.0
    %652 = vmatpush1.msra.mxu0 0.0
    %653 = vmatprep.subr.mxu0 0.0
    %654 = vmatpush1.msra.mxu0 0.0
    %655 = vmatprep.subr.mxu0 0.0
    %656 = vmatpush1.msra.mxu0 0.0
    %657 = vmatprep.subr.mxu0 0.0
    %658 = vmatpush1.msra.mxu0 0.0
    %659 = vmatprep.mubr.f32.mxu0 0.0
    %660 = vmatmul.mubr.f32.gmra.mrb[0].mxu0 %v593
    %v661 = vpop.f32.mrb[0].mxu0
    %v662 = vadd.f32 0.0, %v661
    %v663 = vpop.f32.mrb[0].mxu0
    %664 = vdwg.mxu0
    %v665 = vadd.f32 %v253, %v662
    %v666 = vsub.f32 0.0, %v665
    %v667 = vmul.f32 %v666, 1.442695
    %v668 = vpow.pop %v667
    %v669 = vadd.f32 %v668, 1.0
    %v670 = vrcp.pop %v669
    %v671 = vmul.f32 1.0, %v670
    %v672 = vtanh.pop %v665
    %v673 = vmul.f32 %v671, %v581
    %675 = vrot.lane.b32.xlu0 %v672, 64
    %v676 = vpop.permute.xlu0 %675
    %v678 = vmul.f32 %v671, %v676
    %680 = vrot.lane.b32.xlu0 %v678, 32
    %v681 = vpop.permute.xlu0 %680
    %v683 = vadd.f32 %v673, %v681
    %v684 = vtanh.pop %v683
    %686 = vrot.lane.b32.xlu0 %v684, 64
    %v687 = vpop.permute.xlu0 %686
    %v689 = vmul.f32 %v671, %v687
    %691 = vrot.lane.b32.xlu0 %v689, 32
    %v692 = vpop.permute.xlu0 %691
    %694 = vst.msk [vmem:[#allocation2 + $0x18] sm:$0xff] %vm54, %v692
    %v695 = vsel %vm54, %v692, 0
    %697 = vmatprep.subr.mxu0 0.0
    %698 = vmatpush1.msra.mxu0 %v276
    %699 = vmatprep.subr.mxu0 0.0
    %700 = vmatpush1.msra.mxu0 %v277
    %701 = vmatprep.subr.mxu0 0.0
    %702 = vmatpush1.msra.mxu0 %v278
    %703 = vmatprep.subr.mxu0 0.0
    %704 = vmatpush1.msra.mxu0 %v279
    %705 = vmatprep.subr.mxu0 0.0
    %706 = vmatpush1.msra.mxu0 0.0
    %707 = vmatprep.subr.mxu0 0.0
    %708 = vmatpush1.msra.mxu0 0.0
    %709 = vmatprep.subr.mxu0 0.0
    %710 = vmatpush1.msra.mxu0 0.0
    %711 = vmatprep.subr.mxu0 0.0
    %712 = vmatpush1.msra.mxu0 0.0
    %713 = vmatprep.subr.mxu0 0.0
    %714 = vmatpush1.msra.mxu0 0.0
    %715 = vmatprep.subr.mxu0 0.0
    %716 = vmatpush1.msra.mxu0 0.0
    %717 = vmatprep.subr.mxu0 0.0
    %718 = vmatpush1.msra.mxu0 0.0
    %719 = vmatprep.subr.mxu0 0.0
    %720 = vmatpush1.msra.mxu0 0.0
    %721 = vmatprep.subr.mxu0 0.0
    %722 = vmatpush1.msra.mxu0 0.0
    %723 = vmatprep.subr.mxu0 0.0
    %724 = vmatpush1.msra.mxu0 0.0
    %725 = vmatprep.subr.mxu0 0.0
    %726 = vmatpush1.msra.mxu0 0.0
    %727 = vmatprep.subr.mxu0 0.0
    %728 = vmatpush1.msra.mxu0 0.0
    %729 = vmatprep.subr.mxu0 0.0
    %730 = vmatpush1.msra.mxu0 0.0
    %731 = vmatprep.subr.mxu0 0.0
    %732 = vmatpush1.msra.mxu0 0.0
    %733 = vmatprep.subr.mxu0 0.0
    %734 = vmatpush1.msra.mxu0 0.0
    %735 = vmatprep.subr.mxu0 0.0
    %736 = vmatpush1.msra.mxu0 0.0
    %737 = vmatprep.subr.mxu0 0.0
    %738 = vmatpush1.msra.mxu0 0.0
    %739 = vmatprep.subr.mxu0 0.0
    %740 = vmatpush1.msra.mxu0 0.0
    %741 = vmatprep.subr.mxu0 0.0
    %742 = vmatpush1.msra.mxu0 0.0
    %743 = vmatprep.subr.mxu0 0.0
    %744 = vmatpush1.msra.mxu0 0.0
    %745 = vmatprep.subr.mxu0 0.0
    %746 = vmatpush1.msra.mxu0 0.0
    %747 = vmatprep.subr.mxu0 0.0
    %748 = vmatpush1.msra.mxu0 0.0
    %749 = vmatprep.subr.mxu0 0.0
    %750 = vmatpush1.msra.mxu0 0.0
    %751 = vmatprep.subr.mxu0 0.0
    %752 = vmatpush1.msra.mxu0 0.0
    %753 = vmatprep.subr.mxu0 0.0
    %754 = vmatpush1.msra.mxu0 0.0
    %755 = vmatprep.subr.mxu0 0.0
    %756 = vmatpush1.msra.mxu0 0.0
    %757 = vmatprep.subr.mxu0 0.0
    %758 = vmatpush1.msra.mxu0 0.0
    %759 = vmatprep.subr.mxu0 0.0
    %760 = vmatpush1.msra.mxu0 0.0
    %761 = vmatprep.mubr.f32.mxu0 0.0
    %762 = vmatmul.mubr.f32.gmra.mrb[0].mxu0 %v695
    %v763 = vpop.f32.mrb[0].mxu0
    %v764 = vadd.f32 0.0, %v763
    %v765 = vpop.f32.mrb[0].mxu0
    %766 = vdwg.mxu0
    %v767 = vadd.f32 %v258, %v764
    %v768 = vsub.f32 0.0, %v767
    %v769 = vmul.f32 %v768, 1.442695
    %v770 = vpow.pop %v769
    %v771 = vadd.f32 %v770, 1.0
    %v772 = vrcp.pop %v771
    %v773 = vmul.f32 1.0, %v772
    %v774 = vtanh.pop %v767
    %v775 = vmul.f32 %v773, %v683
    %777 = vrot.lane.b32.xlu0 %v774, 64
    %v778 = vpop.permute.xlu0 %777
    %v780 = vmul.f32 %v773, %v778
    %782 = vrot.lane.b32.xlu0 %v780, 32
    %v783 = vpop.permute.xlu0 %782
    %v785 = vadd.f32 %v775, %v783
    %v786 = vtanh.pop %v785
    %788 = vrot.lane.b32.xlu0 %v786, 64
    %v789 = vpop.permute.xlu0 %788
    %v791 = vmul.f32 %v773, %v789
    %793 = vrot.lane.b32.xlu0 %v791, 32
    %v794 = vpop.permute.xlu0 %793
    %796 = vst.msk [vmem:[#allocation2 + $0x20] sm:$0xff] %vm54, %v794
    %v797 = vsel %vm54, %v794, 0
    %799 = vmatprep.subr.mxu0 0.0
    %800 = vmatpush1.msra.mxu0 %v276
    %801 = vmatprep.subr.mxu0 0.0
    %802 = vmatpush1.msra.mxu0 %v277
    %803 = vmatprep.subr.mxu0 0.0
    %804 = vmatpush1.msra.mxu0 %v278
    %805 = vmatprep.subr.mxu0 0.0
    %806 = vmatpush1.msra.mxu0 %v279
    %807 = vmatprep.subr.mxu0 0.0
    %808 = vmatpush1.msra.mxu0 0.0
    %809 = vmatprep.subr.mxu0 0.0
    %810 = vmatpush1.msra.mxu0 0.0
    %811 = vmatprep.subr.mxu0 0.0
    %812 = vmatpush1.msra.mxu0 0.0
    %813 = vmatprep.subr.mxu0 0.0
    %814 = vmatpush1.msra.mxu0 0.0
    %815 = vmatprep.subr.mxu0 0.0
    %816 = vmatpush1.msra.mxu0 0.0
    %817 = vmatprep.subr.mxu0 0.0
    %818 = vmatpush1.msra.mxu0 0.0
    %819 = vmatprep.subr.mxu0 0.0
    %820 = vmatpush1.msra.mxu0 0.0
    %821 = vmatprep.subr.mxu0 0.0
    %822 = vmatpush1.msra.mxu0 0.0
    %823 = vmatprep.subr.mxu0 0.0
    %824 = vmatpush1.msra.mxu0 0.0
    %825 = vmatprep.subr.mxu0 0.0
    %826 = vmatpush1.msra.mxu0 0.0
    %827 = vmatprep.subr.mxu0 0.0
    %828 = vmatpush1.msra.mxu0 0.0
    %829 = vmatprep.subr.mxu0 0.0
    %830 = vmatpush1.msra.mxu0 0.0
    %831 = vmatprep.subr.mxu0 0.0
    %832 = vmatpush1.msra.mxu0 0.0
    %833 = vmatprep.subr.mxu0 0.0
    %834 = vmatpush1.msra.mxu0 0.0
    %835 = vmatprep.subr.mxu0 0.0
    %836 = vmatpush1.msra.mxu0 0.0
    %837 = vmatprep.subr.mxu0 0.0
    %838 = vmatpush1.msra.mxu0 0.0
    %839 = vmatprep.subr.mxu0 0.0
    %840 = vmatpush1.msra.mxu0 0.0
    %841 = vmatprep.subr.mxu0 0.0
    %842 = vmatpush1.msra.mxu0 0.0
    %843 = vmatprep.subr.mxu0 0.0
    %844 = vmatpush1.msra.mxu0 0.0
    %845 = vmatprep.subr.mxu0 0.0
    %846 = vmatpush1.msra.mxu0 0.0
    %847 = vmatprep.subr.mxu0 0.0
    %848 = vmatpush1.msra.mxu0 0.0
    %849 = vmatprep.subr.mxu0 0.0
    %850 = vmatpush1.msra.mxu0 0.0
    %851 = vmatprep.subr.mxu0 0.0
    %852 = vmatpush1.msra.mxu0 0.0
    %853 = vmatprep.subr.mxu0 0.0
    %854 = vmatpush1.msra.mxu0 0.0
    %855 = vmatprep.subr.mxu0 0.0
    %856 = vmatpush1.msra.mxu0 0.0
    %857 = vmatprep.subr.mxu0 0.0
    %858 = vmatpush1.msra.mxu0 0.0
    %859 = vmatprep.subr.mxu0 0.0
    %860 = vmatpush1.msra.mxu0 0.0
    %861 = vmatprep.subr.mxu0 0.0
    %862 = vmatpush1.msra.mxu0 0.0
    %863 = vmatprep.mubr.f32.mxu0 0.0
    %864 = vmatmul.mubr.f32.gmra.mrb[0].mxu0 %v797
    %v865 = vpop.f32.mrb[0].mxu0
    %v866 = vadd.f32 0.0, %v865
    %v867 = vpop.f32.mrb[0].mxu0
    %868 = vdwg.mxu0
    %v869 = vadd.f32 %v263, %v866
    %v870 = vsub.f32 0.0, %v869
    %v871 = vmul.f32 %v870, 1.442695
    %v872 = vpow.pop %v871
    %v873 = vadd.f32 %v872, 1.0
    %v874 = vrcp.pop %v873
    %v875 = vmul.f32 1.0, %v874
    %v876 = vtanh.pop %v869
    %v877 = vmul.f32 %v875, %v785
    %879 = vrot.lane.b32.xlu0 %v876, 64
    %v880 = vpop.permute.xlu0 %879
    %v882 = vmul.f32 %v875, %v880
    %884 = vrot.lane.b32.xlu0 %v882, 32
    %v885 = vpop.permute.xlu0 %884
    %v887 = vadd.f32 %v877, %v885
    %v888 = vtanh.pop %v887
    %890 = vrot.lane.b32.xlu0 %v888, 64
    %v891 = vpop.permute.xlu0 %890
    %v893 = vmul.f32 %v875, %v891
    %895 = vrot.lane.b32.xlu0 %v893, 32
    %v896 = vpop.permute.xlu0 %895
    %898 = vst.msk [vmem:[#allocation2 + $0x28] sm:$0xff] %vm54, %v896
    %v899 = vsel %vm54, %v896, 0
    %901 = vmatprep.subr.mxu0 0.0
    %902 = vmatpush1.msra.mxu0 %v276
    %903 = vmatprep.subr.mxu0 0.0
    %904 = vmatpush1.msra.mxu0 %v277
    %905 = vmatprep.subr.mxu0 0.0
    %906 = vmatpush1.msra.mxu0 %v278
    %907 = vmatprep.subr.mxu0 0.0
    %908 = vmatpush1.msra.mxu0 %v279
    %909 = vmatprep.subr.mxu0 0.0
    %910 = vmatpush1.msra.mxu0 0.0
    %911 = vmatprep.subr.mxu0 0.0
    %912 = vmatpush1.msra.mxu0 0.0
    %913 = vmatprep.subr.mxu0 0.0
    %914 = vmatpush1.msra.mxu0 0.0
    %915 = vmatprep.subr.mxu0 0.0
    %916 = vmatpush1.msra.mxu0 0.0
    %917 = vmatprep.subr.mxu0 0.0
    %918 = vmatpush1.msra.mxu0 0.0
    %919 = vmatprep.subr.mxu0 0.0
    %920 = vmatpush1.msra.mxu0 0.0
    %921 = vmatprep.subr.mxu0 0.0
    %922 = vmatpush1.msra.mxu0 0.0
    %923 = vmatprep.subr.mxu0 0.0
    %924 = vmatpush1.msra.mxu0 0.0
    %925 = vmatprep.subr.mxu0 0.0
    %926 = vmatpush1.msra.mxu0 0.0
    %927 = vmatprep.subr.mxu0 0.0
    %928 = vmatpush1.msra.mxu0 0.0
    %929 = vmatprep.subr.mxu0 0.0
    %930 = vmatpush1.msra.mxu0 0.0
    %931 = vmatprep.subr.mxu0 0.0
    %932 = vmatpush1.msra.mxu0 0.0
    %933 = vmatprep.subr.mxu0 0.0
    %934 = vmatpush1.msra.mxu0 0.0
    %935 = vmatprep.subr.mxu0 0.0
    %936 = vmatpush1.msra.mxu0 0.0
    %937 = vmatprep.subr.mxu0 0.0
    %938 = vmatpush1.msra.mxu0 0.0
    %939 = vmatprep.subr.mxu0 0.0
    %940 = vmatpush1.msra.mxu0 0.0
    %941 = vmatprep.subr.mxu0 0.0
    %942 = vmatpush1.msra.mxu0 0.0
    %943 = vmatprep.subr.mxu0 0.0
    %944 = vmatpush1.msra.mxu0 0.0
    %945 = vmatprep.subr.mxu0 0.0
    %946 = vmatpush1.msra.mxu0 0.0
    %947 = vmatprep.subr.mxu0 0.0
    %948 = vmatpush1.msra.mxu0 0.0
    %949 = vmatprep.subr.mxu0 0.0
    %950 = vmatpush1.msra.mxu0 0.0
    %951 = vmatprep.subr.mxu0 0.0
    %952 = vmatpush1.msra.mxu0 0.0
    %953 = vmatprep.subr.mxu0 0.0
    %954 = vmatpush1.msra.mxu0 0.0
    %955 = vmatprep.subr.mxu0 0.0
    %956 = vmatpush1.msra.mxu0 0.0
    %957 = vmatprep.subr.mxu0 0.0
    %958 = vmatpush1.msra.mxu0 0.0
    %959 = vmatprep.subr.mxu0 0.0
    %960 = vmatpush1.msra.mxu0 0.0
    %961 = vmatprep.subr.mxu0 0.0
    %962 = vmatpush1.msra.mxu0 0.0
    %963 = vmatprep.subr.mxu0 0.0
    %964 = vmatpush1.msra.mxu0 0.0
    %965 = vmatprep.mubr.f32.mxu0 0.0
    %966 = vmatmul.mubr.f32.gmra.mrb[0].mxu0 %v899
    %v967 = vpop.f32.mrb[0].mxu0
    %v968 = vadd.f32 0.0, %v967
    %v969 = vpop.f32.mrb[0].mxu0
    %970 = vdwg.mxu0
    %v971 = vadd.f32 %v268, %v968
    %v972 = vsub.f32 0.0, %v971
    %v973 = vmul.f32 %v972, 1.442695
    %v974 = vpow.pop %v973
    %v975 = vadd.f32 %v974, 1.0
    %v976 = vrcp.pop %v975
    %v977 = vmul.f32 1.0, %v976
    %v978 = vtanh.pop %v971
    %v979 = vmul.f32 %v977, %v887
    %981 = vrot.lane.b32.xlu0 %v978, 64
    %v982 = vpop.permute.xlu0 %981
    %v984 = vmul.f32 %v977, %v982
    %986 = vrot.lane.b32.xlu0 %v984, 32
    %v987 = vpop.permute.xlu0 %986
    %v989 = vadd.f32 %v979, %v987
    %v990 = vtanh.pop %v989
    %992 = vrot.lane.b32.xlu0 %v990, 64
    %v993 = vpop.permute.xlu0 %992
    %v995 = vmul.f32 %v977, %v993
    %997 = vrot.lane.b32.xlu0 %v995, 32
    %v998 = vpop.permute.xlu0 %997
    %1000 = vst.msk [vmem:[#allocation2 + $0x30] sm:$0xff] %vm54, %v998
    %v1001 = vsel %vm54, %v998, 0
    %1003 = vmatprep.subr.mxu0 0.0
    %1004 = vmatpush1.msra.mxu0 %v276
    %1005 = vmatprep.subr.mxu0 0.0
    %1006 = vmatpush1.msra.mxu0 %v277
    %1007 = vmatprep.subr.mxu0 0.0
    %1008 = vmatpush1.msra.mxu0 %v278
    %1009 = vmatprep.subr.mxu0 0.0
    %1010 = vmatpush1.msra.mxu0 %v279
    %1011 = vmatprep.subr.mxu0 0.0
    %1012 = vmatpush1.msra.mxu0 0.0
    %1013 = vmatprep.subr.mxu0 0.0
    %1014 = vmatpush1.msra.mxu0 0.0
    %1015 = vmatprep.subr.mxu0 0.0
    %1016 = vmatpush1.msra.mxu0 0.0
    %1017 = vmatprep.subr.mxu0 0.0
    %1018 = vmatpush1.msra.mxu0 0.0
    %1019 = vmatprep.subr.mxu0 0.0
    %1020 = vmatpush1.msra.mxu0 0.0
    %1021 = vmatprep.subr.mxu0 0.0
    %1022 = vmatpush1.msra.mxu0 0.0
    %1023 = vmatprep.subr.mxu0 0.0
    %1024 = vmatpush1.msra.mxu0 0.0
    %1025 = vmatprep.subr.mxu0 0.0
    %1026 = vmatpush1.msra.mxu0 0.0
    %1027 = vmatprep.subr.mxu0 0.0
    %1028 = vmatpush1.msra.mxu0 0.0
    %1029 = vmatprep.subr.mxu0 0.0
    %1030 = vmatpush1.msra.mxu0 0.0
    %1031 = vmatprep.subr.mxu0 0.0
    %1032 = vmatpush1.msra.mxu0 0.0
    %1033 = vmatprep.subr.mxu0 0.0
    %1034 = vmatpush1.msra.mxu0 0.0
    %1035 = vmatprep.subr.mxu0 0.0
    %1036 = vmatpush1.msra.mxu0 0.0
    %1037 = vmatprep.subr.mxu0 0.0
    %1038 = vmatpush1.msra.mxu0 0.0
    %1039 = vmatprep.subr.mxu0 0.0
    %1040 = vmatpush1.msra.mxu0 0.0
    %1041 = vmatprep.subr.mxu0 0.0
    %1042 = vmatpush1.msra.mxu0 0.0
    %1043 = vmatprep.subr.mxu0 0.0
    %1044 = vmatpush1.msra.mxu0 0.0
    %1045 = vmatprep.subr.mxu0 0.0
    %1046 = vmatpush1.msra.mxu0 0.0
    %1047 = vmatprep.subr.mxu0 0.0
    %1048 = vmatpush1.msra.mxu0 0.0
    %1049 = vmatprep.subr.mxu0 0.0
    %1050 = vmatpush1.msra.mxu0 0.0
    %1051 = vmatprep.subr.mxu0 0.0
    %1052 = vmatpush1.msra.mxu0 0.0
    %1053 = vmatprep.subr.mxu0 0.0
    %1054 = vmatpush1.msra.mxu0 0.0
    %1055 = vmatprep.subr.mxu0 0.0
    %1056 = vmatpush1.msra.mxu0 0.0
    %1057 = vmatprep.subr.mxu0 0.0
    %1058 = vmatpush1.msra.mxu0 0.0
    %1059 = vmatprep.subr.mxu0 0.0
    %1060 = vmatpush1.msra.mxu0 0.0
    %1061 = vmatprep.subr.mxu0 0.0
    %1062 = vmatpush1.msra.mxu0 0.0
    %1063 = vmatprep.subr.mxu0 0.0
    %1064 = vmatpush1.msra.mxu0 0.0
    %1065 = vmatprep.subr.mxu0 0.0
    %1066 = vmatpush1.msra.mxu0 0.0
    %1067 = vmatprep.mubr.f32.mxu0 0.0
    %1068 = vmatmul.mubr.f32.gmra.mrb[0].mxu0 %v1001
    %v1069 = vpop.f32.mrb[0].mxu0
    %v1070 = vadd.f32 0.0, %v1069
    %v1071 = vpop.f32.mrb[0].mxu0
    %1072 = vdwg.mxu0
    %v1073 = vadd.f32 %v273, %v1070
    %v1074 = vsub.f32 0.0, %v1073
    %v1075 = vmul.f32 %v1074, 1.442695
    %v1076 = vpow.pop %v1075
    %v1077 = vadd.f32 %v1076, 1.0
    %v1078 = vrcp.pop %v1077
    %v1079 = vmul.f32 1.0, %v1078
    %v1080 = vtanh.pop %v1073
    %v1081 = vmul.f32 %v1079, %v989
    %1083 = vrot.lane.b32.xlu0 %v1080, 64
    %v1084 = vpop.permute.xlu0 %1083
    %v1086 = vmul.f32 %v1079, %v1084
    %1088 = vrot.lane.b32.xlu0 %v1086, 32
    %v1089 = vpop.permute.xlu0 %1088
    %v1091 = vadd.f32 %v1081, %v1089
    %v1092 = vtanh.pop %v1091
    %1094 = vrot.lane.b32.xlu0 %v1092, 64
    %v1095 = vpop.permute.xlu0 %1094
    %v1097 = vmul.f32 %v1079, %v1095
    %1099 = vrot.lane.b32.xlu0 %v1097, 32
    %v1100 = vpop.permute.xlu0 %1099
    %1102 = vst.msk [vmem:[#allocation2 + $0x38] sm:$0xff] %vm54, %v1100
    %1103 = vst.msk [vmem:[%s12] sm:$0xff] %vm54, %v1100
    %1105 = vrot.lane.b32.xlu0 %v1091, 96
    %v1106 = vpop.permute.xlu0 %1105
    %1108 = vst.msk [vmem:[%s13] sm:$0xff] %vm54, %v1106
    %v1109 = vld [vmem:[#allocation2] sm:$0xff]
    %v1110 = vld [vmem:[#allocation2 + $0x8] sm:$0xff]
    %v1111 = vld [vmem:[#allocation2 + $0x10] sm:$0xff]
    %v1112 = vld [vmem:[#allocation2 + $0x18] sm:$0xff]
    %v1113 = vld [vmem:[#allocation2 + $0x20] sm:$0xff]
    %v1114 = vld [vmem:[#allocation2 + $0x28] sm:$0xff]
    %v1115 = vld [vmem:[#allocation2 + $0x30] sm:$0xff]
    %v1116 = vld [vmem:[#allocation2 + $0x38] sm:$0xff]
    %s1117 = scalar_lea.vmem %s4, 32
    %v1118 = vld [vmem:[%s1117] sm:$0xff]
    %v1119 = vld [vmem:[%s1117 + $0x8] sm:$0xff]
    %v1120 = vld [vmem:[%s1117 + $0x10] sm:$0xff]
    %v1121 = vld [vmem:[%s1117 + $0x18] sm:$0xff]
    %s1122 = scalar_lea.vmem %s6, 1
    %v1123 = vld [vmem:[%s1122] sm:$0x1]
    %v1125 = vlaneseq
    %v1126 = vshrl.u32 %v1125, 7
    %v1127 = vsub.s32 0, %v1126
    %v1128 = vrot.slane %v1123, %v1127
    %v1131 = vsel %vm54, %v1109, 0
    %v1134 = vsel %vm54, %v1110, 0
    %v1137 = vsel %vm54, %v1111, 0
    %v1140 = vsel %vm54, %v1112, 0
    %v1143 = vsel %vm54, %v1113, 0
    %v1146 = vsel %vm54, %v1114, 0
    %v1149 = vsel %vm54, %v1115, 0
    %v1152 = vsel %vm54, %v1116, 0
    %1154 = vmatprep.subr.mxu0 0.0
    %1155 = vmatpush1.msra.mxu0 %v1118
    %1156 = vmatprep.subr.mxu0 0.0
    %1157 = vmatpush1.msra.mxu0 %v1119
    %1158 = vmatprep.subr.mxu0 0.0
    %1159 = vmatpush1.msra.mxu0 %v1120
    %1160 = vmatprep.subr.mxu0 0.0
    %1161 = vmatpush1.msra.mxu0 %v1121
    %1162 = vmatprep.subr.mxu0 0.0
    %1163 = vmatpush1.msra.mxu0 0.0
    %1164 = vmatprep.subr.mxu0 0.0
    %1165 = vmatpush1.msra.mxu0 0.0
    %1166 = vmatprep.subr.mxu0 0.0
    %1167 = vmatpush1.msra.mxu0 0.0
    %1168 = vmatprep.subr.mxu0 0.0
    %1169 = vmatpush1.msra.mxu0 0.0
    %1170 = vmatprep.subr.mxu0 0.0
    %1171 = vmatpush1.msra.mxu0 0.0
    %1172 = vmatprep.subr.mxu0 0.0
    %1173 = vmatpush1.msra.mxu0 0.0
    %1174 = vmatprep.subr.mxu0 0.0
    %1175 = vmatpush1.msra.mxu0 0.0
    %1176 = vmatprep.subr.mxu0 0.0
    %1177 = vmatpush1.msra.mxu0 0.0
    %1178 = vmatprep.subr.mxu0 0.0
    %1179 = vmatpush1.msra.mxu0 0.0
    %1180 = vmatprep.subr.mxu0 0.0
    %1181 = vmatpush1.msra.mxu0 0.0
    %1182 = vmatprep.subr.mxu0 0.0
    %1183 = vmatpush1.msra.mxu0 0.0
    %1184 = vmatprep.subr.mxu0 0.0
    %1185 = vmatpush1.msra.mxu0 0.0
    %1186 = vmatprep.subr.mxu0 0.0
    %1187 = vmatpush1.msra.mxu0 0.0
    %1188 = vmatprep.subr.mxu0 0.0
    %1189 = vmatpush1.msra.mxu0 0.0
    %1190 = vmatprep.subr.mxu0 0.0
    %1191 = vmatpush1.msra.mxu0 0.0
    %1192 = vmatprep.subr.mxu0 0.0
    %1193 = vmatpush1.msra.mxu0 0.0
    %1194 = vmatprep.subr.mxu0 0.0
    %1195 = vmatpush1.msra.mxu0 0.0
    %1196 = vmatprep.subr.mxu0 0.0
    %1197 = vmatpush1.msra.mxu0 0.0
    %1198 = vmatprep.subr.mxu0 0.0
    %1199 = vmatpush1.msra.mxu0 0.0
    %1200 = vmatprep.subr.mxu0 0.0
    %1201 = vmatpush1.msra.mxu0 0.0
    %1202 = vmatprep.subr.mxu0 0.0
    %1203 = vmatpush1.msra.mxu0 0.0
    %1204 = vmatprep.subr.mxu0 0.0
    %1205 = vmatpush1.msra.mxu0 0.0
    %1206 = vmatprep.subr.mxu0 0.0
    %1207 = vmatpush1.msra.mxu0 0.0
    %1208 = vmatprep.subr.mxu0 0.0
    %1209 = vmatpush1.msra.mxu0 0.0
    %1210 = vmatprep.subr.mxu0 0.0
    %1211 = vmatpush1.msra.mxu0 0.0
    %1212 = vmatprep.subr.mxu0 0.0
    %1213 = vmatpush1.msra.mxu0 0.0
    %1214 = vmatprep.subr.mxu0 0.0
    %1215 = vmatpush1.msra.mxu0 0.0
    %1216 = vmatprep.subr.mxu0 0.0
    %1217 = vmatpush1.msra.mxu0 0.0
    %1218 = vmatprep.mubr.f32.mxu0 0.0
    %1219 = vmatmul.mubr.f32.gmra.mrb[0].mxu0 %v1131
    %v1220 = vpop.f32.mrb[0].mxu0
    %v1221 = vadd.f32 %v1128, %v1220
    %v1222 = vpop.f32.mrb[0].mxu0
    %1223 = vmatprep.mubr.f32.mxu0 0.0
    %1224 = vmatmul.mubr.f32.gmra.mrb[0].mxu0 %v1134
    %v1225 = vpop.f32.mrb[0].mxu0
    %v1226 = vadd.f32 %v1128, %v1225
    %v1227 = vpop.f32.mrb[0].mxu0
    %1228 = vmatprep.mubr.f32.mxu0 0.0
    %1229 = vmatmul.mubr.f32.gmra.mrb[0].mxu0 %v1137
    %v1230 = vpop.f32.mrb[0].mxu0
    %v1231 = vadd.f32 %v1128, %v1230
    %v1232 = vpop.f32.mrb[0].mxu0
    %1233 = vmatprep.mubr.f32.mxu0 0.0
    %1234 = vmatmul.mubr.f32.gmra.mrb[0].mxu0 %v1140
    %v1235 = vpop.f32.mrb[0].mxu0
    %v1236 = vadd.f32 %v1128, %v1235
    %v1237 = vpop.f32.mrb[0].mxu0
    %1238 = vmatprep.mubr.f32.mxu0 0.0
    %1239 = vmatmul.mubr.f32.gmra.mrb[0].mxu0 %v1143
    %v1240 = vpop.f32.mrb[0].mxu0
    %v1241 = vadd.f32 %v1128, %v1240
    %v1242 = vpop.f32.mrb[0].mxu0
    %1243 = vmatprep.mubr.f32.mxu0 0.0
    %1244 = vmatmul.mubr.f32.gmra.mrb[0].mxu0 %v1146
    %v1245 = vpop.f32.mrb[0].mxu0
    %v1246 = vadd.f32 %v1128, %v1245
    %v1247 = vpop.f32.mrb[0].mxu0
    %1248 = vmatprep.mubr.f32.mxu0 0.0
    %1249 = vmatmul.mubr.f32.gmra.mrb[0].mxu0 %v1149
    %v1250 = vpop.f32.mrb[0].mxu0
    %v1251 = vadd.f32 %v1128, %v1250
    %v1252 = vpop.f32.mrb[0].mxu0
    %1253 = vmatprep.mubr.f32.mxu0 0.0
    %1254 = vmatmul.mubr.f32.gmra.mrb[0].mxu0 %v1152
    %v1255 = vpop.f32.mrb[0].mxu0
    %v1256 = vadd.f32 %v1128, %v1255
    %v1257 = vpop.f32.mrb[0].mxu0
    %1258 = vdwg.mxu0
    %s1259 = scalar_lea.vmem %s5, 32
    %v1260 = vld [vmem:[%s1259] sm:$0xff]
    %v1261 = vld [vmem:[%s1259 + $0x8] sm:$0xff]
    %v1262 = vld [vmem:[%s1259 + $0x10] sm:$0xff]
    %v1263 = vld [vmem:[%s1259 + $0x18] sm:$0xff]
    %s1264 = scalar_lea.vmem %s2, 8
    %v1265 = vld [vmem:[%s1264] sm:$0xff]
    %s1266 = scalar_lea.vmem %s3, 8
    %v1267 = vld [vmem:[%s1266] sm:$0xff]
    %v1269 = vsel %vm54, %v1265, 0
    %1271 = vmatprep.subr.mxu0 0.0
    %1272 = vmatpush1.msra.mxu0 %v1260
    %1273 = vmatprep.subr.mxu0 0.0
    %1274 = vmatpush1.msra.mxu0 %v1261
    %1275 = vmatprep.subr.mxu0 0.0
    %1276 = vmatpush1.msra.mxu0 %v1262
    %1277 = vmatprep.subr.mxu0 0.0
    %1278 = vmatpush1.msra.mxu0 %v1263
    %1279 = vmatprep.subr.mxu0 0.0
    %1280 = vmatpush1.msra.mxu0 0.0
    %1281 = vmatprep.subr.mxu0 0.0
    %1282 = vmatpush1.msra.mxu0 0.0
    %1283 = vmatprep.subr.mxu0 0.0
    %1284 = vmatpush1.msra.mxu0 0.0
    %1285 = vmatprep.subr.mxu0 0.0
    %1286 = vmatpush1.msra.mxu0 0.0
    %1287 = vmatprep.subr.mxu0 0.0
    %1288 = vmatpush1.msra.mxu0 0.0
    %1289 = vmatprep.subr.mxu0 0.0
    %1290 = vmatpush1.msra.mxu0 0.0
    %1291 = vmatprep.subr.mxu0 0.0
    %1292 = vmatpush1.msra.mxu0 0.0
    %1293 = vmatprep.subr.mxu0 0.0
    %1294 = vmatpush1.msra.mxu0 0.0
    %1295 = vmatprep.subr.mxu0 0.0
    %1296 = vmatpush1.msra.mxu0 0.0
    %1297 = vmatprep.subr.mxu0 0.0
    %1298 = vmatpush1.msra.mxu0 0.0
    %1299 = vmatprep.subr.mxu0 0.0
    %1300 = vmatpush1.msra.mxu0 0.0
    %1301 = vmatprep.subr.mxu0 0.0
    %1302 = vmatpush1.msra.mxu0 0.0
    %1303 = vmatprep.subr.mxu0 0.0
    %1304 = vmatpush1.msra.mxu0 0.0
    %1305 = vmatprep.subr.mxu0 0.0
    %1306 = vmatpush1.msra.mxu0 0.0
    %1307 = vmatprep.subr.mxu0 0.0
    %1308 = vmatpush1.msra.mxu0 0.0
    %1309 = vmatprep.subr.mxu0 0.0
    %1310 = vmatpush1.msra.mxu0 0.0
    %1311 = vmatprep.subr.mxu0 0.0
    %1312 = vmatpush1.msra.mxu0 0.0
    %1313 = vmatprep.subr.mxu0 0.0
    %1314 = vmatpush1.msra.mxu0 0.0
    %1315 = vmatprep.subr.mxu0 0.0
    %1316 = vmatpush1.msra.mxu0 0.0
    %1317 = vmatprep.subr.mxu0 0.0
    %1318 = vmatpush1.msra.mxu0 0.0
    %1319 = vmatprep.subr.mxu0 0.0
    %1320 = vmatpush1.msra.mxu0 0.0
    %1321 = vmatprep.subr.mxu0 0.0
    %1322 = vmatpush1.msra.mxu0 0.0
    %1323 = vmatprep.subr.mxu0 0.0
    %1324 = vmatpush1.msra.mxu0 0.0
    %1325 = vmatprep.subr.mxu0 0.0
    %1326 = vmatpush1.msra.mxu0 0.0
    %1327 = vmatprep.subr.mxu0 0.0
    %1328 = vmatpush1.msra.mxu0 0.0
    %1329 = vmatprep.subr.mxu0 0.0
    %1330 = vmatpush1.msra.mxu0 0.0
    %1331 = vmatprep.subr.mxu0 0.0
    %1332 = vmatpush1.msra.mxu0 0.0
    %1333 = vmatprep.subr.mxu0 0.0
    %1334 = vmatpush1.msra.mxu0 0.0
    %1335 = vmatprep.mubr.f32.mxu0 0.0
    %1336 = vmatmul.mubr.f32.gmra.mrb[0].mxu0 %v1269
    %v1337 = vpop.f32.mrb[0].mxu0
    %v1338 = vadd.f32 0.0, %v1337
    %v1339 = vpop.f32.mrb[0].mxu0
    %1340 = vdwg.mxu0
    %v1341 = vadd.f32 %v1221, %v1338
    %v1342 = vsub.f32 0.0, %v1341
    %v1343 = vmul.f32 %v1342, 1.442695
    %v1344 = vpow.pop %v1343
    %v1345 = vadd.f32 %v1344, 1.0
    %v1346 = vrcp.pop %v1345
    %v1347 = vmul.f32 1.0, %v1346
    %v1348 = vtanh.pop %v1341
    %1350 = vrot.lane.b32.xlu0 %v1267, 32
    %v1351 = vpop.permute.xlu0 %1350
    %v1353 = vmul.f32 %v1347, %v1351
    %1355 = vrot.lane.b32.xlu0 %v1348, 64
    %v1356 = vpop.permute.xlu0 %1355
    %v1358 = vmul.f32 %v1347, %v1356
    %1360 = vrot.lane.b32.xlu0 %v1358, 32
    %v1361 = vpop.permute.xlu0 %1360
    %v1363 = vadd.f32 %v1353, %v1361
    %v1364 = vtanh.pop %v1363
    %1366 = vrot.lane.b32.xlu0 %v1364, 64
    %v1367 = vpop.permute.xlu0 %1366
    %v1369 = vmul.f32 %v1347, %v1367
    %1371 = vrot.lane.b32.xlu0 %v1369, 32
    %v1372 = vpop.permute.xlu0 %1371
    %v1373 = vsel %vm54, %v1372, 0
    %1375 = vmatprep.subr.mxu0 0.0
    %1376 = vmatpush1.msra.mxu0 %v1260
    %1377 = vmatprep.subr.mxu0 0.0
    %1378 = vmatpush1.msra.mxu0 %v1261
    %1379 = vmatprep.subr.mxu0 0.0
    %1380 = vmatpush1.msra.mxu0 %v1262
    %1381 = vmatprep.subr.mxu0 0.0
    %1382 = vmatpush1.msra.mxu0 %v1263
    %1383 = vmatprep.subr.mxu0 0.0
    %1384 = vmatpush1.msra.mxu0 0.0
    %1385 = vmatprep.subr.mxu0 0.0
    %1386 = vmatpush1.msra.mxu0 0.0
    %1387 = vmatprep.subr.mxu0 0.0
    %1388 = vmatpush1.msra.mxu0 0.0
    %1389 = vmatprep.subr.mxu0 0.0
    %1390 = vmatpush1.msra.mxu0 0.0
    %1391 = vmatprep.subr.mxu0 0.0
    %1392 = vmatpush1.msra.mxu0 0.0
    %1393 = vmatprep.subr.mxu0 0.0
    %1394 = vmatpush1.msra.mxu0 0.0
    %1395 = vmatprep.subr.mxu0 0.0
    %1396 = vmatpush1.msra.mxu0 0.0
    %1397 = vmatprep.subr.mxu0 0.0
    %1398 = vmatpush1.msra.mxu0 0.0
    %1399 = vmatprep.subr.mxu0 0.0
    %1400 = vmatpush1.msra.mxu0 0.0
    %1401 = vmatprep.subr.mxu0 0.0
    %1402 = vmatpush1.msra.mxu0 0.0
    %1403 = vmatprep.subr.mxu0 0.0
    %1404 = vmatpush1.msra.mxu0 0.0
    %1405 = vmatprep.subr.mxu0 0.0
    %1406 = vmatpush1.msra.mxu0 0.0
    %1407 = vmatprep.subr.mxu0 0.0
    %1408 = vmatpush1.msra.mxu0 0.0
    %1409 = vmatprep.subr.mxu0 0.0
    %1410 = vmatpush1.msra.mxu0 0.0
    %1411 = vmatprep.subr.mxu0 0.0
    %1412 = vmatpush1.msra.mxu0 0.0
    %1413 = vmatprep.subr.mxu0 0.0
    %1414 = vmatpush1.msra.mxu0 0.0
    %1415 = vmatprep.subr.mxu0 0.0
    %1416 = vmatpush1.msra.mxu0 0.0
    %1417 = vmatprep.subr.mxu0 0.0
    %1418 = vmatpush1.msra.mxu0 0.0
    %1419 = vmatprep.subr.mxu0 0.0
    %1420 = vmatpush1.msra.mxu0 0.0
    %1421 = vmatprep.subr.mxu0 0.0
    %1422 = vmatpush1.msra.mxu0 0.0
    %1423 = vmatprep.subr.mxu0 0.0
    %1424 = vmatpush1.msra.mxu0 0.0
    %1425 = vmatprep.subr.mxu0 0.0
    %1426 = vmatpush1.msra.mxu0 0.0
    %1427 = vmatprep.subr.mxu0 0.0
    %1428 = vmatpush1.msra.mxu0 0.0
    %1429 = vmatprep.subr.mxu0 0.0
    %1430 = vmatpush1.msra.mxu0 0.0
    %1431 = vmatprep.subr.mxu0 0.0
    %1432 = vmatpush1.msra.mxu0 0.0
    %1433 = vmatprep.subr.mxu0 0.0
    %1434 = vmatpush1.msra.mxu0 0.0
    %1435 = vmatprep.subr.mxu0 0.0
    %1436 = vmatpush1.msra.mxu0 0.0
    %1437 = vmatprep.subr.mxu0 0.0
    %1438 = vmatpush1.msra.mxu0 0.0
    %1439 = vmatprep.mubr.f32.mxu0 0.0
    %1440 = vmatmul.mubr.f32.gmra.mrb[0].mxu0 %v1373
    %v1441 = vpop.f32.mrb[0].mxu0
    %v1442 = vadd.f32 0.0, %v1441
    %v1443 = vpop.f32.mrb[0].mxu0
    %1444 = vdwg.mxu0
    %v1445 = vadd.f32 %v1226, %v1442
    %v1446 = vsub.f32 0.0, %v1445
    %v1447 = vmul.f32 %v1446, 1.442695
    %v1448 = vpow.pop %v1447
    %v1449 = vadd.f32 %v1448, 1.0
    %v1450 = vrcp.pop %v1449
    %v1451 = vmul.f32 1.0, %v1450
    %v1452 = vtanh.pop %v1445
    %v1453 = vmul.f32 %v1451, %v1363
    %1455 = vrot.lane.b32.xlu0 %v1452, 64
    %v1456 = vpop.permute.xlu0 %1455
    %v1458 = vmul.f32 %v1451, %v1456
    %1460 = vrot.lane.b32.xlu0 %v1458, 32
    %v1461 = vpop.permute.xlu0 %1460
    %v1463 = vadd.f32 %v1453, %v1461
    %v1464 = vtanh.pop %v1463
    %1466 = vrot.lane.b32.xlu0 %v1464, 64
    %v1467 = vpop.permute.xlu0 %1466
    %v1469 = vmul.f32 %v1451, %v1467
    %1471 = vrot.lane.b32.xlu0 %v1469, 32
    %v1472 = vpop.permute.xlu0 %1471
    %v1473 = vsel %vm54, %v1472, 0
    %1475 = vmatprep.subr.mxu0 0.0
    %1476 = vmatpush1.msra.mxu0 %v1260
    %1477 = vmatprep.subr.mxu0 0.0
    %1478 = vmatpush1.msra.mxu0 %v1261
    %1479 = vmatprep.subr.mxu0 0.0
    %1480 = vmatpush1.msra.mxu0 %v1262
    %1481 = vmatprep.subr.mxu0 0.0
    %1482 = vmatpush1.msra.mxu0 %v1263
    %1483 = vmatprep.subr.mxu0 0.0
    %1484 = vmatpush1.msra.mxu0 0.0
    %1485 = vmatprep.subr.mxu0 0.0
    %1486 = vmatpush1.msra.mxu0 0.0
    %1487 = vmatprep.subr.mxu0 0.0
    %1488 = vmatpush1.msra.mxu0 0.0
    %1489 = vmatprep.subr.mxu0 0.0
    %1490 = vmatpush1.msra.mxu0 0.0
    %1491 = vmatprep.subr.mxu0 0.0
    %1492 = vmatpush1.msra.mxu0 0.0
    %1493 = vmatprep.subr.mxu0 0.0
    %1494 = vmatpush1.msra.mxu0 0.0
    %1495 = vmatprep.subr.mxu0 0.0
    %1496 = vmatpush1.msra.mxu0 0.0
    %1497 = vmatprep.subr.mxu0 0.0
    %1498 = vmatpush1.msra.mxu0 0.0
    %1499 = vmatprep.subr.mxu0 0.0
    %1500 = vmatpush1.msra.mxu0 0.0
    %1501 = vmatprep.subr.mxu0 0.0
    %1502 = vmatpush1.msra.mxu0 0.0
    %1503 = vmatprep.subr.mxu0 0.0
    %1504 = vmatpush1.msra.mxu0 0.0
    %1505 = vmatprep.subr.mxu0 0.0
    %1506 = vmatpush1.msra.mxu0 0.0
    %1507 = vmatprep.subr.mxu0 0.0
    %1508 = vmatpush1.msra.mxu0 0.0
    %1509 = vmatprep.subr.mxu0 0.0
    %1510 = vmatpush1.msra.mxu0 0.0
    %1511 = vmatprep.subr.mxu0 0.0
    %1512 = vmatpush1.msra.mxu0 0.0
    %1513 = vmatprep.subr.mxu0 0.0
    %1514 = vmatpush1.msra.mxu0 0.0
    %1515 = vmatprep.subr.mxu0 0.0
    %1516 = vmatpush1.msra.mxu0 0.0
    %1517 = vmatprep.subr.mxu0 0.0
    %1518 = vmatpush1.msra.mxu0 0.0
    %1519 = vmatprep.subr.mxu0 0.0
    %1520 = vmatpush1.msra.mxu0 0.0
    %1521 = vmatprep.subr.mxu0 0.0
    %1522 = vmatpush1.msra.mxu0 0.0
    %1523 = vmatprep.subr.mxu0 0.0
    %1524 = vmatpush1.msra.mxu0 0.0
    %1525 = vmatprep.subr.mxu0 0.0
    %1526 = vmatpush1.msra.mxu0 0.0
    %1527 = vmatprep.subr.mxu0 0.0
    %1528 = vmatpush1.msra.mxu0 0.0
    %1529 = vmatprep.subr.mxu0 0.0
    %1530 = vmatpush1.msra.mxu0 0.0
    %1531 = vmatprep.subr.mxu0 0.0
    %1532 = vmatpush1.msra.mxu0 0.0
    %1533 = vmatprep.subr.mxu0 0.0
    %1534 = vmatpush1.msra.mxu0 0.0
    %1535 = vmatprep.subr.mxu0 0.0
    %1536 = vmatpush1.msra.mxu0 0.0
    %1537 = vmatprep.subr.mxu0 0.0
    %1538 = vmatpush1.msra.mxu0 0.0
    %1539 = vmatprep.mubr.f32.mxu0 0.0
    %1540 = vmatmul.mubr.f32.gmra.mrb[0].mxu0 %v1473
    %v1541 = vpop.f32.mrb[0].mxu0
    %v1542 = vadd.f32 0.0, %v1541
    %v1543 = vpop.f32.mrb[0].mxu0
    %1544 = vdwg.mxu0
    %v1545 = vadd.f32 %v1231, %v1542
    %v1546 = vsub.f32 0.0, %v1545
    %v1547 = vmul.f32 %v1546, 1.442695
    %v1548 = vpow.pop %v1547
    %v1549 = vadd.f32 %v1548, 1.0
    %v1550 = vrcp.pop %v1549
    %v1551 = vmul.f32 1.0, %v1550
    %v1552 = vtanh.pop %v1545
    %v1553 = vmul.f32 %v1551, %v1463
    %1555 = vrot.lane.b32.xlu0 %v1552, 64
    %v1556 = vpop.permute.xlu0 %1555
    %v1558 = vmul.f32 %v1551, %v1556
    %1560 = vrot.lane.b32.xlu0 %v1558, 32
    %v1561 = vpop.permute.xlu0 %1560
    %v1563 = vadd.f32 %v1553, %v1561
    %v1564 = vtanh.pop %v1563
    %1566 = vrot.lane.b32.xlu0 %v1564, 64
    %v1567 = vpop.permute.xlu0 %1566
    %v1569 = vmul.f32 %v1551, %v1567
    %1571 = vrot.lane.b32.xlu0 %v1569, 32
    %v1572 = vpop.permute.xlu0 %1571
    %v1573 = vsel %vm54, %v1572, 0
    %1575 = vmatprep.subr.mxu0 0.0
    %1576 = vmatpush1.msra.mxu0 %v1260
    %1577 = vmatprep.subr.mxu0 0.0
    %1578 = vmatpush1.msra.mxu0 %v1261
    %1579 = vmatprep.subr.mxu0 0.0
    %1580 = vmatpush1.msra.mxu0 %v1262
    %1581 = vmatprep.subr.mxu0 0.0
    %1582 = vmatpush1.msra.mxu0 %v1263
    %1583 = vmatprep.subr.mxu0 0.0
    %1584 = vmatpush1.msra.mxu0 0.0
    %1585 = vmatprep.subr.mxu0 0.0
    %1586 = vmatpush1.msra.mxu0 0.0
    %1587 = vmatprep.subr.mxu0 0.0
    %1588 = vmatpush1.msra.mxu0 0.0
    %1589 = vmatprep.subr.mxu0 0.0
    %1590 = vmatpush1.msra.mxu0 0.0
    %1591 = vmatprep.subr.mxu0 0.0
    %1592 = vmatpush1.msra.mxu0 0.0
    %1593 = vmatprep.subr.mxu0 0.0
    %1594 = vmatpush1.msra.mxu0 0.0
    %1595 = vmatprep.subr.mxu0 0.0
    %1596 = vmatpush1.msra.mxu0 0.0
    %1597 = vmatprep.subr.mxu0 0.0
    %1598 = vmatpush1.msra.mxu0 0.0
    %1599 = vmatprep.subr.mxu0 0.0
    %1600 = vmatpush1.msra.mxu0 0.0
    %1601 = vmatprep.subr.mxu0 0.0
    %1602 = vmatpush1.msra.mxu0 0.0
    %1603 = vmatprep.subr.mxu0 0.0
    %1604 = vmatpush1.msra.mxu0 0.0
    %1605 = vmatprep.subr.mxu0 0.0
    %1606 = vmatpush1.msra.mxu0 0.0
    %1607 = vmatprep.subr.mxu0 0.0
    %1608 = vmatpush1.msra.mxu0 0.0
    %1609 = vmatprep.subr.mxu0 0.0
    %1610 = vmatpush1.msra.mxu0 0.0
    %1611 = vmatprep.subr.mxu0 0.0
    %1612 = vmatpush1.msra.mxu0 0.0
    %1613 = vmatprep.subr.mxu0 0.0
    %1614 = vmatpush1.msra.mxu0 0.0
    %1615 = vmatprep.subr.mxu0 0.0
    %1616 = vmatpush1.msra.mxu0 0.0
    %1617 = vmatprep.subr.mxu0 0.0
    %1618 = vmatpush1.msra.mxu0 0.0
    %1619 = vmatprep.subr.mxu0 0.0
    %1620 = vmatpush1.msra.mxu0 0.0
    %1621 = vmatprep.subr.mxu0 0.0
    %1622 = vmatpush1.msra.mxu0 0.0
    %1623 = vmatprep.subr.mxu0 0.0
    %1624 = vmatpush1.msra.mxu0 0.0
    %1625 = vmatprep.subr.mxu0 0.0
    %1626 = vmatpush1.msra.mxu0 0.0
    %1627 = vmatprep.subr.mxu0 0.0
    %1628 = vmatpush1.msra.mxu0 0.0
    %1629 = vmatprep.subr.mxu0 0.0
    %1630 = vmatpush1.msra.mxu0 0.0
    %1631 = vmatprep.subr.mxu0 0.0
    %1632 = vmatpush1.msra.mxu0 0.0
    %1633 = vmatprep.subr.mxu0 0.0
    %1634 = vmatpush1.msra.mxu0 0.0
    %1635 = vmatprep.subr.mxu0 0.0
    %1636 = vmatpush1.msra.mxu0 0.0
    %1637 = vmatprep.subr.mxu0 0.0
    %1638 = vmatpush1.msra.mxu0 0.0
    %1639 = vmatprep.mubr.f32.mxu0 0.0
    %1640 = vmatmul.mubr.f32.gmra.mrb[0].mxu0 %v1573
    %v1641 = vpop.f32.mrb[0].mxu0
    %v1642 = vadd.f32 0.0, %v1641
    %v1643 = vpop.f32.mrb[0].mxu0
    %1644 = vdwg.mxu0
    %v1645 = vadd.f32 %v1236, %v1642
    %v1646 = vsub.f32 0.0, %v1645
    %v1647 = vmul.f32 %v1646, 1.442695
    %v1648 = vpow.pop %v1647
    %v1649 = vadd.f32 %v1648, 1.0
    %v1650 = vrcp.pop %v1649
    %v1651 = vmul.f32 1.0, %v1650
    %v1652 = vtanh.pop %v1645
    %v1653 = vmul.f32 %v1651, %v1563
    %1655 = vrot.lane.b32.xlu0 %v1652, 64
    %v1656 = vpop.permute.xlu0 %1655
    %v1658 = vmul.f32 %v1651, %v1656
    %1660 = vrot.lane.b32.xlu0 %v1658, 32
    %v1661 = vpop.permute.xlu0 %1660
    %v1663 = vadd.f32 %v1653, %v1661
    %v1664 = vtanh.pop %v1663
    %1666 = vrot.lane.b32.xlu0 %v1664, 64
    %v1667 = vpop.permute.xlu0 %1666
    %v1669 = vmul.f32 %v1651, %v1667
    %1671 = vrot.lane.b32.xlu0 %v1669, 32
    %v1672 = vpop.permute.xlu0 %1671
    %v1673 = vsel %vm54, %v1672, 0
    %1675 = vmatprep.subr.mxu0 0.0
    %1676 = vmatpush1.msra.mxu0 %v1260
    %1677 = vmatprep.subr.mxu0 0.0
    %1678 = vmatpush1.msra.mxu0 %v1261
    %1679 = vmatprep.subr.mxu0 0.0
    %1680 = vmatpush1.msra.mxu0 %v1262
    %1681 = vmatprep.subr.mxu0 0.0
    %1682 = vmatpush1.msra.mxu0 %v1263
    %1683 = vmatprep.subr.mxu0 0.0
    %1684 = vmatpush1.msra.mxu0 0.0
    %1685 = vmatprep.subr.mxu0 0.0
    %1686 = vmatpush1.msra.mxu0 0.0
    %1687 = vmatprep.subr.mxu0 0.0
    %1688 = vmatpush1.msra.mxu0 0.0
    %1689 = vmatprep.subr.mxu0 0.0
    %1690 = vmatpush1.msra.mxu0 0.0
    %1691 = vmatprep.subr.mxu0 0.0
    %1692 = vmatpush1.msra.mxu0 0.0
    %1693 = vmatprep.subr.mxu0 0.0
    %1694 = vmatpush1.msra.mxu0 0.0
    %1695 = vmatprep.subr.mxu0 0.0
    %1696 = vmatpush1.msra.mxu0 0.0
    %1697 = vmatprep.subr.mxu0 0.0
    %1698 = vmatpush1.msra.mxu0 0.0
    %1699 = vmatprep.subr.mxu0 0.0
    %1700 = vmatpush1.msra.mxu0 0.0
    %1701 = vmatprep.subr.mxu0 0.0
    %1702 = vmatpush1.msra.mxu0 0.0
    %1703 = vmatprep.subr.mxu0 0.0
    %1704 = vmatpush1.msra.mxu0 0.0
    %1705 = vmatprep.subr.mxu0 0.0
    %1706 = vmatpush1.msra.mxu0 0.0
    %1707 = vmatprep.subr.mxu0 0.0
    %1708 = vmatpush1.msra.mxu0 0.0
    %1709 = vmatprep.subr.mxu0 0.0
    %1710 = vmatpush1.msra.mxu0 0.0
    %1711 = vmatprep.subr.mxu0 0.0
    %1712 = vmatpush1.msra.mxu0 0.0
    %1713 = vmatprep.subr.mxu0 0.0
    %1714 = vmatpush1.msra.mxu0 0.0
    %1715 = vmatprep.subr.mxu0 0.0
    %1716 = vmatpush1.msra.mxu0 0.0
    %1717 = vmatprep.subr.mxu0 0.0
    %1718 = vmatpush1.msra.mxu0 0.0
    %1719 = vmatprep.subr.mxu0 0.0
    %1720 = vmatpush1.msra.mxu0 0.0
    %1721 = vmatprep.subr.mxu0 0.0
    %1722 = vmatpush1.msra.mxu0 0.0
    %1723 = vmatprep.subr.mxu0 0.0
    %1724 = vmatpush1.msra.mxu0 0.0
    %1725 = vmatprep.subr.mxu0 0.0
    %1726 = vmatpush1.msra.mxu0 0.0
    %1727 = vmatprep.subr.mxu0 0.0
    %1728 = vmatpush1.msra.mxu0 0.0
    %1729 = vmatprep.subr.mxu0 0.0
    %1730 = vmatpush1.msra.mxu0 0.0
    %1731 = vmatprep.subr.mxu0 0.0
    %1732 = vmatpush1.msra.mxu0 0.0
    %1733 = vmatprep.subr.mxu0 0.0
    %1734 = vmatpush1.msra.mxu0 0.0
    %1735 = vmatprep.subr.mxu0 0.0
    %1736 = vmatpush1.msra.mxu0 0.0
    %1737 = vmatprep.subr.mxu0 0.0
    %1738 = vmatpush1.msra.mxu0 0.0
    %1739 = vmatprep.mubr.f32.mxu0 0.0
    %1740 = vmatmul.mubr.f32.gmra.mrb[0].mxu0 %v1673
    %v1741 = vpop.f32.mrb[0].mxu0
    %v1742 = vadd.f32 0.0, %v1741
    %v1743 = vpop.f32.mrb[0].mxu0
    %1744 = vdwg.mxu0
    %v1745 = vadd.f32 %v1241, %v1742
    %v1746 = vsub.f32 0.0, %v1745
    %v1747 = vmul.f32 %v1746, 1.442695
    %v1748 = vpow.pop %v1747
    %v1749 = vadd.f32 %v1748, 1.0
    %v1750 = vrcp.pop %v1749
    %v1751 = vmul.f32 1.0, %v1750
    %v1752 = vtanh.pop %v1745
    %v1753 = vmul.f32 %v1751, %v1663
    %1755 = vrot.lane.b32.xlu0 %v1752, 64
    %v1756 = vpop.permute.xlu0 %1755
    %v1758 = vmul.f32 %v1751, %v1756
    %1760 = vrot.lane.b32.xlu0 %v1758, 32
    %v1761 = vpop.permute.xlu0 %1760
    %v1763 = vadd.f32 %v1753, %v1761
    %v1764 = vtanh.pop %v1763
    %1766 = vrot.lane.b32.xlu0 %v1764, 64
    %v1767 = vpop.permute.xlu0 %1766
    %v1769 = vmul.f32 %v1751, %v1767
    %1771 = vrot.lane.b32.xlu0 %v1769, 32
    %v1772 = vpop.permute.xlu0 %1771
    %v1773 = vsel %vm54, %v1772, 0
    %1775 = vmatprep.subr.mxu0 0.0
    %1776 = vmatpush1.msra.mxu0 %v1260
    %1777 = vmatprep.subr.mxu0 0.0
    %1778 = vmatpush1.msra.mxu0 %v1261
    %1779 = vmatprep.subr.mxu0 0.0
    %1780 = vmatpush1.msra.mxu0 %v1262
    %1781 = vmatprep.subr.mxu0 0.0
    %1782 = vmatpush1.msra.mxu0 %v1263
    %1783 = vmatprep.subr.mxu0 0.0
    %1784 = vmatpush1.msra.mxu0 0.0
    %1785 = vmatprep.subr.mxu0 0.0
    %1786 = vmatpush1.msra.mxu0 0.0
    %1787 = vmatprep.subr.mxu0 0.0
    %1788 = vmatpush1.msra.mxu0 0.0
    %1789 = vmatprep.subr.mxu0 0.0
    %1790 = vmatpush1.msra.mxu0 0.0
    %1791 = vmatprep.subr.mxu0 0.0
    %1792 = vmatpush1.msra.mxu0 0.0
    %1793 = vmatprep.subr.mxu0 0.0
    %1794 = vmatpush1.msra.mxu0 0.0
    %1795 = vmatprep.subr.mxu0 0.0
    %1796 = vmatpush1.msra.mxu0 0.0
    %1797 = vmatprep.subr.mxu0 0.0
    %1798 = vmatpush1.msra.mxu0 0.0
    %1799 = vmatprep.subr.mxu0 0.0
    %1800 = vmatpush1.msra.mxu0 0.0
    %1801 = vmatprep.subr.mxu0 0.0
    %1802 = vmatpush1.msra.mxu0 0.0
    %1803 = vmatprep.subr.mxu0 0.0
    %1804 = vmatpush1.msra.mxu0 0.0
    %1805 = vmatprep.subr.mxu0 0.0
    %1806 = vmatpush1.msra.mxu0 0.0
    %1807 = vmatprep.subr.mxu0 0.0
    %1808 = vmatpush1.msra.mxu0 0.0
    %1809 = vmatprep.subr.mxu0 0.0
    %1810 = vmatpush1.msra.mxu0 0.0
    %1811 = vmatprep.subr.mxu0 0.0
    %1812 = vmatpush1.msra.mxu0 0.0
    %1813 = vmatprep.subr.mxu0 0.0
    %1814 = vmatpush1.msra.mxu0 0.0
    %1815 = vmatprep.subr.mxu0 0.0
    %1816 = vmatpush1.msra.mxu0 0.0
    %1817 = vmatprep.subr.mxu0 0.0
    %1818 = vmatpush1.msra.mxu0 0.0
    %1819 = vmatprep.subr.mxu0 0.0
    %1820 = vmatpush1.msra.mxu0 0.0
    %1821 = vmatprep.subr.mxu0 0.0
    %1822 = vmatpush1.msra.mxu0 0.0
    %1823 = vmatprep.subr.mxu0 0.0
    %1824 = vmatpush1.msra.mxu0 0.0
    %1825 = vmatprep.subr.mxu0 0.0
    %1826 = vmatpush1.msra.mxu0 0.0
    %1827 = vmatprep.subr.mxu0 0.0
    %1828 = vmatpush1.msra.mxu0 0.0
    %1829 = vmatprep.subr.mxu0 0.0
    %1830 = vmatpush1.msra.mxu0 0.0
    %1831 = vmatprep.subr.mxu0 0.0
    %1832 = vmatpush1.msra.mxu0 0.0
    %1833 = vmatprep.subr.mxu0 0.0
    %1834 = vmatpush1.msra.mxu0 0.0
    %1835 = vmatprep.subr.mxu0 0.0
    %1836 = vmatpush1.msra.mxu0 0.0
    %1837 = vmatprep.subr.mxu0 0.0
    %1838 = vmatpush1.msra.mxu0 0.0
    %1839 = vmatprep.mubr.f32.mxu0 0.0
    %1840 = vmatmul.mubr.f32.gmra.mrb[0].mxu0 %v1773
    %v1841 = vpop.f32.mrb[0].mxu0
    %v1842 = vadd.f32 0.0, %v1841
    %v1843 = vpop.f32.mrb[0].mxu0
    %1844 = vdwg.mxu0
    %v1845 = vadd.f32 %v1246, %v1842
    %v1846 = vsub.f32 0.0, %v1845
    %v1847 = vmul.f32 %v1846, 1.442695
    %v1848 = vpow.pop %v1847
    %v1849 = vadd.f32 %v1848, 1.0
    %v1850 = vrcp.pop %v1849
    %v1851 = vmul.f32 1.0, %v1850
    %v1852 = vtanh.pop %v1845
    %v1853 = vmul.f32 %v1851, %v1763
    %1855 = vrot.lane.b32.xlu0 %v1852, 64
    %v1856 = vpop.permute.xlu0 %1855
    %v1858 = vmul.f32 %v1851, %v1856
    %1860 = vrot.lane.b32.xlu0 %v1858, 32
    %v1861 = vpop.permute.xlu0 %1860
    %v1863 = vadd.f32 %v1853, %v1861
    %v1864 = vtanh.pop %v1863
    %1866 = vrot.lane.b32.xlu0 %v1864, 64
    %v1867 = vpop.permute.xlu0 %1866
    %v1869 = vmul.f32 %v1851, %v1867
    %1871 = vrot.lane.b32.xlu0 %v1869, 32
    %v1872 = vpop.permute.xlu0 %1871
    %v1873 = vsel %vm54, %v1872, 0
    %1875 = vmatprep.subr.mxu0 0.0
    %1876 = vmatpush1.msra.mxu0 %v1260
    %1877 = vmatprep.subr.mxu0 0.0
    %1878 = vmatpush1.msra.mxu0 %v1261
    %1879 = vmatprep.subr.mxu0 0.0
    %1880 = vmatpush1.msra.mxu0 %v1262
    %1881 = vmatprep.subr.mxu0 0.0
    %1882 = vmatpush1.msra.mxu0 %v1263
    %1883 = vmatprep.subr.mxu0 0.0
    %1884 = vmatpush1.msra.mxu0 0.0
    %1885 = vmatprep.subr.mxu0 0.0
    %1886 = vmatpush1.msra.mxu0 0.0
    %1887 = vmatprep.subr.mxu0 0.0
    %1888 = vmatpush1.msra.mxu0 0.0
    %1889 = vmatprep.subr.mxu0 0.0
    %1890 = vmatpush1.msra.mxu0 0.0
    %1891 = vmatprep.subr.mxu0 0.0
    %1892 = vmatpush1.msra.mxu0 0.0
    %1893 = vmatprep.subr.mxu0 0.0
    %1894 = vmatpush1.msra.mxu0 0.0
    %1895 = vmatprep.subr.mxu0 0.0
    %1896 = vmatpush1.msra.mxu0 0.0
    %1897 = vmatprep.subr.mxu0 0.0
    %1898 = vmatpush1.msra.mxu0 0.0
    %1899 = vmatprep.subr.mxu0 0.0
    %1900 = vmatpush1.msra.mxu0 0.0
    %1901 = vmatprep.subr.mxu0 0.0
    %1902 = vmatpush1.msra.mxu0 0.0
    %1903 = vmatprep.subr.mxu0 0.0
    %1904 = vmatpush1.msra.mxu0 0.0
    %1905 = vmatprep.subr.mxu0 0.0
    %1906 = vmatpush1.msra.mxu0 0.0
    %1907 = vmatprep.subr.mxu0 0.0
    %1908 = vmatpush1.msra.mxu0 0.0
    %1909 = vmatprep.subr.mxu0 0.0
    %1910 = vmatpush1.msra.mxu0 0.0
    %1911 = vmatprep.subr.mxu0 0.0
    %1912 = vmatpush1.msra.mxu0 0.0
    %1913 = vmatprep.subr.mxu0 0.0
    %1914 = vmatpush1.msra.mxu0 0.0
    %1915 = vmatprep.subr.mxu0 0.0
    %1916 = vmatpush1.msra.mxu0 0.0
    %1917 = vmatprep.subr.mxu0 0.0
    %1918 = vmatpush1.msra.mxu0 0.0
    %1919 = vmatprep.subr.mxu0 0.0
    %1920 = vmatpush1.msra.mxu0 0.0
    %1921 = vmatprep.subr.mxu0 0.0
    %1922 = vmatpush1.msra.mxu0 0.0
    %1923 = vmatprep.subr.mxu0 0.0
    %1924 = vmatpush1.msra.mxu0 0.0
    %1925 = vmatprep.subr.mxu0 0.0
    %1926 = vmatpush1.msra.mxu0 0.0
    %1927 = vmatprep.subr.mxu0 0.0
    %1928 = vmatpush1.msra.mxu0 0.0
    %1929 = vmatprep.subr.mxu0 0.0
    %1930 = vmatpush1.msra.mxu0 0.0
    %1931 = vmatprep.subr.mxu0 0.0
    %1932 = vmatpush1.msra.mxu0 0.0
    %1933 = vmatprep.subr.mxu0 0.0
    %1934 = vmatpush1.msra.mxu0 0.0
    %1935 = vmatprep.subr.mxu0 0.0
    %1936 = vmatpush1.msra.mxu0 0.0
    %1937 = vmatprep.subr.mxu0 0.0
    %1938 = vmatpush1.msra.mxu0 0.0
    %1939 = vmatprep.mubr.f32.mxu0 0.0
    %1940 = vmatmul.mubr.f32.gmra.mrb[0].mxu0 %v1873
    %v1941 = vpop.f32.mrb[0].mxu0
    %v1942 = vadd.f32 0.0, %v1941
    %v1943 = vpop.f32.mrb[0].mxu0
    %1944 = vdwg.mxu0
    %v1945 = vadd.f32 %v1251, %v1942
    %v1946 = vsub.f32 0.0, %v1945
    %v1947 = vmul.f32 %v1946, 1.442695
    %v1948 = vpow.pop %v1947
    %v1949 = vadd.f32 %v1948, 1.0
    %v1950 = vrcp.pop %v1949
    %v1951 = vmul.f32 1.0, %v1950
    %v1952 = vtanh.pop %v1945
    %v1953 = vmul.f32 %v1951, %v1863
    %1955 = vrot.lane.b32.xlu0 %v1952, 64
    %v1956 = vpop.permute.xlu0 %1955
    %v1958 = vmul.f32 %v1951, %v1956
    %1960 = vrot.lane.b32.xlu0 %v1958, 32
    %v1961 = vpop.permute.xlu0 %1960
    %v1963 = vadd.f32 %v1953, %v1961
    %v1964 = vtanh.pop %v1963
    %1966 = vrot.lane.b32.xlu0 %v1964, 64
    %v1967 = vpop.permute.xlu0 %1966
    %v1969 = vmul.f32 %v1951, %v1967
    %1971 = vrot.lane.b32.xlu0 %v1969, 32
    %v1972 = vpop.permute.xlu0 %1971
    %v1973 = vsel %vm54, %v1972, 0
    %1975 = vmatprep.subr.mxu0 0.0
    %1976 = vmatpush1.msra.mxu0 %v1260
    %1977 = vmatprep.subr.mxu0 0.0
    %1978 = vmatpush1.msra.mxu0 %v1261
    %1979 = vmatprep.subr.mxu0 0.0
    %1980 = vmatpush1.msra.mxu0 %v1262
    %1981 = vmatprep.subr.mxu0 0.0
    %1982 = vmatpush1.msra.mxu0 %v1263
    %1983 = vmatprep.subr.mxu0 0.0
    %1984 = vmatpush1.msra.mxu0 0.0
    %1985 = vmatprep.subr.mxu0 0.0
    %1986 = vmatpush1.msra.mxu0 0.0
    %1987 = vmatprep.subr.mxu0 0.0
    %1988 = vmatpush1.msra.mxu0 0.0
    %1989 = vmatprep.subr.mxu0 0.0
    %1990 = vmatpush1.msra.mxu0 0.0
    %1991 = vmatprep.subr.mxu0 0.0
    %1992 = vmatpush1.msra.mxu0 0.0
    %1993 = vmatprep.subr.mxu0 0.0
    %1994 = vmatpush1.msra.mxu0 0.0
    %1995 = vmatprep.subr.mxu0 0.0
    %1996 = vmatpush1.msra.mxu0 0.0
    %1997 = vmatprep.subr.mxu0 0.0
    %1998 = vmatpush1.msra.mxu0 0.0
    %1999 = vmatprep.subr.mxu0 0.0
    %2000 = vmatpush1.msra.mxu0 0.0
    %2001 = vmatprep.subr.mxu0 0.0
    %2002 = vmatpush1.msra.mxu0 0.0
    %2003 = vmatprep.subr.mxu0 0.0
    %2004 = vmatpush1.msra.mxu0 0.0
    %2005 = vmatprep.subr.mxu0 0.0
    %2006 = vmatpush1.msra.mxu0 0.0
    %2007 = vmatprep.subr.mxu0 0.0
    %2008 = vmatpush1.msra.mxu0 0.0
    %2009 = vmatprep.subr.mxu0 0.0
    %2010 = vmatpush1.msra.mxu0 0.0
    %2011 = vmatprep.subr.mxu0 0.0
    %2012 = vmatpush1.msra.mxu0 0.0
    %2013 = vmatprep.subr.mxu0 0.0
    %2014 = vmatpush1.msra.mxu0 0.0
    %2015 = vmatprep.subr.mxu0 0.0
    %2016 = vmatpush1.msra.mxu0 0.0
    %2017 = vmatprep.subr.mxu0 0.0
    %2018 = vmatpush1.msra.mxu0 0.0
    %2019 = vmatprep.subr.mxu0 0.0
    %2020 = vmatpush1.msra.mxu0 0.0
    %2021 = vmatprep.subr.mxu0 0.0
    %2022 = vmatpush1.msra.mxu0 0.0
    %2023 = vmatprep.subr.mxu0 0.0
    %2024 = vmatpush1.msra.mxu0 0.0
    %2025 = vmatprep.subr.mxu0 0.0
    %2026 = vmatpush1.msra.mxu0 0.0
    %2027 = vmatprep.subr.mxu0 0.0
    %2028 = vmatpush1.msra.mxu0 0.0
    %2029 = vmatprep.subr.mxu0 0.0
    %2030 = vmatpush1.msra.mxu0 0.0
    %2031 = vmatprep.subr.mxu0 0.0
    %2032 = vmatpush1.msra.mxu0 0.0
    %2033 = vmatprep.subr.mxu0 0.0
    %2034 = vmatpush1.msra.mxu0 0.0
    %2035 = vmatprep.subr.mxu0 0.0
    %2036 = vmatpush1.msra.mxu0 0.0
    %2037 = vmatprep.subr.mxu0 0.0
    %2038 = vmatpush1.msra.mxu0 0.0
    %2039 = vmatprep.mubr.f32.mxu0 0.0
    %2040 = vmatmul.mubr.f32.gmra.mrb[0].mxu0 %v1973
    %v2041 = vpop.f32.mrb[0].mxu0
    %v2042 = vadd.f32 0.0, %v2041
    %v2043 = vpop.f32.mrb[0].mxu0
    %2044 = vdwg.mxu0
    %v2045 = vadd.f32 %v1256, %v2042
    %v2046 = vsub.f32 0.0, %v2045
    %v2047 = vmul.f32 %v2046, 1.442695
    %v2048 = vpow.pop %v2047
    %v2049 = vadd.f32 %v2048, 1.0
    %v2050 = vrcp.pop %v2049
    %v2051 = vmul.f32 1.0, %v2050
    %v2052 = vtanh.pop %v2045
    %v2053 = vmul.f32 %v2051, %v1963
    %2055 = vrot.lane.b32.xlu0 %v2052, 64
    %v2056 = vpop.permute.xlu0 %2055
    %v2058 = vmul.f32 %v2051, %v2056
    %2060 = vrot.lane.b32.xlu0 %v2058, 32
    %v2061 = vpop.permute.xlu0 %2060
    %v2063 = vadd.f32 %v2053, %v2061
    %v2064 = vtanh.pop %v2063
    %2066 = vrot.lane.b32.xlu0 %v2064, 64
    %v2067 = vpop.permute.xlu0 %2066
    %v2069 = vmul.f32 %v2051, %v2067
    %2071 = vrot.lane.b32.xlu0 %v2069, 32
    %v2072 = vpop.permute.xlu0 %2071
    %s2074 = scalar_lea.vmem %s12, 8
    %2075 = vst.msk [vmem:[%s2074] sm:$0xff] %vm54, %v2072
    %2077 = vrot.lane.b32.xlu0 %v2063, 96
    %v2078 = vpop.permute.xlu0 %2077
    %s2080 = scalar_lea.vmem %s13, 8
    %2081 = vst.msk [vmem:[%s2080] sm:$0xff] %vm54, %v2078
    %v2082 = vld [vmem:[%s7] sm:$0xff]
    %v2083 = vld [vmem:[%s7 + $0x8] sm:$0xff]
    %v2084 = vld [vmem:[%s7 + $0x10] sm:$0xff]
    %v2085 = vld [vmem:[%s7 + $0x18] sm:$0xff]
    %v2086 = vld [vmem:[%s8] sm:$0x1]
    %v2088 = vlaneseq
    %v2089 = vshrl.u32 %v2088, 7
    %v2090 = vsub.s32 0, %v2089
    %v2091 = vrot.slane %v2086, %v2090
    %v2093 = vsel %vm54, %v2072, 0
    %2095 = vmatprep.subr.mxu0 0.0
    %2096 = vmatpush1.msra.mxu0 %v2082
    %2097 = vmatprep.subr.mxu0 0.0
    %2098 = vmatpush1.msra.mxu0 %v2083
    %2099 = vmatprep.subr.mxu0 0.0
    %2100 = vmatpush1.msra.mxu0 %v2084
    %2101 = vmatprep.subr.mxu0 0.0
    %2102 = vmatpush1.msra.mxu0 %v2085
    %2103 = vmatprep.subr.mxu0 0.0
    %2104 = vmatpush1.msra.mxu0 0.0
    %2105 = vmatprep.subr.mxu0 0.0
    %2106 = vmatpush1.msra.mxu0 0.0
    %2107 = vmatprep.subr.mxu0 0.0
    %2108 = vmatpush1.msra.mxu0 0.0
    %2109 = vmatprep.subr.mxu0 0.0
    %2110 = vmatpush1.msra.mxu0 0.0
    %2111 = vmatprep.subr.mxu0 0.0
    %2112 = vmatpush1.msra.mxu0 0.0
    %2113 = vmatprep.subr.mxu0 0.0
    %2114 = vmatpush1.msra.mxu0 0.0
    %2115 = vmatprep.subr.mxu0 0.0
    %2116 = vmatpush1.msra.mxu0 0.0
    %2117 = vmatprep.subr.mxu0 0.0
    %2118 = vmatpush1.msra.mxu0 0.0
    %2119 = vmatprep.subr.mxu0 0.0
    %2120 = vmatpush1.msra.mxu0 0.0
    %2121 = vmatprep.subr.mxu0 0.0
    %2122 = vmatpush1.msra.mxu0 0.0
    %2123 = vmatprep.subr.mxu0 0.0
    %2124 = vmatpush1.msra.mxu0 0.0
    %2125 = vmatprep.subr.mxu0 0.0
    %2126 = vmatpush1.msra.mxu0 0.0
    %2127 = vmatprep.subr.mxu0 0.0
    %2128 = vmatpush1.msra.mxu0 0.0
    %2129 = vmatprep.subr.mxu0 0.0
    %2130 = vmatpush1.msra.mxu0 0.0
    %2131 = vmatprep.subr.mxu0 0.0
    %2132 = vmatpush1.msra.mxu0 0.0
    %2133 = vmatprep.subr.mxu0 0.0
    %2134 = vmatpush1.msra.mxu0 0.0
    %2135 = vmatprep.subr.mxu0 0.0
    %2136 = vmatpush1.msra.mxu0 0.0
    %2137 = vmatprep.subr.mxu0 0.0
    %2138 = vmatpush1.msra.mxu0 0.0
    %2139 = vmatprep.subr.mxu0 0.0
    %2140 = vmatpush1.msra.mxu0 0.0
    %2141 = vmatprep.subr.mxu0 0.0
    %2142 = vmatpush1.msra.mxu0 0.0
    %2143 = vmatprep.subr.mxu0 0.0
    %2144 = vmatpush1.msra.mxu0 0.0
    %2145 = vmatprep.subr.mxu0 0.0
    %2146 = vmatpush1.msra.mxu0 0.0
    %2147 = vmatprep.subr.mxu0 0.0
    %2148 = vmatpush1.msra.mxu0 0.0
    %2149 = vmatprep.subr.mxu0 0.0
    %2150 = vmatpush1.msra.mxu0 0.0
    %2151 = vmatprep.subr.mxu0 0.0
    %2152 = vmatpush1.msra.mxu0 0.0
    %2153 = vmatprep.subr.mxu0 0.0
    %2154 = vmatpush1.msra.mxu0 0.0
    %2155 = vmatprep.subr.mxu0 0.0
    %2156 = vmatpush1.msra.mxu0 0.0
    %2157 = vmatprep.subr.mxu0 0.0
    %2158 = vmatpush1.msra.mxu0 0.0
    %2159 = vmatprep.mubr.f32.mxu0 0.0
    %2160 = vmatmul.mubr.f32.gmra.mrb[0].mxu0 %v2093
    %v2161 = vpop.f32.mrb[0].mxu0
    %v2162 = vadd.f32 %v2091, %v2161
    %v2163 = vpop.f32.mrb[0].mxu0
    %2164 = vdwg.mxu0
    %v2165 = vmax.f32 %v2162, 0.0
    %v2166 = vld [vmem:[%s9] sm:$0xff]
    %v2167 = vld [vmem:[%s9 + $0x8] sm:$0xff]
    %v2168 = vld [vmem:[%s9 + $0x10] sm:$0xff]
    %v2169 = vld [vmem:[%s9 + $0x18] sm:$0xff]
    %v2170 = vld [vmem:[%s9 + $0x20] sm:$0xff]
    %v2171 = vld [vmem:[%s9 + $0x28] sm:$0xff]
    %v2172 = vld [vmem:[%s9 + $0x30] sm:$0xff]
    %v2173 = vld [vmem:[%s9 + $0x38] sm:$0xff]
    %v2174 = vld [vmem:[%s10] sm:$0x1]
    %v2176 = vlaneseq
    %v2177 = vshrl.u32 %v2176, 7
    %v2178 = vsub.s32 0, %v2177
    %v2179 = vrot.slane %v2174, %v2178
    %vm2181 = vcmask 523264
    %v2183 = vsel %vm2181, %v2165, 0
    %2185 = vmatprep.subr.mxu0 0.0
    %2186 = vmatpush1.msra.mxu0 %v2166
    %2187 = vmatprep.subr.mxu0 0.0
    %2188 = vmatpush1.msra.mxu0 %v2167
    %2189 = vmatprep.subr.mxu0 0.0
    %2190 = vmatpush1.msra.mxu0 %v2168
    %2191 = vmatprep.subr.mxu0 0.0
    %2192 = vmatpush1.msra.mxu0 %v2169
    %2193 = vmatprep.subr.mxu0 0.0
    %2194 = vmatpush1.msra.mxu0 %v2170
    %2195 = vmatprep.subr.mxu0 0.0
    %2196 = vmatpush1.msra.mxu0 %v2171
    %2197 = vmatprep.subr.mxu0 0.0
    %2198 = vmatpush1.msra.mxu0 %v2172
    %2199 = vmatprep.subr.mxu0 0.0
    %2200 = vmatpush1.msra.mxu0 %v2173
    %2201 = vmatprep.subr.mxu0 0.0
    %2202 = vmatpush1.msra.mxu0 0.0
    %2203 = vmatprep.subr.mxu0 0.0
    %2204 = vmatpush1.msra.mxu0 0.0
    %2205 = vmatprep.subr.mxu0 0.0
    %2206 = vmatpush1.msra.mxu0 0.0
    %2207 = vmatprep.subr.mxu0 0.0
    %2208 = vmatpush1.msra.mxu0 0.0
    %2209 = vmatprep.subr.mxu0 0.0
    %2210 = vmatpush1.msra.mxu0 0.0
    %2211 = vmatprep.subr.mxu0 0.0
    %2212 = vmatpush1.msra.mxu0 0.0
    %2213 = vmatprep.subr.mxu0 0.0
    %2214 = vmatpush1.msra.mxu0 0.0
    %2215 = vmatprep.subr.mxu0 0.0
    %2216 = vmatpush1.msra.mxu0 0.0
    %2217 = vmatprep.subr.mxu0 0.0
    %2218 = vmatpush1.msra.mxu0 0.0
    %2219 = vmatprep.subr.mxu0 0.0
    %2220 = vmatpush1.msra.mxu0 0.0
    %2221 = vmatprep.subr.mxu0 0.0
    %2222 = vmatpush1.msra.mxu0 0.0
    %2223 = vmatprep.subr.mxu0 0.0
    %2224 = vmatpush1.msra.mxu0 0.0
    %2225 = vmatprep.subr.mxu0 0.0
    %2226 = vmatpush1.msra.mxu0 0.0
    %2227 = vmatprep.subr.mxu0 0.0
    %2228 = vmatpush1.msra.mxu0 0.0
    %2229 = vmatprep.subr.mxu0 0.0
    %2230 = vmatpush1.msra.mxu0 0.0
    %2231 = vmatprep.subr.mxu0 0.0
    %2232 = vmatpush1.msra.mxu0 0.0
    %2233 = vmatprep.subr.mxu0 0.0
    %2234 = vmatpush1.msra.mxu0 0.0
    %2235 = vmatprep.subr.mxu0 0.0
    %2236 = vmatpush1.msra.mxu0 0.0
    %2237 = vmatprep.subr.mxu0 0.0
    %2238 = vmatpush1.msra.mxu0 0.0
    %2239 = vmatprep.subr.mxu0 0.0
    %2240 = vmatpush1.msra.mxu0 0.0
    %2241 = vmatprep.subr.mxu0 0.0
    %2242 = vmatpush1.msra.mxu0 0.0
    %2243 = vmatprep.subr.mxu0 0.0
    %2244 = vmatpush1.msra.mxu0 0.0
    %2245 = vmatprep.subr.mxu0 0.0
    %2246 = vmatpush1.msra.mxu0 0.0
    %2247 = vmatprep.subr.mxu0 0.0
    %2248 = vmatpush1.msra.mxu0 0.0
    %2249 = vmatprep.mubr.f32.mxu0 0.0
    %2250 = vmatmul.mubr.f32.gmra.mrb[0].mxu0 %v2183
    %v2251 = vpop.f32.mrb[0].mxu0
    %v2252 = vadd.f32 %v2179, %v2251
    %v2253 = vpop.f32.mrb[0].mxu0
    %2254 = vdwg.mxu0
    %vm2255 = vcmask 31744
    %2256 = vst.msk [vmem:[%s11] sm:$0xff] %vm2255, %v2252
    // Predicated region
    $region50: #{dialect_rnn_forward.1} parent=1 // pred_check
      _
    $region51: #{dialect_rnn_forward.1} parent=1 // pred_check_branch
      %2258 = sbr.rel (0) target = $region53
    $region52: #{dialect_rnn_forward.1} parent=1 // pred_region
      _
    $region53: #{dialect_rnn_forward.1} parent=1 // pred_fallthru
      _
    // Predicated region
    $region54: #{dialect_rnn_forward.1} parent=1 // pred_check
      _
    $region55: #{dialect_rnn_forward.1} parent=1 // pred_check_branch
      %2260 = sbr.rel (0) target = $region57
    $region56: #{dialect_rnn_forward.1} parent=1 // pred_region
      _
    $region57: #{dialect_rnn_forward.1} parent=1 // pred_fallthru
      _
    // Predicated region
    $region58: #{dialect_rnn_forward.1} parent=1 // pred_check
      _
    $region59: #{dialect_rnn_forward.1} parent=1 // pred_check_branch
      %2262 = sbr.rel (0) target = $region61
    $region60: #{dialect_rnn_forward.1} parent=1 // pred_region
      _
    $region61: #{dialect_rnn_forward.1} parent=1 // pred_fallthru
      _
    // Predicated region
    $region62: #{dialect_rnn_forward.1} parent=1 // pred_check
      _
    $region63: #{dialect_rnn_forward.1} parent=1 // pred_check_branch
      %2264 = sbr.rel (0) target = $region65
    $region64: #{dialect_rnn_forward.1} parent=1 // pred_region
      _
    $region65: #{dialect_rnn_forward.1} parent=1 // pred_fallthru
      _
    // Predicated region
    $region66: #{dialect_rnn_forward.1} parent=1 // pred_check
      _
    $region67: #{dialect_rnn_forward.1} parent=1 // pred_check_branch
      %2266 = sbr.rel (0) target = $region69
    $region68: #{dialect_rnn_forward.1} parent=1 // pred_region
      _
    $region69: #{dialect_rnn_forward.1} parent=1 // pred_fallthru
      _
    // Predicated region
    $region70: #{dialect_rnn_forward.1} parent=1 // pred_check
      _
    $region71: #{dialect_rnn_forward.1} parent=1 // pred_check_branch
      %2268 = sbr.rel (0) target = $region73
    $region72: #{dialect_rnn_forward.1} parent=1 // pred_region
      _
    $region73: #{dialect_rnn_forward.1} parent=1 // pred_fallthru
      _
    %2269 = vsyncpa [#allocation4], 1

</llo_original>
